<compile_context>
chip_gen: v7x
topology: tpu7x:2x2x1
jax: 0.10.0
libtpu: 0.0.40
codegen_flags: <defaults>
</compile_context>

<pallas_src>
import functools

import jax
import jax.numpy as jnp
import numpy as np
from jax.experimental import pallas as pl
from jax.experimental.pallas import tpu as pltpu

EPS = 1e-5
KSIZE = 3


# ----------------------------------------------------------------------------
# Static geometry of the conv stack (row-major "carried span" layout).
# ----------------------------------------------------------------------------
def _geometry(h_in, w_in):
    oh1, ow1 = (h_in - KSIZE) // 2 + 1, (w_in - KSIZE) // 2 + 1
    # Parity-grid (space-to-depth) trick for the stride-2 conv2 needs even OH1/OW1.
    assert oh1 % 2 == 0 and ow1 % 2 == 0, (oh1, ow1)
    qh, qw = oh1 // 2, ow1 // 2
    oh2, ow2 = (oh1 - KSIZE) // 2 + 1, (ow1 - KSIZE) // 2 + 1
    oh3, ow3 = oh2 - 2, ow2 - 2
    oh4, ow4 = oh3 - 2, ow3 - 2
    wc = qw                                   # carried row-major width, layers 2-4
    s1 = 4 * qh * qw                          # layer 1: every row is valid
    s2 = (oh2 - 1) * wc + ow2                 # carried rows (incl. wrap garbage)
    s3 = (oh3 - 1) * wc + ow3
    s4 = (oh4 - 1) * wc + ow4
    bases2 = tuple(((di % 2) * 2 + (dj % 2)) * qh * qw + (di // 2) * wc + (dj // 2)
                   for di in range(KSIZE) for dj in range(KSIZE))
    bases_s = tuple(di * wc + dj for di in range(KSIZE) for dj in range(KSIZE))
    # Slice-bound / wrap-row safety: every tap slice stays inside the previous
    # slab; valid outputs only ever read valid inputs (see module docstring).
    assert max(bases2) + s2 <= s1
    assert max(bases_s) + s3 <= s2
    assert max(bases_s) + s4 <= s3
    assert ow2 <= wc and ow3 <= wc and ow4 <= wc
    return dict(oh1=oh1, ow1=ow1, oh2=oh2, ow2=ow2, oh3=oh3, ow3=ow3,
                oh4=oh4, ow4=ow4, qh=qh, qw=qw, wc=wc,
                s1=s1, s2=s2, s3=s3, s4=s4, bases2=bases2, bases_s=bases_s)


# ----------------------------------------------------------------------------
# In-kernel helpers (traced inside the Pallas kernel body)
# ----------------------------------------------------------------------------
def _bn_relu(y, gamma, beta, mask, count):
    """Training-mode BatchNorm + ReLU on a (rows, C) slab.

    `mask` (rows, 1) is 1.0 on valid rows, 0.0 on carried wrap rows; they are
    excluded from the statistics but still normalized (finite, never read
    downstream).  Per-channel stats are plain masked column sums: O(1) in batch.
    """
    ym = y if mask is None else y * mask
    s1 = jnp.sum(ym, axis=0, keepdims=True)                 # (1, C)
    s2 = jnp.sum(ym * y, axis=0, keepdims=True)             # (1, C)  (mask is 0/1)
    inv = 1.0 / count
    mean = s1 * inv
    var = s2 * inv - mean * mean                            # biased variance
    scale = gamma * jax.lax.rsqrt(var + EPS)                # fold gamma
    shift = beta - mean * scale                             # fold beta
    return jnp.maximum(y * scale + shift, 0.0)


def _conv_bn_relu(act, w_ref, g_ref, b_ref, mask, bases, span, n, count):
    """3x3 conv (one GEMM, K=9*Ci) + BN + ReLU on a spatial-major slab.

    act: (S_prev*n, Ci); each tap is a contiguous row slice; the 9 taps are
    lane-concatenated and contracted against the shared (9*Ci, Co) weight.
    """
    taps = [act[b * n:(b + span) * n, :] for b in bases]     # 9 x (span*n, Ci)
    patches = jnp.concatenate(taps, axis=1)                  # (span*n, 9*Ci)
    y = jnp.dot(patches, w_ref[...], preferred_element_type=jnp.float32)
    return _bn_relu(y, g_ref[...], b_ref[...], mask, count)


# ----------------------------------------------------------------------------
# The fused kernel: conv1..conv4 (+BN+ReLU) and both dueling heads
# ----------------------------------------------------------------------------
def duelqnet_kernel(p1_ref, w1_ref, g1_ref, b1_ref,
                    w2_ref, g2_ref, b2_ref, m2_ref,
                    w3_ref, g3_ref, b3_ref, m3_ref,
                    w4_ref, g4_ref, b4_ref, m4_ref,
                    w1h_ref, b1h_ref, w2h_ref, b2h_ref,
                    o_ref, *, n, geo, actions):
    wc = geo["wc"]

    # conv1 (stride 2): im2col patches arrive pre-built as (S1*n, 9); one GEMM.
    y1 = jnp.dot(p1_ref[...], w1_ref[...], preferred_element_type=jnp.float32)
    a1 = _bn_relu(y1, g1_ref[...], b1_ref[...], None, float(geo["s1"] * n))

    # conv2 (stride 2): contiguous tap slices thanks to the parity-grid order.
    a2 = _conv_bn_relu(a1, w2_ref, g2_ref, b2_ref, m2_ref[...],
                       geo["bases2"], geo["s2"], n,
                       float(geo["oh2"] * geo["ow2"] * n))

    # conv3 / conv4 (stride 1): row-offset tap slices in the carried span.
    a3 = _conv_bn_relu(a2, w3_ref, g3_ref, b3_ref, m3_ref[...],
                       geo["bases_s"], geo["s3"], n,
                       float(geo["oh3"] * geo["ow3"] * n))
    a4 = _conv_bn_relu(a3, w4_ref, g4_ref, b4_ref, m4_ref[...],
                       geo["bases_s"], geo["s4"], n,
                       float(geo["oh4"] * geo["ow4"] * n))
    # a4: (S4*n, 16); valid pixels sit at row offsets oh4*wc + ow4.

    # Dueling heads: gather the 12 valid pixels into a lane-dense (n, 192)
    # slab (NCHW-flatten permutation folded into w1h), then 2 MXU dots.
    ow4, oh4 = geo["ow4"], geo["oh4"]
    pix_offsets = [(p // ow4) * wc + (p % ow4) for p in range(oh4 * ow4)]
    flat = jnp.concatenate([a4[o * n:(o + 1) * n, :] for o in pix_offsets],
                           axis=1)                                    # (n, 192)
    h = jnp.maximum(jnp.dot(flat, w1h_ref[...],
                            preferred_element_type=jnp.float32)
                    + b1h_ref[...], 0.0)                              # (n, 128)
    o2 = (jnp.dot(h, w2h_ref[...], preferred_element_type=jnp.float32)
          + b2h_ref[...])                                             # (n, A+1)
    adv = o2[:, :actions]
    state = o2[:, actions:actions + 1]
    q = state + (adv - jnp.mean(adv, axis=1, keepdims=True))          # (n, A)
    pad = o_ref.shape[1] - actions
    o_ref[...] = jnp.concatenate(
        [q, jnp.zeros((n, pad), jnp.float32)], axis=1)                # lane-dense


# ----------------------------------------------------------------------------
# One-time parameter / constant packing (plain JAX + numpy, outside the kernel)
# ----------------------------------------------------------------------------
def pack_params(p, n_batch, h_in=30, w_in=45):
    geo = _geometry(h_in, w_in)
    k = {}

    # conv weights, shared across batch: (Co,Ci,3,3) -> (9*Ci, Co), tap-major.
    co1 = p["cw1"].shape[0]
    k["w1"] = p["cw1"].reshape(co1, 9).T                     # (9, Co1)
    for i, name in ((2, "cw2"), (3, "cw3"), (4, "cw4")):
        w = p[name]                                          # (Co, Ci, 3, 3)
        co, ci = w.shape[0], w.shape[1]
        k[f"w{i}"] = w.transpose(2, 3, 1, 0).reshape(9 * ci, co)
    for i in range(1, 5):
        k[f"g{i}"] = p[f"g{i}"].reshape(1, -1)
        k[f"b{i}"] = p[f"b{i}"].reshape(1, -1)

    # 0/1 validity masks over the carried (wrap-including) row slabs (~1 KB).
    def make_mask(span, ow_valid):
        o = np.arange(span * n_batch) // n_batch
        m = ((o % geo["wc"]) < ow_valid).astype(np.float32).reshape(-1, 1)
        return jnp.asarray(m)
    k["m2"] = make_mask(geo["s2"], geo["ow2"])
    k["m3"] = make_mask(geo["s3"], geo["ow3"])
    k["m4"] = make_mask(geo["s4"], geo["ow4"])

    # Dueling heads, packed block-diagonally; lanes 0..63 = state hidden,
    # 64..127 = advantage hidden; NCHW-flatten permutation folded into w1h.
    c4 = p["cw4"].shape[0]
    p4 = geo["oh4"] * geo["ow4"]                             # 12
    feat = c4 * p4                                           # 192
    hidden = p["ws1"].shape[1]                               # 64
    acts = p["wa2"].shape[1]
    assert p["ws1"].shape[0] == feat // 2 and p["wa1"].shape[0] == feat // 2
    w1cat = jnp.zeros((feat, 2 * hidden), jnp.float32)       # PyTorch feat rows
    w1cat = w1cat.at[:feat // 2, :hidden].set(p["ws1"])
    w1cat = w1cat.at[feat // 2:, hidden:].set(p["wa1"])
    # PyTorch feature (c*p4 + p)  ->  kernel lane (p*c4 + c)
    k["w1h"] = w1cat.reshape(c4, p4, 2 * hidden).transpose(1, 0, 2).reshape(
        feat, 2 * hidden)                                    # (192, 128)
    k["b1h"] = jnp.concatenate([p["bs1"], p["ba1"]], axis=1)  # (1, 128)

    w2h = jnp.zeros((2 * hidden, acts + 1), jnp.float32)      # adv cols, state last
    w2h = w2h.at[hidden:, :acts].set(p["wa2"])
    w2h = w2h.at[:hidden, acts:].set(p["ws2"])
    k["w2h"] = w2h
    k["b2h"] = jnp.concatenate([p["ba2"], p["bs2"]], axis=1)  # (1, A+1)
    return k


# ----------------------------------------------------------------------------
# Forward wrapper
# ----------------------------------------------------------------------------
def _full_spec(shape):
    return pl.BlockSpec(shape, lambda i, _nd=len(shape): (0,) * _nd)


def _im2col_l1(x, oh1, ow1):
    """Layer-1 im2col on the raw input (tiny), rows in (ph,pw,qh,qw,n) order."""
    n = x.shape[0]
    taps = []
    for di in range(KSIZE):
        for dj in range(KSIZE):
            taps.append(x[:, 0, di:di + 2 * oh1:2, dj:dj + 2 * ow1:2])  # (n,oh1,ow1)
    pat = jnp.stack(taps, axis=-1)                        # (n, oh1, ow1, 9)
    qh, qw = oh1 // 2, ow1 // 2
    pat = pat.reshape(n, qh, 2, qw, 2, 9)                 # (n, qh, ph, qw, pw, 9)
    pat = pat.transpose(2, 4, 1, 3, 0, 5)                 # (ph, pw, qh, qw, n, 9)
    return pat.reshape(4 * qh * qw * n, 9)


@jax.jit
def duel_qnet_forward(x, packed):
    n = x.shape[0]
    geo = _geometry(x.shape[2], x.shape[3])
    actions = packed["b2h"].shape[1] - 1
    out_lanes = 128

    p1 = _im2col_l1(x, geo["oh1"], geo["ow1"])
    args = (p1, packed["w1"], packed["g1"], packed["b1"],
            packed["w2"], packed["g2"], packed["b2"], packed["m2"],
            packed["w3"], packed["g3"], packed["b3"], packed["m3"],
            packed["w4"], packed["g4"], packed["b4"], packed["m4"],
            packed["w1h"], packed["b1h"], packed["w2h"], packed["b2h"])

    # Cost estimate from actual shapes (matmuls dominate; BN rsqrt per channel).
    def mm(m, kn):
        return 2 * m * kn[0] * kn[1]
    flops = (mm(p1.shape[0], packed["w1"].shape)
             + mm(geo["s2"] * n, packed["w2"].shape)
             + mm(geo["s3"] * n, packed["w3"].shape)
             + mm(geo["s4"] * n, packed["w4"].shape)
             + mm(n, packed["w1h"].shape)
             + mm(n, packed["w2h"].shape))
    transcendentals = sum(packed[f"g{i}"].shape[1] for i in range(1, 5))
    n_bytes = sum(int(np.prod(a.shape)) * 4 for a in args) + n * out_lanes * 4

    out = pl.pallas_call(
        functools.partial(duelqnet_kernel, n=n, geo=geo, actions=actions),
        out_shape=jax.ShapeDtypeStruct((n, out_lanes), jnp.float32),
        grid=(1,),
        in_specs=[_full_spec(a.shape) for a in args],
        out_specs=_full_spec((n, out_lanes)),
        compiler_params=pltpu.CompilerParams(
            dimension_semantics=("arbitrary",)),
        cost_estimate=pl.CostEstimate(
            flops=int(flops), transcendentals=int(transcendentals),
            bytes_accessed=int(n_bytes)),
    )(*args)
    return out[:, :actions]


# ----------------------------------------------------------------------------
# Parameter init + pure-JAX reference (same math) for a correctness check
# ----------------------------------------------------------------------------
def init_params(key, actions):
    ks = jax.random.split(key, 18)
    p = {}
    p["cw1"] = jax.random.normal(ks[0], (8, 1, 3, 3), jnp.float32) * 0.2
    p["cw2"] = jax.random.normal(ks[1], (8, 8, 3, 3), jnp.float32) * 0.1
    p["cw3"] = jax.random.normal(ks[2], (8, 8, 3, 3), jnp.float32) * 0.1
    p["cw4"] = jax.random.normal(ks[3], (16, 8, 3, 3), jnp.float32) * 0.1
    for i, c in zip(range(1, 5), (8, 8, 8, 16)):
        p[f"g{i}"] = 1.0 + 0.1 * jax.random.normal(ks[3 + i], (c,), jnp.float32)
        p[f"b{i}"] = 0.1 * jax.random.normal(ks[7 + i], (c,), jnp.float32)
    p["ws1"] = jax.random.normal(ks[12], (96, 64), jnp.float32) * 0.1
    p["bs1"] = 0.1 * jax.random.normal(ks[13], (1, 64), jnp.float32)
    p["ws2"] = jax.random.normal(ks[14], (64, 1), jnp.float32) * 0.1
    p["bs2"] = jnp.zeros((1, 1), jnp.float32)
    p["wa1"] = jax.random.normal(ks[15], (96, 64), jnp.float32) * 0.1
    p["ba1"] = 0.05 * jnp.ones((1, 64), jnp.float32)
    p["wa2"] = jax.random.normal(ks[16], (64, actions), jnp.float32) * 0.1
    p["ba2"] = 0.01 * jax.random.normal(ks[17], (1, actions), jnp.float32)
    return p


def _ref_forward(x, p):
    def conv(x, w, g, b, s):
        y = jax.lax.conv_general_dilated(
            x, w, (s, s), "VALID", dimension_numbers=("NCHW", "OIHW", "NCHW"))
        m = jnp.mean(y, axis=(0, 2, 3), keepdims=True)
        v = jnp.mean((y - m) ** 2, axis=(0, 2, 3), keepdims=True)
        y = (y - m) * jax.lax.rsqrt(v + EPS)
        y = y * g.reshape(1, -1, 1, 1) + b.reshape(1, -1, 1, 1)
        return jnp.maximum(y, 0.0)

    x = conv(x, p["cw1"], p["g1"], p["b1"], 2)
    x = conv(x, p["cw2"], p["g2"], p["b2"], 2)
    x = conv(x, p["cw3"], p["g3"], p["b3"], 1)
    x = conv(x, p["cw4"], p["g4"], p["b4"], 1)
    flat = x.reshape(x.shape[0], 192)
    x1, x2 = flat[:, :96], flat[:, 96:]
    h = jnp.maximum(x1 @ p["ws1"] + p["bs1"], 0.0)
    state = h @ p["ws2"] + p["bs2"]
    h = jnp.maximum(x2 @ p["wa1"] + p["ba1"], 0.0)
    adv = h @ p["wa2"] + p["ba2"]
    return state + (adv - adv.mean(axis=1, keepdims=True))


if __name__ == "__main__":
    key = jax.random.PRNGKey(0)
    k_x, k_p = jax.random.split(key)

    N, ACTIONS = 2, 8
    # 30x45 input -> conv stack -> (N, 16, 2, 6) -> 192 flat, as in ViZDoom DuelQNet.
    x = jax.random.normal(k_x, (N, 1, 30, 45), jnp.float32)
    params = init_params(k_p, ACTIONS)
    packed = pack_params(params, N, x.shape[2], x.shape[3])

    out = jax.block_until_ready(duel_qnet_forward(x, packed))
    assert out.shape == (N, ACTIONS), out.shape

    ref = jax.block_until_ready(_ref_forward(x, params))
    err = float(jnp.max(jnp.abs(out - ref)))
    assert jnp.allclose(out, ref, atol=5e-4, rtol=5e-4), err

    print("KERNEL_OK")
</pallas_src>

<mosaic_0001>
module attributes {stable_mosaic.version = 11 : i64} {
  func.func @duelqnet_kernel(%arg0: i32, %arg1: memref<616x9xf32, #tpu.memory_space<vmem>>, %arg2: memref<9x8xf32, #tpu.memory_space<vmem>>, %arg3: memref<1x8xf32, #tpu.memory_space<vmem>>, %arg4: memref<1x8xf32, #tpu.memory_space<vmem>>, %arg5: memref<72x8xf32, #tpu.memory_space<vmem>>, %arg6: memref<1x8xf32, #tpu.memory_space<vmem>>, %arg7: memref<1x8xf32, #tpu.memory_space<vmem>>, %arg8: memref<130x1xf32, #tpu.memory_space<vmem>>, %arg9: memref<72x8xf32, #tpu.memory_space<vmem>>, %arg10: memref<1x8xf32, #tpu.memory_space<vmem>>, %arg11: memref<1x8xf32, #tpu.memory_space<vmem>>, %arg12: memref<82x1xf32, #tpu.memory_space<vmem>>, %arg13: memref<72x16xf32, #tpu.memory_space<vmem>>, %arg14: memref<1x16xf32, #tpu.memory_space<vmem>>, %arg15: memref<1x16xf32, #tpu.memory_space<vmem>>, %arg16: memref<34x1xf32, #tpu.memory_space<vmem>>, %arg17: memref<192x128xf32, #tpu.memory_space<vmem>>, %arg18: memref<1x128xf32, #tpu.memory_space<vmem>>, %arg19: memref<128x9xf32, #tpu.memory_space<vmem>>, %arg20: memref<1x9xf32, #tpu.memory_space<vmem>>, %arg21: memref<2x128xf32, #tpu.memory_space<vmem>>) attributes {dimension_semantics = [#tpu.dimension_semantics<arbitrary>], iteration_bounds = array<i64: 1>, scalar_prefetch = 0 : i64, scratch_operands = 0 : i64, tpu.core_type = #tpu.core_type<tc>, window_params = [{pipeline_mode = #tpu.pipeline_mode<synchronous>, transform_indices = @transform_0, window_bounds = array<i64: 616, 9>}, {pipeline_mode = #tpu.pipeline_mode<synchronous>, transform_indices = @transform_1, window_bounds = array<i64: 9, 8>}, {pipeline_mode = #tpu.pipeline_mode<synchronous>, transform_indices = @transform_2, window_bounds = array<i64: 1, 8>}, {pipeline_mode = #tpu.pipeline_mode<synchronous>, transform_indices = @transform_3, window_bounds = array<i64: 1, 8>}, {pipeline_mode = #tpu.pipeline_mode<synchronous>, transform_indices = @transform_4, window_bounds = array<i64: 72, 8>}, {pipeline_mode = #tpu.pipeline_mode<synchronous>, transform_indices = @transform_5, window_bounds = array<i64: 1, 8>}, {pipeline_mode = #tpu.pipeline_mode<synchronous>, transform_indices = @transform_6, window_bounds = array<i64: 1, 8>}, {pipeline_mode = #tpu.pipeline_mode<synchronous>, transform_indices = @transform_7, window_bounds = array<i64: 130, 1>}, {pipeline_mode = #tpu.pipeline_mode<synchronous>, transform_indices = @transform_8, window_bounds = array<i64: 72, 8>}, {pipeline_mode = #tpu.pipeline_mode<synchronous>, transform_indices = @transform_9, window_bounds = array<i64: 1, 8>}, {pipeline_mode = #tpu.pipeline_mode<synchronous>, transform_indices = @transform_10, window_bounds = array<i64: 1, 8>}, {pipeline_mode = #tpu.pipeline_mode<synchronous>, transform_indices = @transform_11, window_bounds = array<i64: 82, 1>}, {pipeline_mode = #tpu.pipeline_mode<synchronous>, transform_indices = @transform_12, window_bounds = array<i64: 72, 16>}, {pipeline_mode = #tpu.pipeline_mode<synchronous>, transform_indices = @transform_13, window_bounds = array<i64: 1, 16>}, {pipeline_mode = #tpu.pipeline_mode<synchronous>, transform_indices = @transform_14, window_bounds = array<i64: 1, 16>}, {pipeline_mode = #tpu.pipeline_mode<synchronous>, transform_indices = @transform_15, window_bounds = array<i64: 34, 1>}, {pipeline_mode = #tpu.pipeline_mode<synchronous>, transform_indices = @transform_16, window_bounds = array<i64: 192, 128>}, {pipeline_mode = #tpu.pipeline_mode<synchronous>, transform_indices = @transform_17, window_bounds = array<i64: 1, 128>}, {pipeline_mode = #tpu.pipeline_mode<synchronous>, transform_indices = @transform_18, window_bounds = array<i64: 128, 9>}, {pipeline_mode = #tpu.pipeline_mode<synchronous>, transform_indices = @transform_19, window_bounds = array<i64: 1, 9>}, {pipeline_mode = #tpu.pipeline_mode<synchronous>, transform_indices = @transform_20, window_bounds = array<i64: 2, 128>}]} {
    %c0 = arith.constant 0 : index
    %c0_0 = arith.constant 0 : index
    %0 = vector.load %arg1[%c0, %c0_0] : memref<616x9xf32, #tpu.memory_space<vmem>>, vector<616x9xf32>
    %c0_1 = arith.constant 0 : index
    %c0_2 = arith.constant 0 : index
    %1 = vector.load %arg2[%c0_1, %c0_2] : memref<9x8xf32, #tpu.memory_space<vmem>>, vector<9x8xf32>
    %cst = arith.constant dense<0.000000e+00> : vector<616x8xf32>
    %2 = tpu.matmul %0, %1, %cst {dimension_numbers = #tpu.dot_dimension_numbers<[1], [0], [0], [1], [0, 0, 1, 1], [], []>} : vector<616x9xf32>, vector<9x8xf32>, vector<616x8xf32> -> vector<616x8xf32>
    %c0_3 = arith.constant 0 : index
    %c0_4 = arith.constant 0 : index
    %3 = vector.load %arg3[%c0_3, %c0_4] : memref<1x8xf32, #tpu.memory_space<vmem>>, vector<1x8xf32>
    %c0_5 = arith.constant 0 : index
    %c0_6 = arith.constant 0 : index
    %4 = vector.load %arg4[%c0_5, %c0_6] : memref<1x8xf32, #tpu.memory_space<vmem>>, vector<1x8xf32>
    %cst_7 = arith.constant dense<0.000000e+00> : vector<8xf32>
    %5 = vector.multi_reduction <add>, %2, %cst_7 [0] : vector<616x8xf32> to vector<8xf32>
    %6 = vector.shape_cast %5 : vector<8xf32> to vector<1x8xf32>
    %7 = arith.mulf %2, %2 : vector<616x8xf32>
    %cst_8 = arith.constant dense<0.000000e+00> : vector<8xf32>
    %8 = vector.multi_reduction <add>, %7, %cst_8 [0] : vector<616x8xf32> to vector<8xf32>
    %9 = vector.shape_cast %8 : vector<8xf32> to vector<1x8xf32>
    %cst_9 = arith.constant 0.00162337662 : f32
    %10 = vector.broadcast %cst_9 : f32 to vector<1x8xf32>
    %11 = arith.mulf %6, %10 : vector<1x8xf32>
    %cst_10 = arith.constant 0.00162337662 : f32
    %12 = vector.broadcast %cst_10 : f32 to vector<1x8xf32>
    %13 = arith.mulf %9, %12 : vector<1x8xf32>
    %14 = arith.mulf %11, %11 : vector<1x8xf32>
    %15 = arith.subf %13, %14 : vector<1x8xf32>
    %cst_11 = arith.constant 9.99999974E-6 : f32
    %16 = vector.broadcast %cst_11 : f32 to vector<1x8xf32>
    %17 = arith.addf %15, %16 : vector<1x8xf32>
    %18 = math.rsqrt %17 : vector<1x8xf32>
    %19 = arith.mulf %3, %18 : vector<1x8xf32>
    %20 = arith.mulf %11, %19 : vector<1x8xf32>
    %21 = arith.subf %4, %20 : vector<1x8xf32>
    %22 = vector.broadcast %19 : vector<1x8xf32> to vector<616x8xf32>
    %23 = arith.mulf %2, %22 : vector<616x8xf32>
    %24 = vector.broadcast %21 : vector<1x8xf32> to vector<616x8xf32>
    %25 = arith.addf %23, %24 : vector<616x8xf32>
    %cst_12 = arith.constant 0.000000e+00 : f32
    %26 = vector.broadcast %cst_12 : f32 to vector<616x8xf32>
    %27 = arith.maximumf %25, %26 : vector<616x8xf32>
    %c0_13 = arith.constant 0 : index
    %c0_14 = arith.constant 0 : index
    %28 = vector.load %arg8[%c0_13, %c0_14] : memref<130x1xf32, #tpu.memory_space<vmem>>, vector<130x1xf32>
    %29 = vector.extract_strided_slice %27 {offsets = [0, 0], sizes = [130, 8], strides = [1, 1]} : vector<616x8xf32> to vector<130x8xf32>
    %30 = vector.extract_strided_slice %27 {offsets = [154, 0], sizes = [130, 8], strides = [1, 1]} : vector<616x8xf32> to vector<130x8xf32>
    %31 = vector.extract_strided_slice %27 {offsets = [2, 0], sizes = [130, 8], strides = [1, 1]} : vector<616x8xf32> to vector<130x8xf32>
    %32 = vector.extract_strided_slice %27 {offsets = [308, 0], sizes = [130, 8], strides = [1, 1]} : vector<616x8xf32> to vector<130x8xf32>
    %33 = vector.extract_strided_slice %27 {offsets = [462, 0], sizes = [130, 8], strides = [1, 1]} : vector<616x8xf32> to vector<130x8xf32>
    %34 = vector.extract_strided_slice %27 {offsets = [310, 0], sizes = [130, 8], strides = [1, 1]} : vector<616x8xf32> to vector<130x8xf32>
    %35 = vector.extract_strided_slice %27 {offsets = [22, 0], sizes = [130, 8], strides = [1, 1]} : vector<616x8xf32> to vector<130x8xf32>
    %36 = vector.extract_strided_slice %27 {offsets = [176, 0], sizes = [130, 8], strides = [1, 1]} : vector<616x8xf32> to vector<130x8xf32>
    %37 = vector.extract_strided_slice %27 {offsets = [24, 0], sizes = [130, 8], strides = [1, 1]} : vector<616x8xf32> to vector<130x8xf32>
    %38 = tpu.concatenate %29, %30, %31, %32, %33, %34, %35, %36, %37 in 1 : vector<130x8xf32>, vector<130x8xf32>, vector<130x8xf32>, vector<130x8xf32>, vector<130x8xf32>, vector<130x8xf32>, vector<130x8xf32>, vector<130x8xf32>, vector<130x8xf32> -> vector<130x72xf32>
    %c0_15 = arith.constant 0 : index
    %c0_16 = arith.constant 0 : index
    %39 = vector.load %arg5[%c0_15, %c0_16] : memref<72x8xf32, #tpu.memory_space<vmem>>, vector<72x8xf32>
    %cst_17 = arith.constant dense<0.000000e+00> : vector<130x8xf32>
    %40 = tpu.matmul %38, %39, %cst_17 {dimension_numbers = #tpu.dot_dimension_numbers<[1], [0], [0], [1], [0, 0, 1, 1], [], []>} : vector<130x72xf32>, vector<72x8xf32>, vector<130x8xf32> -> vector<130x8xf32>
    %c0_18 = arith.constant 0 : index
    %c0_19 = arith.constant 0 : index
    %41 = vector.load %arg6[%c0_18, %c0_19] : memref<1x8xf32, #tpu.memory_space<vmem>>, vector<1x8xf32>
    %c0_20 = arith.constant 0 : index
    %c0_21 = arith.constant 0 : index
    %42 = vector.load %arg7[%c0_20, %c0_21] : memref<1x8xf32, #tpu.memory_space<vmem>>, vector<1x8xf32>
    %43 = vector.broadcast %28 : vector<130x1xf32> to vector<130x8xf32>
    %44 = arith.mulf %40, %43 : vector<130x8xf32>
    %cst_22 = arith.constant dense<0.000000e+00> : vector<8xf32>
    %45 = vector.multi_reduction <add>, %44, %cst_22 [0] : vector<130x8xf32> to vector<8xf32>
    %46 = vector.shape_cast %45 : vector<8xf32> to vector<1x8xf32>
    %47 = arith.mulf %44, %40 : vector<130x8xf32>
    %cst_23 = arith.constant dense<0.000000e+00> : vector<8xf32>
    %48 = vector.multi_reduction <add>, %47, %cst_23 [0] : vector<130x8xf32> to vector<8xf32>
    %49 = vector.shape_cast %48 : vector<8xf32> to vector<1x8xf32>
    %cst_24 = arith.constant 0.00833333377 : f32
    %50 = vector.broadcast %cst_24 : f32 to vector<1x8xf32>
    %51 = arith.mulf %46, %50 : vector<1x8xf32>
    %cst_25 = arith.constant 0.00833333377 : f32
    %52 = vector.broadcast %cst_25 : f32 to vector<1x8xf32>
    %53 = arith.mulf %49, %52 : vector<1x8xf32>
    %54 = arith.mulf %51, %51 : vector<1x8xf32>
    %55 = arith.subf %53, %54 : vector<1x8xf32>
    %cst_26 = arith.constant 9.99999974E-6 : f32
    %56 = vector.broadcast %cst_26 : f32 to vector<1x8xf32>
    %57 = arith.addf %55, %56 : vector<1x8xf32>
    %58 = math.rsqrt %57 : vector<1x8xf32>
    %59 = arith.mulf %41, %58 : vector<1x8xf32>
    %60 = arith.mulf %51, %59 : vector<1x8xf32>
    %61 = arith.subf %42, %60 : vector<1x8xf32>
    %62 = vector.broadcast %59 : vector<1x8xf32> to vector<130x8xf32>
    %63 = arith.mulf %40, %62 : vector<130x8xf32>
    %64 = vector.broadcast %61 : vector<1x8xf32> to vector<130x8xf32>
    %65 = arith.addf %63, %64 : vector<130x8xf32>
    %cst_27 = arith.constant 0.000000e+00 : f32
    %66 = vector.broadcast %cst_27 : f32 to vector<130x8xf32>
    %67 = arith.maximumf %65, %66 : vector<130x8xf32>
    %c0_28 = arith.constant 0 : index
    %c0_29 = arith.constant 0 : index
    %68 = vector.load %arg12[%c0_28, %c0_29] : memref<82x1xf32, #tpu.memory_space<vmem>>, vector<82x1xf32>
    %69 = vector.extract_strided_slice %67 {offsets = [0, 0], sizes = [82, 8], strides = [1, 1]} : vector<130x8xf32> to vector<82x8xf32>
    %70 = vector.extract_strided_slice %67 {offsets = [2, 0], sizes = [82, 8], strides = [1, 1]} : vector<130x8xf32> to vector<82x8xf32>
    %71 = vector.extract_strided_slice %67 {offsets = [4, 0], sizes = [82, 8], strides = [1, 1]} : vector<130x8xf32> to vector<82x8xf32>
    %72 = vector.extract_strided_slice %67 {offsets = [22, 0], sizes = [82, 8], strides = [1, 1]} : vector<130x8xf32> to vector<82x8xf32>
    %73 = vector.extract_strided_slice %67 {offsets = [24, 0], sizes = [82, 8], strides = [1, 1]} : vector<130x8xf32> to vector<82x8xf32>
    %74 = vector.extract_strided_slice %67 {offsets = [26, 0], sizes = [82, 8], strides = [1, 1]} : vector<130x8xf32> to vector<82x8xf32>
    %75 = vector.extract_strided_slice %67 {offsets = [44, 0], sizes = [82, 8], strides = [1, 1]} : vector<130x8xf32> to vector<82x8xf32>
    %76 = vector.extract_strided_slice %67 {offsets = [46, 0], sizes = [82, 8], strides = [1, 1]} : vector<130x8xf32> to vector<82x8xf32>
    %77 = vector.extract_strided_slice %67 {offsets = [48, 0], sizes = [82, 8], strides = [1, 1]} : vector<130x8xf32> to vector<82x8xf32>
    %78 = tpu.concatenate %69, %70, %71, %72, %73, %74, %75, %76, %77 in 1 : vector<82x8xf32>, vector<82x8xf32>, vector<82x8xf32>, vector<82x8xf32>, vector<82x8xf32>, vector<82x8xf32>, vector<82x8xf32>, vector<82x8xf32>, vector<82x8xf32> -> vector<82x72xf32>
    %c0_30 = arith.constant 0 : index
    %c0_31 = arith.constant 0 : index
    %79 = vector.load %arg9[%c0_30, %c0_31] : memref<72x8xf32, #tpu.memory_space<vmem>>, vector<72x8xf32>
    %cst_32 = arith.constant dense<0.000000e+00> : vector<82x8xf32>
    %80 = tpu.matmul %78, %79, %cst_32 {dimension_numbers = #tpu.dot_dimension_numbers<[1], [0], [0], [1], [0, 0, 1, 1], [], []>} : vector<82x72xf32>, vector<72x8xf32>, vector<82x8xf32> -> vector<82x8xf32>
    %c0_33 = arith.constant 0 : index
    %c0_34 = arith.constant 0 : index
    %81 = vector.load %arg10[%c0_33, %c0_34] : memref<1x8xf32, #tpu.memory_space<vmem>>, vector<1x8xf32>
    %c0_35 = arith.constant 0 : index
    %c0_36 = arith.constant 0 : index
    %82 = vector.load %arg11[%c0_35, %c0_36] : memref<1x8xf32, #tpu.memory_space<vmem>>, vector<1x8xf32>
    %83 = vector.broadcast %68 : vector<82x1xf32> to vector<82x8xf32>
    %84 = arith.mulf %80, %83 : vector<82x8xf32>
    %cst_37 = arith.constant dense<0.000000e+00> : vector<8xf32>
    %85 = vector.multi_reduction <add>, %84, %cst_37 [0] : vector<82x8xf32> to vector<8xf32>
    %86 = vector.shape_cast %85 : vector<8xf32> to vector<1x8xf32>
    %87 = arith.mulf %84, %80 : vector<82x8xf32>
    %cst_38 = arith.constant dense<0.000000e+00> : vector<8xf32>
    %88 = vector.multi_reduction <add>, %87, %cst_38 [0] : vector<82x8xf32> to vector<8xf32>
    %89 = vector.shape_cast %88 : vector<8xf32> to vector<1x8xf32>
    %cst_39 = arith.constant 1.562500e-02 : f32
    %90 = vector.broadcast %cst_39 : f32 to vector<1x8xf32>
    %91 = arith.mulf %86, %90 : vector<1x8xf32>
    %cst_40 = arith.constant 1.562500e-02 : f32
    %92 = vector.broadcast %cst_40 : f32 to vector<1x8xf32>
    %93 = arith.mulf %89, %92 : vector<1x8xf32>
    %94 = arith.mulf %91, %91 : vector<1x8xf32>
    %95 = arith.subf %93, %94 : vector<1x8xf32>
    %cst_41 = arith.constant 9.99999974E-6 : f32
    %96 = vector.broadcast %cst_41 : f32 to vector<1x8xf32>
    %97 = arith.addf %95, %96 : vector<1x8xf32>
    %98 = math.rsqrt %97 : vector<1x8xf32>
    %99 = arith.mulf %81, %98 : vector<1x8xf32>
    %100 = arith.mulf %91, %99 : vector<1x8xf32>
    %101 = arith.subf %82, %100 : vector<1x8xf32>
    %102 = vector.broadcast %99 : vector<1x8xf32> to vector<82x8xf32>
    %103 = arith.mulf %80, %102 : vector<82x8xf32>
    %104 = vector.broadcast %101 : vector<1x8xf32> to vector<82x8xf32>
    %105 = arith.addf %103, %104 : vector<82x8xf32>
    %cst_42 = arith.constant 0.000000e+00 : f32
    %106 = vector.broadcast %cst_42 : f32 to vector<82x8xf32>
    %107 = arith.maximumf %105, %106 : vector<82x8xf32>
    %c0_43 = arith.constant 0 : index
    %c0_44 = arith.constant 0 : index
    %108 = vector.load %arg16[%c0_43, %c0_44] : memref<34x1xf32, #tpu.memory_space<vmem>>, vector<34x1xf32>
    %109 = vector.extract_strided_slice %107 {offsets = [0, 0], sizes = [34, 8], strides = [1, 1]} : vector<82x8xf32> to vector<34x8xf32>
    %110 = vector.extract_strided_slice %107 {offsets = [2, 0], sizes = [34, 8], strides = [1, 1]} : vector<82x8xf32> to vector<34x8xf32>
    %111 = vector.extract_strided_slice %107 {offsets = [4, 0], sizes = [34, 8], strides = [1, 1]} : vector<82x8xf32> to vector<34x8xf32>
    %112 = vector.extract_strided_slice %107 {offsets = [22, 0], sizes = [34, 8], strides = [1, 1]} : vector<82x8xf32> to vector<34x8xf32>
    %113 = vector.extract_strided_slice %107 {offsets = [24, 0], sizes = [34, 8], strides = [1, 1]} : vector<82x8xf32> to vector<34x8xf32>
    %114 = vector.extract_strided_slice %107 {offsets = [26, 0], sizes = [34, 8], strides = [1, 1]} : vector<82x8xf32> to vector<34x8xf32>
    %115 = vector.extract_strided_slice %107 {offsets = [44, 0], sizes = [34, 8], strides = [1, 1]} : vector<82x8xf32> to vector<34x8xf32>
    %116 = vector.extract_strided_slice %107 {offsets = [46, 0], sizes = [34, 8], strides = [1, 1]} : vector<82x8xf32> to vector<34x8xf32>
    %117 = vector.extract_strided_slice %107 {offsets = [48, 0], sizes = [34, 8], strides = [1, 1]} : vector<82x8xf32> to vector<34x8xf32>
    %118 = tpu.concatenate %109, %110, %111, %112, %113, %114, %115, %116, %117 in 1 : vector<34x8xf32>, vector<34x8xf32>, vector<34x8xf32>, vector<34x8xf32>, vector<34x8xf32>, vector<34x8xf32>, vector<34x8xf32>, vector<34x8xf32>, vector<34x8xf32> -> vector<34x72xf32>
    %c0_45 = arith.constant 0 : index
    %c0_46 = arith.constant 0 : index
    %119 = vector.load %arg13[%c0_45, %c0_46] : memref<72x16xf32, #tpu.memory_space<vmem>>, vector<72x16xf32>
    %cst_47 = arith.constant dense<0.000000e+00> : vector<34x16xf32>
    %120 = tpu.matmul %118, %119, %cst_47 {dimension_numbers = #tpu.dot_dimension_numbers<[1], [0], [0], [1], [0, 0, 1, 1], [], []>} : vector<34x72xf32>, vector<72x16xf32>, vector<34x16xf32> -> vector<34x16xf32>
    %c0_48 = arith.constant 0 : index
    %c0_49 = arith.constant 0 : index
    %121 = vector.load %arg14[%c0_48, %c0_49] : memref<1x16xf32, #tpu.memory_space<vmem>>, vector<1x16xf32>
    %c0_50 = arith.constant 0 : index
    %c0_51 = arith.constant 0 : index
    %122 = vector.load %arg15[%c0_50, %c0_51] : memref<1x16xf32, #tpu.memory_space<vmem>>, vector<1x16xf32>
    %123 = vector.broadcast %108 : vector<34x1xf32> to vector<34x16xf32>
    %124 = arith.mulf %120, %123 : vector<34x16xf32>
    %cst_52 = arith.constant dense<0.000000e+00> : vector<16xf32>
    %125 = vector.multi_reduction <add>, %124, %cst_52 [0] : vector<34x16xf32> to vector<16xf32>
    %126 = vector.shape_cast %125 : vector<16xf32> to vector<1x16xf32>
    %127 = arith.mulf %124, %120 : vector<34x16xf32>
    %cst_53 = arith.constant dense<0.000000e+00> : vector<16xf32>
    %128 = vector.multi_reduction <add>, %127, %cst_53 [0] : vector<34x16xf32> to vector<16xf32>
    %129 = vector.shape_cast %128 : vector<16xf32> to vector<1x16xf32>
    %cst_54 = arith.constant 0.0416666679 : f32
    %130 = vector.broadcast %cst_54 : f32 to vector<1x16xf32>
    %131 = arith.mulf %126, %130 : vector<1x16xf32>
    %cst_55 = arith.constant 0.0416666679 : f32
    %132 = vector.broadcast %cst_55 : f32 to vector<1x16xf32>
    %133 = arith.mulf %129, %132 : vector<1x16xf32>
    %134 = arith.mulf %131, %131 : vector<1x16xf32>
    %135 = arith.subf %133, %134 : vector<1x16xf32>
    %cst_56 = arith.constant 9.99999974E-6 : f32
    %136 = vector.broadcast %cst_56 : f32 to vector<1x16xf32>
    %137 = arith.addf %135, %136 : vector<1x16xf32>
    %138 = math.rsqrt %137 : vector<1x16xf32>
    %139 = arith.mulf %121, %138 : vector<1x16xf32>
    %140 = arith.mulf %131, %139 : vector<1x16xf32>
    %141 = arith.subf %122, %140 : vector<1x16xf32>
    %142 = vector.broadcast %139 : vector<1x16xf32> to vector<34x16xf32>
    %143 = arith.mulf %120, %142 : vector<34x16xf32>
    %144 = vector.broadcast %141 : vector<1x16xf32> to vector<34x16xf32>
    %145 = arith.addf %143, %144 : vector<34x16xf32>
    %cst_57 = arith.constant 0.000000e+00 : f32
    %146 = vector.broadcast %cst_57 : f32 to vector<34x16xf32>
    %147 = arith.maximumf %145, %146 : vector<34x16xf32>
    %148 = vector.extract_strided_slice %147 {offsets = [0, 0], sizes = [2, 16], strides = [1, 1]} : vector<34x16xf32> to vector<2x16xf32>
    %149 = vector.extract_strided_slice %147 {offsets = [2, 0], sizes = [2, 16], strides = [1, 1]} : vector<34x16xf32> to vector<2x16xf32>
    %150 = vector.extract_strided_slice %147 {offsets = [4, 0], sizes = [2, 16], strides = [1, 1]} : vector<34x16xf32> to vector<2x16xf32>
    %151 = vector.extract_strided_slice %147 {offsets = [6, 0], sizes = [2, 16], strides = [1, 1]} : vector<34x16xf32> to vector<2x16xf32>
    %152 = vector.extract_strided_slice %147 {offsets = [8, 0], sizes = [2, 16], strides = [1, 1]} : vector<34x16xf32> to vector<2x16xf32>
    %153 = vector.extract_strided_slice %147 {offsets = [10, 0], sizes = [2, 16], strides = [1, 1]} : vector<34x16xf32> to vector<2x16xf32>
    %154 = vector.extract_strided_slice %147 {offsets = [22, 0], sizes = [2, 16], strides = [1, 1]} : vector<34x16xf32> to vector<2x16xf32>
    %155 = vector.extract_strided_slice %147 {offsets = [24, 0], sizes = [2, 16], strides = [1, 1]} : vector<34x16xf32> to vector<2x16xf32>
    %156 = vector.extract_strided_slice %147 {offsets = [26, 0], sizes = [2, 16], strides = [1, 1]} : vector<34x16xf32> to vector<2x16xf32>
    %157 = vector.extract_strided_slice %147 {offsets = [28, 0], sizes = [2, 16], strides = [1, 1]} : vector<34x16xf32> to vector<2x16xf32>
    %158 = vector.extract_strided_slice %147 {offsets = [30, 0], sizes = [2, 16], strides = [1, 1]} : vector<34x16xf32> to vector<2x16xf32>
    %159 = vector.extract_strided_slice %147 {offsets = [32, 0], sizes = [2, 16], strides = [1, 1]} : vector<34x16xf32> to vector<2x16xf32>
    %160 = tpu.concatenate %148, %149, %150, %151, %152, %153, %154, %155, %156, %157, %158, %159 in 1 : vector<2x16xf32>, vector<2x16xf32>, vector<2x16xf32>, vector<2x16xf32>, vector<2x16xf32>, vector<2x16xf32>, vector<2x16xf32>, vector<2x16xf32>, vector<2x16xf32>, vector<2x16xf32>, vector<2x16xf32>, vector<2x16xf32> -> vector<2x192xf32>
    %c0_58 = arith.constant 0 : index
    %c0_59 = arith.constant 0 : index
    %161 = vector.load %arg17[%c0_58, %c0_59] : memref<192x128xf32, #tpu.memory_space<vmem>>, vector<192x128xf32>
    %cst_60 = arith.constant dense<0.000000e+00> : vector<2x128xf32>
    %162 = tpu.matmul %160, %161, %cst_60 {dimension_numbers = #tpu.dot_dimension_numbers<[1], [0], [0], [1], [0, 0, 1, 1], [], []>} : vector<2x192xf32>, vector<192x128xf32>, vector<2x128xf32> -> vector<2x128xf32>
    %c0_61 = arith.constant 0 : index
    %c0_62 = arith.constant 0 : index
    %163 = vector.load %arg18[%c0_61, %c0_62] : memref<1x128xf32, #tpu.memory_space<vmem>>, vector<1x128xf32>
    %164 = vector.broadcast %163 : vector<1x128xf32> to vector<2x128xf32>
    %165 = arith.addf %162, %164 : vector<2x128xf32>
    %cst_63 = arith.constant 0.000000e+00 : f32
    %166 = vector.broadcast %cst_63 : f32 to vector<2x128xf32>
    %167 = arith.maximumf %165, %166 : vector<2x128xf32>
    %c0_64 = arith.constant 0 : index
    %c0_65 = arith.constant 0 : index
    %168 = vector.load %arg19[%c0_64, %c0_65] : memref<128x9xf32, #tpu.memory_space<vmem>>, vector<128x9xf32>
    %cst_66 = arith.constant dense<0.000000e+00> : vector<2x9xf32>
    %169 = tpu.matmul %167, %168, %cst_66 {dimension_numbers = #tpu.dot_dimension_numbers<[1], [0], [0], [1], [0, 0, 1, 1], [], []>} : vector<2x128xf32>, vector<128x9xf32>, vector<2x9xf32> -> vector<2x9xf32>
    %c0_67 = arith.constant 0 : index
    %c0_68 = arith.constant 0 : index
    %170 = vector.load %arg20[%c0_67, %c0_68] : memref<1x9xf32, #tpu.memory_space<vmem>>, vector<1x9xf32>
    %171 = vector.broadcast %170 : vector<1x9xf32> to vector<2x9xf32>
    %172 = arith.addf %169, %171 : vector<2x9xf32>
    %173 = vector.extract_strided_slice %172 {offsets = [0, 0], sizes = [2, 8], strides = [1, 1]} : vector<2x9xf32> to vector<2x8xf32>
    %174 = vector.extract_strided_slice %172 {offsets = [0, 8], sizes = [2, 1], strides = [1, 1]} : vector<2x9xf32> to vector<2x1xf32>
    %cst_69 = arith.constant dense<0.000000e+00> : vector<2xf32>
    %175 = vector.multi_reduction <add>, %173, %cst_69 [1] : vector<2x8xf32> to vector<2xf32>
    %176 = vector.shape_cast %175 : vector<2xf32> to vector<2x1xf32>
    %cst_70 = arith.constant 8.000000e+00 : f32
    %177 = vector.broadcast %cst_70 : f32 to vector<2x1xf32>
    %178 = arith.divf %176, %177 : vector<2x1xf32>
    %179 = vector.broadcast %178 : vector<2x1xf32> to vector<2x8xf32>
    %180 = arith.subf %173, %179 : vector<2x8xf32>
    %181 = vector.broadcast %174 : vector<2x1xf32> to vector<2x8xf32>
    %182 = arith.addf %181, %180 : vector<2x8xf32>
    %cst_71 = arith.constant 0.000000e+00 : f32
    %183 = vector.broadcast %cst_71 : f32 to vector<2x120xf32>
    %184 = tpu.concatenate %182, %183 in 1 : vector<2x8xf32>, vector<2x120xf32> -> vector<2x128xf32>
    %c0_72 = arith.constant 0 : index
    %c0_73 = arith.constant 0 : index
    %185 = vector.load %arg21[%c0_72, %c0_73] : memref<2x128xf32, #tpu.memory_space<vmem>>, vector<2x128xf32>
    tpu.vector_store %arg21[%c0_72, %c0_73], %184 {strides = array<i32>} : memref<2x128xf32, #tpu.memory_space<vmem>>, vector<2x128xf32>,
    return
  }
  func.func @transform_0(%arg0: i32) -> (i32, i32) {
    %c0_i32 = arith.constant 0 : i32
    %c0_i32_0 = arith.constant 0 : i32
    %c0_i32_1 = arith.constant 0 : i32
    return %c0_i32, %c0_i32_0 : i32, i32
  }
  func.func @transform_1(%arg0: i32) -> (i32, i32) {
    %c0_i32 = arith.constant 0 : i32
    %c0_i32_0 = arith.constant 0 : i32
    %c0_i32_1 = arith.constant 0 : i32
    return %c0_i32, %c0_i32_0 : i32, i32
  }
  func.func @transform_2(%arg0: i32) -> (i32, i32) {
    %c0_i32 = arith.constant 0 : i32
    %c0_i32_0 = arith.constant 0 : i32
    %c0_i32_1 = arith.constant 0 : i32
    return %c0_i32, %c0_i32_0 : i32, i32
  }
  func.func @transform_3(%arg0: i32) -> (i32, i32) {
    %c0_i32 = arith.constant 0 : i32
    %c0_i32_0 = arith.constant 0 : i32
    %c0_i32_1 = arith.constant 0 : i32
    return %c0_i32, %c0_i32_0 : i32, i32
  }
  func.func @transform_4(%arg0: i32) -> (i32, i32) {
    %c0_i32 = arith.constant 0 : i32
    %c0_i32_0 = arith.constant 0 : i32
    %c0_i32_1 = arith.constant 0 : i32
    return %c0_i32, %c0_i32_0 : i32, i32
  }
  func.func @transform_5(%arg0: i32) -> (i32, i32) {
    %c0_i32 = arith.constant 0 : i32
    %c0_i32_0 = arith.constant 0 : i32
    %c0_i32_1 = arith.constant 0 : i32
    return %c0_i32, %c0_i32_0 : i32, i32
  }
  func.func @transform_6(%arg0: i32) -> (i32, i32) {
    %c0_i32 = arith.constant 0 : i32
    %c0_i32_0 = arith.constant 0 : i32
    %c0_i32_1 = arith.constant 0 : i32
    return %c0_i32, %c0_i32_0 : i32, i32
  }
  func.func @transform_7(%arg0: i32) -> (i32, i32) {
    %c0_i32 = arith.constant 0 : i32
    %c0_i32_0 = arith.constant 0 : i32
    %c0_i32_1 = arith.constant 0 : i32
    return %c0_i32, %c0_i32_0 : i32, i32
  }
  func.func @transform_8(%arg0: i32) -> (i32, i32) {
    %c0_i32 = arith.constant 0 : i32
    %c0_i32_0 = arith.constant 0 : i32
    %c0_i32_1 = arith.constant 0 : i32
    return %c0_i32, %c0_i32_0 : i32, i32
  }
  func.func @transform_9(%arg0: i32) -> (i32, i32) {
    %c0_i32 = arith.constant 0 : i32
    %c0_i32_0 = arith.constant 0 : i32
    %c0_i32_1 = arith.constant 0 : i32
    return %c0_i32, %c0_i32_0 : i32, i32
  }
  func.func @transform_10(%arg0: i32) -> (i32, i32) {
    %c0_i32 = arith.constant 0 : i32
    %c0_i32_0 = arith.constant 0 : i32
    %c0_i32_1 = arith.constant 0 : i32
    return %c0_i32, %c0_i32_0 : i32, i32
  }
  func.func @transform_11(%arg0: i32) -> (i32, i32) {
    %c0_i32 = arith.constant 0 : i32
    %c0_i32_0 = arith.constant 0 : i32
    %c0_i32_1 = arith.constant 0 : i32
    return %c0_i32, %c0_i32_0 : i32, i32
  }
  func.func @transform_12(%arg0: i32) -> (i32, i32) {
    %c0_i32 = arith.constant 0 : i32
    %c0_i32_0 = arith.constant 0 : i32
    %c0_i32_1 = arith.constant 0 : i32
    return %c0_i32, %c0_i32_0 : i32, i32
  }
  func.func @transform_13(%arg0: i32) -> (i32, i32) {
    %c0_i32 = arith.constant 0 : i32
    %c0_i32_0 = arith.constant 0 : i32
    %c0_i32_1 = arith.constant 0 : i32
    return %c0_i32, %c0_i32_0 : i32, i32
  }
  func.func @transform_14(%arg0: i32) -> (i32, i32) {
    %c0_i32 = arith.constant 0 : i32
    %c0_i32_0 = arith.constant 0 : i32
    %c0_i32_1 = arith.constant 0 : i32
    return %c0_i32, %c0_i32_0 : i32, i32
  }
  func.func @transform_15(%arg0: i32) -> (i32, i32) {
    %c0_i32 = arith.constant 0 : i32
    %c0_i32_0 = arith.constant 0 : i32
    %c0_i32_1 = arith.constant 0 : i32
    return %c0_i32, %c0_i32_0 : i32, i32
  }
  func.func @transform_16(%arg0: i32) -> (i32, i32) {
    %c0_i32 = arith.constant 0 : i32
    %c0_i32_0 = arith.constant 0 : i32
    %c0_i32_1 = arith.constant 0 : i32
    return %c0_i32, %c0_i32_0 : i32, i32
  }
  func.func @transform_17(%arg0: i32) -> (i32, i32) {
    %c0_i32 = arith.constant 0 : i32
    %c0_i32_0 = arith.constant 0 : i32
    %c0_i32_1 = arith.constant 0 : i32
    return %c0_i32, %c0_i32_0 : i32, i32
  }
  func.func @transform_18(%arg0: i32) -> (i32, i32) {
    %c0_i32 = arith.constant 0 : i32
    %c0_i32_0 = arith.constant 0 : i32
    %c0_i32_1 = arith.constant 0 : i32
    return %c0_i32, %c0_i32_0 : i32, i32
  }
  func.func @transform_19(%arg0: i32) -> (i32, i32) {
    %c0_i32 = arith.constant 0 : i32
    %c0_i32_0 = arith.constant 0 : i32
    %c0_i32_1 = arith.constant 0 : i32
    return %c0_i32, %c0_i32_0 : i32, i32
  }
  func.func @transform_20(%arg0: i32) -> (i32, i32) {
    %c0_i32 = arith.constant 0 : i32
    %c0_i32_0 = arith.constant 0 : i32
    %c0_i32_1 = arith.constant 0 : i32
    return %c0_i32, %c0_i32_0 : i32, i32
  }
}

</mosaic_0001>

<llo_original>
// kernel: duel_qnet_forward.1
$region0: #{duel_qnet_forward.1}
  #allocation0 [shape = 'u32[]', space=smem, size = 0x4, offset = 0x4, fixed_abs, tag = 'smem constant byte address 0x4 - core index']
  #allocation1 [shape = 'u32[144,128]{1,0:T(1,128)}', space=vmem, size = 0x12000, scoped, tag = 'internal scratch']
  %s0 = inlined_call_operand.vmem [shape: f32[616,9], index: 0, kind: input, shape index: {}]
  %s1 = inlined_call_operand.vmem [shape: f32[9,8], index: 1, kind: input, shape index: {}]
  %s2 = inlined_call_operand.vmem [shape: f32[1,8], index: 2, kind: input, shape index: {}]
  %s3 = inlined_call_operand.vmem [shape: f32[1,8], index: 3, kind: input, shape index: {}]
  %s4 = inlined_call_operand.vmem [shape: f32[72,8], index: 4, kind: input, shape index: {}]
  %s5 = inlined_call_operand.vmem [shape: f32[1,8], index: 5, kind: input, shape index: {}]
  %s6 = inlined_call_operand.vmem [shape: f32[1,8], index: 6, kind: input, shape index: {}]
  %s7 = inlined_call_operand.vmem [shape: f32[130,1], index: 7, kind: input, shape index: {}]
  %s8 = inlined_call_operand.vmem [shape: f32[72,8], index: 8, kind: input, shape index: {}]
  %s9 = inlined_call_operand.vmem [shape: f32[1,8], index: 9, kind: input, shape index: {}]
  %s10 = inlined_call_operand.vmem [shape: f32[1,8], index: 10, kind: input, shape index: {}]
  %s11 = inlined_call_operand.vmem [shape: f32[82,1], index: 11, kind: input, shape index: {}]
  %s12 = inlined_call_operand.vmem [shape: f32[72,16], index: 12, kind: input, shape index: {}]
  %s13 = inlined_call_operand.vmem [shape: f32[1,16], index: 13, kind: input, shape index: {}]
  %s14 = inlined_call_operand.vmem [shape: f32[1,16], index: 14, kind: input, shape index: {}]
  %s15 = inlined_call_operand.vmem [shape: f32[34,1], index: 15, kind: input, shape index: {}]
  %s16 = inlined_call_operand.vmem [shape: f32[192,128], index: 16, kind: input, shape index: {}]
  %s17 = inlined_call_operand.vmem [shape: f32[1,128], index: 17, kind: input, shape index: {}]
  %s18 = inlined_call_operand.vmem [shape: f32[128,9], index: 18, kind: input, shape index: {}]
  %s19 = inlined_call_operand.vmem [shape: f32[1,9], index: 19, kind: input, shape index: {}]
  %s20 = inlined_call_operand.hbm [shape: f32[2,128], index: 20, kind: output, shape index: {}]
  %s21 = sld [smem:[#allocation0]]
  $region90: #{duel_qnet_forward.1} parent=0
    _
  %s23 = ssub.s32 1, %s21
  %s24 = scalar_select 0, %s23, %s21
  $region1: #{duel_qnet_forward.1} parent=0
    #allocation2 [shape = 'u8[1024]{0}', space=vmem, size = 0x400, scoped, tag = 'output window, operand 0, single buffered']
    #allocation3 [shape = 's32[1]{0}', space=sflag, size = 0x4, scoped, tag = 'scoped memory for duel_qnet_forward.1']
    %25 = vsyncpa [#allocation3], 0
    // Predicated region
    $region2: #{duel_qnet_forward.1} parent=1 // pred_check
      _
    $region3: #{duel_qnet_forward.1} parent=1 // pred_check_branch
      %27 = sbr.rel (0) target = $region5
    $region4: #{duel_qnet_forward.1} parent=1 // pred_region
      _
    $region5: #{duel_qnet_forward.1} parent=1 // pred_fallthru
      _
    // Predicated region
    $region6: #{duel_qnet_forward.1} parent=1 // pred_check
      _
    $region7: #{duel_qnet_forward.1} parent=1 // pred_check_branch
      %29 = sbr.rel (0) target = $region9
    $region8: #{duel_qnet_forward.1} parent=1 // pred_region
      _
    $region9: #{duel_qnet_forward.1} parent=1 // pred_fallthru
      _
    // Predicated region
    $region10: #{duel_qnet_forward.1} parent=1 // pred_check
      _
    $region11: #{duel_qnet_forward.1} parent=1 // pred_check_branch
      %31 = sbr.rel (0) target = $region13
    $region12: #{duel_qnet_forward.1} parent=1 // pred_region
      _
    $region13: #{duel_qnet_forward.1} parent=1 // pred_fallthru
      _
    // Predicated region
    $region14: #{duel_qnet_forward.1} parent=1 // pred_check
      _
    $region15: #{duel_qnet_forward.1} parent=1 // pred_check_branch
      %33 = sbr.rel (0) target = $region17
    $region16: #{duel_qnet_forward.1} parent=1 // pred_region
      _
    $region17: #{duel_qnet_forward.1} parent=1 // pred_fallthru
      _
    // Predicated region
    $region18: #{duel_qnet_forward.1} parent=1 // pred_check
      _
    $region19: #{duel_qnet_forward.1} parent=1 // pred_check_branch
      %35 = sbr.rel (0) target = $region21
    $region20: #{duel_qnet_forward.1} parent=1 // pred_region
      _
    $region21: #{duel_qnet_forward.1} parent=1 // pred_fallthru
      _
    // Predicated region
    $region22: #{duel_qnet_forward.1} parent=1 // pred_check
      _
    $region23: #{duel_qnet_forward.1} parent=1 // pred_check_branch
      %37 = sbr.rel (0) target = $region25
    $region24: #{duel_qnet_forward.1} parent=1 // pred_region
      _
    $region25: #{duel_qnet_forward.1} parent=1 // pred_fallthru
      _
    // Predicated region
    $region26: #{duel_qnet_forward.1} parent=1 // pred_check
      _
    $region27: #{duel_qnet_forward.1} parent=1 // pred_check_branch
      %39 = sbr.rel (0) target = $region29
    $region28: #{duel_qnet_forward.1} parent=1 // pred_region
      _
    $region29: #{duel_qnet_forward.1} parent=1 // pred_fallthru
      _
    // Predicated region
    $region30: #{duel_qnet_forward.1} parent=1 // pred_check
      _
    $region31: #{duel_qnet_forward.1} parent=1 // pred_check_branch
      %41 = sbr.rel (0) target = $region33
    $region32: #{duel_qnet_forward.1} parent=1 // pred_region
      _
    $region33: #{duel_qnet_forward.1} parent=1 // pred_fallthru
      _
    // Predicated region
    $region34: #{duel_qnet_forward.1} parent=1 // pred_check
      _
    $region35: #{duel_qnet_forward.1} parent=1 // pred_check_branch
      %43 = sbr.rel (0) target = $region37
    $region36: #{duel_qnet_forward.1} parent=1 // pred_region
      _
    $region37: #{duel_qnet_forward.1} parent=1 // pred_fallthru
      _
    // Predicated region
    $region38: #{duel_qnet_forward.1} parent=1 // pred_check
      _
    $region39: #{duel_qnet_forward.1} parent=1 // pred_check_branch
      %45 = sbr.rel (0) target = $region41
    $region40: #{duel_qnet_forward.1} parent=1 // pred_region
      _
    $region41: #{duel_qnet_forward.1} parent=1 // pred_fallthru
      _
    // Predicated region
    $region42: #{duel_qnet_forward.1} parent=1 // pred_check
      _
    $region43: #{duel_qnet_forward.1} parent=1 // pred_check_branch
      %47 = sbr.rel (0) target = $region45
    $region44: #{duel_qnet_forward.1} parent=1 // pred_region
      _
    $region45: #{duel_qnet_forward.1} parent=1 // pred_fallthru
      _
    // Predicated region
    $region46: #{duel_qnet_forward.1} parent=1 // pred_check
      _
    $region47: #{duel_qnet_forward.1} parent=1 // pred_check_branch
      %49 = sbr.rel (0) target = $region49
    $region48: #{duel_qnet_forward.1} parent=1 // pred_region
      _
    $region49: #{duel_qnet_forward.1} parent=1 // pred_fallthru
      _
    // Predicated region
    $region50: #{duel_qnet_forward.1} parent=1 // pred_check
      _
    $region51: #{duel_qnet_forward.1} parent=1 // pred_check_branch
      %51 = sbr.rel (0) target = $region53
    $region52: #{duel_qnet_forward.1} parent=1 // pred_region
      _
    $region53: #{duel_qnet_forward.1} parent=1 // pred_fallthru
      _
    // Predicated region
    $region54: #{duel_qnet_forward.1} parent=1 // pred_check
      _
    $region55: #{duel_qnet_forward.1} parent=1 // pred_check_branch
      %53 = sbr.rel (0) target = $region57
    $region56: #{duel_qnet_forward.1} parent=1 // pred_region
      _
    $region57: #{duel_qnet_forward.1} parent=1 // pred_fallthru
      _
    // Predicated region
    $region58: #{duel_qnet_forward.1} parent=1 // pred_check
      _
    $region59: #{duel_qnet_forward.1} parent=1 // pred_check_branch
      %55 = sbr.rel (0) target = $region61
    $region60: #{duel_qnet_forward.1} parent=1 // pred_region
      _
    $region61: #{duel_qnet_forward.1} parent=1 // pred_fallthru
      _
    // Predicated region
    $region62: #{duel_qnet_forward.1} parent=1 // pred_check
      _
    $region63: #{duel_qnet_forward.1} parent=1 // pred_check_branch
      %57 = sbr.rel (0) target = $region65
    $region64: #{duel_qnet_forward.1} parent=1 // pred_region
      _
    $region65: #{duel_qnet_forward.1} parent=1 // pred_fallthru
      _
    // Predicated region
    $region66: #{duel_qnet_forward.1} parent=1 // pred_check
      _
    $region67: #{duel_qnet_forward.1} parent=1 // pred_check_branch
      %59 = sbr.rel (0) target = $region69
    $region68: #{duel_qnet_forward.1} parent=1 // pred_region
      _
    $region69: #{duel_qnet_forward.1} parent=1 // pred_fallthru
      _
    // Predicated region
    $region70: #{duel_qnet_forward.1} parent=1 // pred_check
      _
    $region71: #{duel_qnet_forward.1} parent=1 // pred_check_branch
      %61 = sbr.rel (0) target = $region73
    $region72: #{duel_qnet_forward.1} parent=1 // pred_region
      _
    $region73: #{duel_qnet_forward.1} parent=1 // pred_fallthru
      _
    // Predicated region
    $region74: #{duel_qnet_forward.1} parent=1 // pred_check
      _
    $region75: #{duel_qnet_forward.1} parent=1 // pred_check_branch
      %63 = sbr.rel (0) target = $region77
    $region76: #{duel_qnet_forward.1} parent=1 // pred_region
      _
    $region77: #{duel_qnet_forward.1} parent=1 // pred_fallthru
      _
    // Predicated region
    $region78: #{duel_qnet_forward.1} parent=1 // pred_check
      _
    $region79: #{duel_qnet_forward.1} parent=1 // pred_check_branch
      %65 = sbr.rel (0) target = $region81
    $region80: #{duel_qnet_forward.1} parent=1 // pred_region
      _
    $region81: #{duel_qnet_forward.1} parent=1 // pred_fallthru
      _
    %v66 = vld [vmem:[%s0] sm:$0xff]
    %v67 = vld [vmem:[%s0 + $0x8] sm:$0xff]
    %v68 = vld [vmem:[%s0 + $0x10] sm:$0xff]
    %v69 = vld [vmem:[%s0 + $0x18] sm:$0xff]
    %v70 = vld [vmem:[%s0 + $0x20] sm:$0xff]
    %v71 = vld [vmem:[%s0 + $0x28] sm:$0xff]
    %v72 = vld [vmem:[%s0 + $0x30] sm:$0xff]
    %v73 = vld [vmem:[%s0 + $0x38] sm:$0xff]
    %v74 = vld [vmem:[%s0 + $0x40] sm:$0xff]
    %v75 = vld [vmem:[%s0 + $0x48] sm:$0xff]
    %v76 = vld [vmem:[%s0 + $0x50] sm:$0xff]
    %v77 = vld [vmem:[%s0 + $0x58] sm:$0xff]
    %v78 = vld [vmem:[%s0 + $0x60] sm:$0xff]
    %v79 = vld [vmem:[%s0 + $0x68] sm:$0xff]
    %v80 = vld [vmem:[%s0 + $0x70] sm:$0xff]
    %v81 = vld [vmem:[%s0 + $0x78] sm:$0xff]
    %v82 = vld [vmem:[%s0 + $0x80] sm:$0xff]
    %v83 = vld [vmem:[%s0 + $0x88] sm:$0xff]
    %v84 = vld [vmem:[%s0 + $0x90] sm:$0xff]
    %v85 = vld [vmem:[%s0 + $0x98] sm:$0xff]
    %v86 = vld [vmem:[%s0 + $0xa0] sm:$0xff]
    %v87 = vld [vmem:[%s0 + $0xa8] sm:$0xff]
    %v88 = vld [vmem:[%s0 + $0xb0] sm:$0xff]
    %v89 = vld [vmem:[%s0 + $0xb8] sm:$0xff]
    %v90 = vld [vmem:[%s0 + $0xc0] sm:$0xff]
    %v91 = vld [vmem:[%s0 + $0xc8] sm:$0xff]
    %v92 = vld [vmem:[%s0 + $0xd0] sm:$0xff]
    %v93 = vld [vmem:[%s0 + $0xd8] sm:$0xff]
    %v94 = vld [vmem:[%s0 + $0xe0] sm:$0xff]
    %v95 = vld [vmem:[%s0 + $0xe8] sm:$0xff]
    %v96 = vld [vmem:[%s0 + $0xf0] sm:$0xff]
    %v97 = vld [vmem:[%s0 + $0xf8] sm:$0xff]
    %v98 = vld [vmem:[%s0 + $0x100] sm:$0xff]
    %v99 = vld [vmem:[%s0 + $0x108] sm:$0xff]
    %v100 = vld [vmem:[%s0 + $0x110] sm:$0xff]
    %v101 = vld [vmem:[%s0 + $0x118] sm:$0xff]
    %v102 = vld [vmem:[%s0 + $0x120] sm:$0xff]
    %v103 = vld [vmem:[%s0 + $0x128] sm:$0xff]
    %v104 = vld [vmem:[%s0 + $0x130] sm:$0xff]
    %v105 = vld [vmem:[%s0 + $0x138] sm:$0xff]
    %v106 = vld [vmem:[%s0 + $0x140] sm:$0xff]
    %v107 = vld [vmem:[%s0 + $0x148] sm:$0xff]
    %v108 = vld [vmem:[%s0 + $0x150] sm:$0xff]
    %v109 = vld [vmem:[%s0 + $0x158] sm:$0xff]
    %v110 = vld [vmem:[%s0 + $0x160] sm:$0xff]
    %v111 = vld [vmem:[%s0 + $0x168] sm:$0xff]
    %v112 = vld [vmem:[%s0 + $0x170] sm:$0xff]
    %v113 = vld [vmem:[%s0 + $0x178] sm:$0xff]
    %v114 = vld [vmem:[%s0 + $0x180] sm:$0xff]
    %v115 = vld [vmem:[%s0 + $0x188] sm:$0xff]
    %v116 = vld [vmem:[%s0 + $0x190] sm:$0xff]
    %v117 = vld [vmem:[%s0 + $0x198] sm:$0xff]
    %v118 = vld [vmem:[%s0 + $0x1a0] sm:$0xff]
    %v119 = vld [vmem:[%s0 + $0x1a8] sm:$0xff]
    %v120 = vld [vmem:[%s0 + $0x1b0] sm:$0xff]
    %v121 = vld [vmem:[%s0 + $0x1b8] sm:$0xff]
    %v122 = vld [vmem:[%s0 + $0x1c0] sm:$0xff]
    %v123 = vld [vmem:[%s0 + $0x1c8] sm:$0xff]
    %v124 = vld [vmem:[%s0 + $0x1d0] sm:$0xff]
    %v125 = vld [vmem:[%s0 + $0x1d8] sm:$0xff]
    %v126 = vld [vmem:[%s0 + $0x1e0] sm:$0xff]
    %v127 = vld [vmem:[%s0 + $0x1e8] sm:$0xff]
    %v128 = vld [vmem:[%s0 + $0x1f0] sm:$0xff]
    %v129 = vld [vmem:[%s0 + $0x1f8] sm:$0xff]
    %v130 = vld [vmem:[%s0 + $0x200] sm:$0xff]
    %v131 = vld [vmem:[%s0 + $0x208] sm:$0xff]
    %v132 = vld [vmem:[%s0 + $0x210] sm:$0xff]
    %v133 = vld [vmem:[%s0 + $0x218] sm:$0xff]
    %v134 = vld [vmem:[%s0 + $0x220] sm:$0xff]
    %v135 = vld [vmem:[%s0 + $0x228] sm:$0xff]
    %v136 = vld [vmem:[%s0 + $0x230] sm:$0xff]
    %v137 = vld [vmem:[%s0 + $0x238] sm:$0xff]
    %v138 = vld [vmem:[%s0 + $0x240] sm:$0xff]
    %v139 = vld [vmem:[%s0 + $0x248] sm:$0xff]
    %v140 = vld [vmem:[%s0 + $0x250] sm:$0xff]
    %v141 = vld [vmem:[%s0 + $0x258] sm:$0xff]
    %v142 = vld [vmem:[%s0 + $0x260] sm:$0xff]
    %v143 = vld [vmem:[%s1] sm:$0xff]
    %v144 = vld [vmem:[%s1 + $0x8] sm:$0x1]
    %vm145 = vcmask 72704
    %v147 = vsel %vm145, %v66, 0
    %v150 = vsel %vm145, %v67, 0
    %v153 = vsel %vm145, %v68, 0
    %v156 = vsel %vm145, %v69, 0
    %v159 = vsel %vm145, %v70, 0
    %v162 = vsel %vm145, %v71, 0
    %v165 = vsel %vm145, %v72, 0
    %v168 = vsel %vm145, %v73, 0
    %v171 = vsel %vm145, %v74, 0
    %v174 = vsel %vm145, %v75, 0
    %v177 = vsel %vm145, %v76, 0
    %v180 = vsel %vm145, %v77, 0
    %v183 = vsel %vm145, %v78, 0
    %v186 = vsel %vm145, %v79, 0
    %v189 = vsel %vm145, %v80, 0
    %v192 = vsel %vm145, %v81, 0
    %v195 = vsel %vm145, %v82, 0
    %v198 = vsel %vm145, %v83, 0
    %v201 = vsel %vm145, %v84, 0
    %v204 = vsel %vm145, %v85, 0
    %v207 = vsel %vm145, %v86, 0
    %v210 = vsel %vm145, %v87, 0
    %v213 = vsel %vm145, %v88, 0
    %v216 = vsel %vm145, %v89, 0
    %v219 = vsel %vm145, %v90, 0
    %v222 = vsel %vm145, %v91, 0
    %v225 = vsel %vm145, %v92, 0
    %v228 = vsel %vm145, %v93, 0
    %v231 = vsel %vm145, %v94, 0
    %v234 = vsel %vm145, %v95, 0
    %v237 = vsel %vm145, %v96, 0
    %v240 = vsel %vm145, %v97, 0
    %v243 = vsel %vm145, %v98, 0
    %v246 = vsel %vm145, %v99, 0
    %v249 = vsel %vm145, %v100, 0
    %v252 = vsel %vm145, %v101, 0
    %v255 = vsel %vm145, %v102, 0
    %v258 = vsel %vm145, %v103, 0
    %v261 = vsel %vm145, %v104, 0
    %v264 = vsel %vm145, %v105, 0
    %v267 = vsel %vm145, %v106, 0
    %v270 = vsel %vm145, %v107, 0
    %v273 = vsel %vm145, %v108, 0
    %v276 = vsel %vm145, %v109, 0
    %v279 = vsel %vm145, %v110, 0
    %v282 = vsel %vm145, %v111, 0
    %v285 = vsel %vm145, %v112, 0
    %v288 = vsel %vm145, %v113, 0
    %v291 = vsel %vm145, %v114, 0
    %v294 = vsel %vm145, %v115, 0
    %v297 = vsel %vm145, %v116, 0
    %v300 = vsel %vm145, %v117, 0
    %v303 = vsel %vm145, %v118, 0
    %v306 = vsel %vm145, %v119, 0
    %v309 = vsel %vm145, %v120, 0
    %v312 = vsel %vm145, %v121, 0
    %v315 = vsel %vm145, %v122, 0
    %v318 = vsel %vm145, %v123, 0
    %v321 = vsel %vm145, %v124, 0
    %v324 = vsel %vm145, %v125, 0
    %v327 = vsel %vm145, %v126, 0
    %v330 = vsel %vm145, %v127, 0
    %v333 = vsel %vm145, %v128, 0
    %v336 = vsel %vm145, %v129, 0
    %v339 = vsel %vm145, %v130, 0
    %v342 = vsel %vm145, %v131, 0
    %v345 = vsel %vm145, %v132, 0
    %v348 = vsel %vm145, %v133, 0
    %v351 = vsel %vm145, %v134, 0
    %v354 = vsel %vm145, %v135, 0
    %v357 = vsel %vm145, %v136, 0
    %v360 = vsel %vm145, %v137, 0
    %v363 = vsel %vm145, %v138, 0
    %v366 = vsel %vm145, %v139, 0
    %v369 = vsel %vm145, %v140, 0
    %v372 = vsel %vm145, %v141, 0
    %v375 = vsel %vm145, %v142, 0
    %vm377 = vcmask 1040384
    %v379 = vsel %vm377, %v144, 0
    %381 = vmatprep.subr.mxu0 0.0
    %382 = vmatpush1.msra.mxu0 %v143
    %383 = vmatprep.subr.mxu0 0.0
    %384 = vmatpush1.msra.mxu0 %v379
    %385 = vmatprep.subr.mxu0 0.0
    %386 = vmatpush1.msra.mxu0 0.0
    %387 = vmatprep.subr.mxu0 0.0
    %388 = vmatpush1.msra.mxu0 0.0
    %389 = vmatprep.subr.mxu0 0.0
    %390 = vmatpush1.msra.mxu0 0.0
    %391 = vmatprep.subr.mxu0 0.0
    %392 = vmatpush1.msra.mxu0 0.0
    %393 = vmatprep.subr.mxu0 0.0
    %394 = vmatpush1.msra.mxu0 0.0
    %395 = vmatprep.subr.mxu0 0.0
    %396 = vmatpush1.msra.mxu0 0.0
    %397 = vmatprep.subr.mxu0 0.0
    %398 = vmatpush1.msra.mxu0 0.0
    %399 = vmatprep.subr.mxu0 0.0
    %400 = vmatpush1.msra.mxu0 0.0
    %401 = vmatprep.subr.mxu0 0.0
    %402 = vmatpush1.msra.mxu0 0.0
    %403 = vmatprep.subr.mxu0 0.0
    %404 = vmatpush1.msra.mxu0 0.0
    %405 = vmatprep.subr.mxu0 0.0
    %406 = vmatpush1.msra.mxu0 0.0
    %407 = vmatprep.subr.mxu0 0.0
    %408 = vmatpush1.msra.mxu0 0.0
    %409 = vmatprep.subr.mxu0 0.0
    %410 = vmatpush1.msra.mxu0 0.0
    %411 = vmatprep.subr.mxu0 0.0
    %412 = vmatpush1.msra.mxu0 0.0
    %413 = vmatprep.subr.mxu0 0.0
    %414 = vmatpush1.msra.mxu0 0.0
    %415 = vmatprep.subr.mxu0 0.0
    %416 = vmatpush1.msra.mxu0 0.0
    %417 = vmatprep.subr.mxu0 0.0
    %418 = vmatpush1.msra.mxu0 0.0
    %419 = vmatprep.subr.mxu0 0.0
    %420 = vmatpush1.msra.mxu0 0.0
    %421 = vmatprep.subr.mxu0 0.0
    %422 = vmatpush1.msra.mxu0 0.0
    %423 = vmatprep.subr.mxu0 0.0
    %424 = vmatpush1.msra.mxu0 0.0
    %425 = vmatprep.subr.mxu0 0.0
    %426 = vmatpush1.msra.mxu0 0.0
    %427 = vmatprep.subr.mxu0 0.0
    %428 = vmatpush1.msra.mxu0 0.0
    %429 = vmatprep.subr.mxu0 0.0
    %430 = vmatpush1.msra.mxu0 0.0
    %431 = vmatprep.subr.mxu0 0.0
    %432 = vmatpush1.msra.mxu0 0.0
    %433 = vmatprep.subr.mxu0 0.0
    %434 = vmatpush1.msra.mxu0 0.0
    %435 = vmatprep.subr.mxu0 0.0
    %436 = vmatpush1.msra.mxu0 0.0
    %437 = vmatprep.subr.mxu0 0.0
    %438 = vmatpush1.msra.mxu0 0.0
    %439 = vmatprep.subr.mxu0 0.0
    %440 = vmatpush1.msra.mxu0 0.0
    %441 = vmatprep.subr.mxu0 0.0
    %442 = vmatpush1.msra.mxu0 0.0
    %443 = vmatprep.subr.mxu0 0.0
    %444 = vmatpush1.msra.mxu0 0.0
    %445 = vmatprep.mubr.f32.mxu0 0.0
    %446 = vmatmul.mubr.f32.gmra.mrb[0].mxu0 %v147
    %v447 = vpop.f32.mrb[0].mxu0
    %v448 = vadd.f32 0.0, %v447
    %v449 = vpop.f32.mrb[0].mxu0
    %450 = vmatprep.mubr.f32.mxu0 0.0
    %451 = vmatmul.mubr.f32.gmra.mrb[0].mxu0 %v150
    %v452 = vpop.f32.mrb[0].mxu0
    %v453 = vadd.f32 0.0, %v452
    %v454 = vpop.f32.mrb[0].mxu0
    %455 = vmatprep.mubr.f32.mxu0 0.0
    %456 = vmatmul.mubr.f32.gmra.mrb[0].mxu0 %v153
    %v457 = vpop.f32.mrb[0].mxu0
    %v458 = vadd.f32 0.0, %v457
    %v459 = vpop.f32.mrb[0].mxu0
    %460 = vmatprep.mubr.f32.mxu0 0.0
    %461 = vmatmul.mubr.f32.gmra.mrb[0].mxu0 %v156
    %v462 = vpop.f32.mrb[0].mxu0
    %v463 = vadd.f32 0.0, %v462
    %v464 = vpop.f32.mrb[0].mxu0
    %465 = vmatprep.mubr.f32.mxu0 0.0
    %466 = vmatmul.mubr.f32.gmra.mrb[0].mxu0 %v159
    %v467 = vpop.f32.mrb[0].mxu0
    %v468 = vadd.f32 0.0, %v467
    %v469 = vpop.f32.mrb[0].mxu0
    %470 = vmatprep.mubr.f32.mxu0 0.0
    %471 = vmatmul.mubr.f32.gmra.mrb[0].mxu0 %v162
    %v472 = vpop.f32.mrb[0].mxu0
    %v473 = vadd.f32 0.0, %v472
    %v474 = vpop.f32.mrb[0].mxu0
    %475 = vmatprep.mubr.f32.mxu0 0.0
    %476 = vmatmul.mubr.f32.gmra.mrb[0].mxu0 %v165
    %v477 = vpop.f32.mrb[0].mxu0
    %v478 = vadd.f32 0.0, %v477
    %v479 = vpop.f32.mrb[0].mxu0
    %480 = vmatprep.mubr.f32.mxu0 0.0
    %481 = vmatmul.mubr.f32.gmra.mrb[0].mxu0 %v168
    %v482 = vpop.f32.mrb[0].mxu0
    %v483 = vadd.f32 0.0, %v482
    %v484 = vpop.f32.mrb[0].mxu0
    %485 = vmatprep.mubr.f32.mxu0 0.0
    %486 = vmatmul.mubr.f32.gmra.mrb[0].mxu0 %v171
    %v487 = vpop.f32.mrb[0].mxu0
    %v488 = vadd.f32 0.0, %v487
    %v489 = vpop.f32.mrb[0].mxu0
    %490 = vmatprep.mubr.f32.mxu0 0.0
    %491 = vmatmul.mubr.f32.gmra.mrb[0].mxu0 %v174
    %v492 = vpop.f32.mrb[0].mxu0
    %v493 = vadd.f32 0.0, %v492
    %v494 = vpop.f32.mrb[0].mxu0
    %495 = vmatprep.mubr.f32.mxu0 0.0
    %496 = vmatmul.mubr.f32.gmra.mrb[0].mxu0 %v177
    %v497 = vpop.f32.mrb[0].mxu0
    %v498 = vadd.f32 0.0, %v497
    %v499 = vpop.f32.mrb[0].mxu0
    %500 = vmatprep.mubr.f32.mxu0 0.0
    %501 = vmatmul.mubr.f32.gmra.mrb[0].mxu0 %v180
    %v502 = vpop.f32.mrb[0].mxu0
    %v503 = vadd.f32 0.0, %v502
    %v504 = vpop.f32.mrb[0].mxu0
    %505 = vmatprep.mubr.f32.mxu0 0.0
    %506 = vmatmul.mubr.f32.gmra.mrb[0].mxu0 %v183
    %v507 = vpop.f32.mrb[0].mxu0
    %v508 = vadd.f32 0.0, %v507
    %v509 = vpop.f32.mrb[0].mxu0
    %510 = vmatprep.mubr.f32.mxu0 0.0
    %511 = vmatmul.mubr.f32.gmra.mrb[0].mxu0 %v186
    %v512 = vpop.f32.mrb[0].mxu0
    %v513 = vadd.f32 0.0, %v512
    %v514 = vpop.f32.mrb[0].mxu0
    %515 = vmatprep.mubr.f32.mxu0 0.0
    %516 = vmatmul.mubr.f32.gmra.mrb[0].mxu0 %v189
    %v517 = vpop.f32.mrb[0].mxu0
    %v518 = vadd.f32 0.0, %v517
    %v519 = vpop.f32.mrb[0].mxu0
    %520 = vmatprep.mubr.f32.mxu0 0.0
    %521 = vmatmul.mubr.f32.gmra.mrb[0].mxu0 %v192
    %v522 = vpop.f32.mrb[0].mxu0
    %v523 = vadd.f32 0.0, %v522
    %v524 = vpop.f32.mrb[0].mxu0
    %525 = vmatprep.mubr.f32.mxu0 0.0
    %526 = vmatmul.mubr.f32.gmra.mrb[0].mxu0 %v195
    %v527 = vpop.f32.mrb[0].mxu0
    %v528 = vadd.f32 0.0, %v527
    %v529 = vpop.f32.mrb[0].mxu0
    %530 = vmatprep.mubr.f32.mxu0 0.0
    %531 = vmatmul.mubr.f32.gmra.mrb[0].mxu0 %v198
    %v532 = vpop.f32.mrb[0].mxu0
    %v533 = vadd.f32 0.0, %v532
    %v534 = vpop.f32.mrb[0].mxu0
    %535 = vmatprep.mubr.f32.mxu0 0.0
    %536 = vmatmul.mubr.f32.gmra.mrb[0].mxu0 %v201
    %v537 = vpop.f32.mrb[0].mxu0
    %v538 = vadd.f32 0.0, %v537
    %v539 = vpop.f32.mrb[0].mxu0
    %540 = vmatprep.mubr.f32.mxu0 0.0
    %541 = vmatmul.mubr.f32.gmra.mrb[0].mxu0 %v204
    %v542 = vpop.f32.mrb[0].mxu0
    %v543 = vadd.f32 0.0, %v542
    %v544 = vpop.f32.mrb[0].mxu0
    %545 = vmatprep.mubr.f32.mxu0 0.0
    %546 = vmatmul.mubr.f32.gmra.mrb[0].mxu0 %v207
    %v547 = vpop.f32.mrb[0].mxu0
    %v548 = vadd.f32 0.0, %v547
    %v549 = vpop.f32.mrb[0].mxu0
    %550 = vmatprep.mubr.f32.mxu0 0.0
    %551 = vmatmul.mubr.f32.gmra.mrb[0].mxu0 %v210
    %v552 = vpop.f32.mrb[0].mxu0
    %v553 = vadd.f32 0.0, %v552
    %v554 = vpop.f32.mrb[0].mxu0
    %555 = vmatprep.mubr.f32.mxu0 0.0
    %556 = vmatmul.mubr.f32.gmra.mrb[0].mxu0 %v213
    %v557 = vpop.f32.mrb[0].mxu0
    %v558 = vadd.f32 0.0, %v557
    %v559 = vpop.f32.mrb[0].mxu0
    %560 = vmatprep.mubr.f32.mxu0 0.0
    %561 = vmatmul.mubr.f32.gmra.mrb[0].mxu0 %v216
    %v562 = vpop.f32.mrb[0].mxu0
    %v563 = vadd.f32 0.0, %v562
    %v564 = vpop.f32.mrb[0].mxu0
    %565 = vmatprep.mubr.f32.mxu0 0.0
    %566 = vmatmul.mubr.f32.gmra.mrb[0].mxu0 %v219
    %v567 = vpop.f32.mrb[0].mxu0
    %v568 = vadd.f32 0.0, %v567
    %v569 = vpop.f32.mrb[0].mxu0
    %570 = vmatprep.mubr.f32.mxu0 0.0
    %571 = vmatmul.mubr.f32.gmra.mrb[0].mxu0 %v222
    %v572 = vpop.f32.mrb[0].mxu0
    %v573 = vadd.f32 0.0, %v572
    %v574 = vpop.f32.mrb[0].mxu0
    %575 = vmatprep.mubr.f32.mxu0 0.0
    %576 = vmatmul.mubr.f32.gmra.mrb[0].mxu0 %v225
    %v577 = vpop.f32.mrb[0].mxu0
    %v578 = vadd.f32 0.0, %v577
    %v579 = vpop.f32.mrb[0].mxu0
    %580 = vmatprep.mubr.f32.mxu0 0.0
    %581 = vmatmul.mubr.f32.gmra.mrb[0].mxu0 %v228
    %v582 = vpop.f32.mrb[0].mxu0
    %v583 = vadd.f32 0.0, %v582
    %v584 = vpop.f32.mrb[0].mxu0
    %585 = vmatprep.mubr.f32.mxu0 0.0
    %586 = vmatmul.mubr.f32.gmra.mrb[0].mxu0 %v231
    %v587 = vpop.f32.mrb[0].mxu0
    %v588 = vadd.f32 0.0, %v587
    %v589 = vpop.f32.mrb[0].mxu0
    %590 = vmatprep.mubr.f32.mxu0 0.0
    %591 = vmatmul.mubr.f32.gmra.mrb[0].mxu0 %v234
    %v592 = vpop.f32.mrb[0].mxu0
    %v593 = vadd.f32 0.0, %v592
    %v594 = vpop.f32.mrb[0].mxu0
    %595 = vmatprep.mubr.f32.mxu0 0.0
    %596 = vmatmul.mubr.f32.gmra.mrb[0].mxu0 %v237
    %v597 = vpop.f32.mrb[0].mxu0
    %v598 = vadd.f32 0.0, %v597
    %v599 = vpop.f32.mrb[0].mxu0
    %600 = vmatprep.mubr.f32.mxu0 0.0
    %601 = vmatmul.mubr.f32.gmra.mrb[0].mxu0 %v240
    %v602 = vpop.f32.mrb[0].mxu0
    %v603 = vadd.f32 0.0, %v602
    %v604 = vpop.f32.mrb[0].mxu0
    %605 = vmatprep.mubr.f32.mxu0 0.0
    %606 = vmatmul.mubr.f32.gmra.mrb[0].mxu0 %v243
    %v607 = vpop.f32.mrb[0].mxu0
    %v608 = vadd.f32 0.0, %v607
    %v609 = vpop.f32.mrb[0].mxu0
    %610 = vmatprep.mubr.f32.mxu0 0.0
    %611 = vmatmul.mubr.f32.gmra.mrb[0].mxu0 %v246
    %v612 = vpop.f32.mrb[0].mxu0
    %v613 = vadd.f32 0.0, %v612
    %v614 = vpop.f32.mrb[0].mxu0
    %615 = vmatprep.mubr.f32.mxu0 0.0
    %616 = vmatmul.mubr.f32.gmra.mrb[0].mxu0 %v249
    %v617 = vpop.f32.mrb[0].mxu0
    %v618 = vadd.f32 0.0, %v617
    %v619 = vpop.f32.mrb[0].mxu0
    %620 = vmatprep.mubr.f32.mxu0 0.0
    %621 = vmatmul.mubr.f32.gmra.mrb[0].mxu0 %v252
    %v622 = vpop.f32.mrb[0].mxu0
    %v623 = vadd.f32 0.0, %v622
    %v624 = vpop.f32.mrb[0].mxu0
    %625 = vmatprep.mubr.f32.mxu0 0.0
    %626 = vmatmul.mubr.f32.gmra.mrb[0].mxu0 %v255
    %v627 = vpop.f32.mrb[0].mxu0
    %v628 = vadd.f32 0.0, %v627
    %v629 = vpop.f32.mrb[0].mxu0
    %630 = vmatprep.mubr.f32.mxu0 0.0
    %631 = vmatmul.mubr.f32.gmra.mrb[0].mxu0 %v258
    %v632 = vpop.f32.mrb[0].mxu0
    %v633 = vadd.f32 0.0, %v632
    %v634 = vpop.f32.mrb[0].mxu0
    %635 = vmatprep.mubr.f32.mxu0 0.0
    %636 = vmatmul.mubr.f32.gmra.mrb[0].mxu0 %v261
    %v637 = vpop.f32.mrb[0].mxu0
    %v638 = vadd.f32 0.0, %v637
    %v639 = vpop.f32.mrb[0].mxu0
    %640 = vmatprep.mubr.f32.mxu0 0.0
    %641 = vmatmul.mubr.f32.gmra.mrb[0].mxu0 %v264
    %v642 = vpop.f32.mrb[0].mxu0
    %v643 = vadd.f32 0.0, %v642
    %v644 = vpop.f32.mrb[0].mxu0
    %645 = vmatprep.mubr.f32.mxu0 0.0
    %646 = vmatmul.mubr.f32.gmra.mrb[0].mxu0 %v267
    %v647 = vpop.f32.mrb[0].mxu0
    %v648 = vadd.f32 0.0, %v647
    %v649 = vpop.f32.mrb[0].mxu0
    %650 = vmatprep.mubr.f32.mxu0 0.0
    %651 = vmatmul.mubr.f32.gmra.mrb[0].mxu0 %v270
    %v652 = vpop.f32.mrb[0].mxu0
    %v653 = vadd.f32 0.0, %v652
    %v654 = vpop.f32.mrb[0].mxu0
    %655 = vmatprep.mubr.f32.mxu0 0.0
    %656 = vmatmul.mubr.f32.gmra.mrb[0].mxu0 %v273
    %v657 = vpop.f32.mrb[0].mxu0
    %v658 = vadd.f32 0.0, %v657
    %v659 = vpop.f32.mrb[0].mxu0
    %660 = vmatprep.mubr.f32.mxu0 0.0
    %661 = vmatmul.mubr.f32.gmra.mrb[0].mxu0 %v276
    %v662 = vpop.f32.mrb[0].mxu0
    %v663 = vadd.f32 0.0, %v662
    %v664 = vpop.f32.mrb[0].mxu0
    %665 = vmatprep.mubr.f32.mxu0 0.0
    %666 = vmatmul.mubr.f32.gmra.mrb[0].mxu0 %v279
    %v667 = vpop.f32.mrb[0].mxu0
    %v668 = vadd.f32 0.0, %v667
    %v669 = vpop.f32.mrb[0].mxu0
    %670 = vmatprep.mubr.f32.mxu0 0.0
    %671 = vmatmul.mubr.f32.gmra.mrb[0].mxu0 %v282
    %v672 = vpop.f32.mrb[0].mxu0
    %v673 = vadd.f32 0.0, %v672
    %v674 = vpop.f32.mrb[0].mxu0
    %675 = vmatprep.mubr.f32.mxu0 0.0
    %676 = vmatmul.mubr.f32.gmra.mrb[0].mxu0 %v285
    %v677 = vpop.f32.mrb[0].mxu0
    %v678 = vadd.f32 0.0, %v677
    %v679 = vpop.f32.mrb[0].mxu0
    %680 = vmatprep.mubr.f32.mxu0 0.0
    %681 = vmatmul.mubr.f32.gmra.mrb[0].mxu0 %v288
    %v682 = vpop.f32.mrb[0].mxu0
    %v683 = vadd.f32 0.0, %v682
    %v684 = vpop.f32.mrb[0].mxu0
    %685 = vmatprep.mubr.f32.mxu0 0.0
    %686 = vmatmul.mubr.f32.gmra.mrb[0].mxu0 %v291
    %v687 = vpop.f32.mrb[0].mxu0
    %v688 = vadd.f32 0.0, %v687
    %v689 = vpop.f32.mrb[0].mxu0
    %690 = vmatprep.mubr.f32.mxu0 0.0
    %691 = vmatmul.mubr.f32.gmra.mrb[0].mxu0 %v294
    %v692 = vpop.f32.mrb[0].mxu0
    %v693 = vadd.f32 0.0, %v692
    %v694 = vpop.f32.mrb[0].mxu0
    %695 = vmatprep.mubr.f32.mxu0 0.0
    %696 = vmatmul.mubr.f32.gmra.mrb[0].mxu0 %v297
    %v697 = vpop.f32.mrb[0].mxu0
    %v698 = vadd.f32 0.0, %v697
    %v699 = vpop.f32.mrb[0].mxu0
    %700 = vmatprep.mubr.f32.mxu0 0.0
    %701 = vmatmul.mubr.f32.gmra.mrb[0].mxu0 %v300
    %v702 = vpop.f32.mrb[0].mxu0
    %v703 = vadd.f32 0.0, %v702
    %v704 = vpop.f32.mrb[0].mxu0
    %705 = vmatprep.mubr.f32.mxu0 0.0
    %706 = vmatmul.mubr.f32.gmra.mrb[0].mxu0 %v303
    %v707 = vpop.f32.mrb[0].mxu0
    %v708 = vadd.f32 0.0, %v707
    %v709 = vpop.f32.mrb[0].mxu0
    %710 = vmatprep.mubr.f32.mxu0 0.0
    %711 = vmatmul.mubr.f32.gmra.mrb[0].mxu0 %v306
    %v712 = vpop.f32.mrb[0].mxu0
    %v713 = vadd.f32 0.0, %v712
    %v714 = vpop.f32.mrb[0].mxu0
    %715 = vmatprep.mubr.f32.mxu0 0.0
    %716 = vmatmul.mubr.f32.gmra.mrb[0].mxu0 %v309
    %v717 = vpop.f32.mrb[0].mxu0
    %v718 = vadd.f32 0.0, %v717
    %v719 = vpop.f32.mrb[0].mxu0
    %720 = vmatprep.mubr.f32.mxu0 0.0
    %721 = vmatmul.mubr.f32.gmra.mrb[0].mxu0 %v312
    %v722 = vpop.f32.mrb[0].mxu0
    %v723 = vadd.f32 0.0, %v722
    %v724 = vpop.f32.mrb[0].mxu0
    %725 = vmatprep.mubr.f32.mxu0 0.0
    %726 = vmatmul.mubr.f32.gmra.mrb[0].mxu0 %v315
    %v727 = vpop.f32.mrb[0].mxu0
    %v728 = vadd.f32 0.0, %v727
    %v729 = vpop.f32.mrb[0].mxu0
    %730 = vmatprep.mubr.f32.mxu0 0.0
    %731 = vmatmul.mubr.f32.gmra.mrb[0].mxu0 %v318
    %v732 = vpop.f32.mrb[0].mxu0
    %v733 = vadd.f32 0.0, %v732
    %v734 = vpop.f32.mrb[0].mxu0
    %735 = vmatprep.mubr.f32.mxu0 0.0
    %736 = vmatmul.mubr.f32.gmra.mrb[0].mxu0 %v321
    %v737 = vpop.f32.mrb[0].mxu0
    %v738 = vadd.f32 0.0, %v737
    %v739 = vpop.f32.mrb[0].mxu0
    %740 = vmatprep.mubr.f32.mxu0 0.0
    %741 = vmatmul.mubr.f32.gmra.mrb[0].mxu0 %v324
    %v742 = vpop.f32.mrb[0].mxu0
    %v743 = vadd.f32 0.0, %v742
    %v744 = vpop.f32.mrb[0].mxu0
    %745 = vmatprep.mubr.f32.mxu0 0.0
    %746 = vmatmul.mubr.f32.gmra.mrb[0].mxu0 %v327
    %v747 = vpop.f32.mrb[0].mxu0
    %v748 = vadd.f32 0.0, %v747
    %v749 = vpop.f32.mrb[0].mxu0
    %750 = vmatprep.mubr.f32.mxu0 0.0
    %751 = vmatmul.mubr.f32.gmra.mrb[0].mxu0 %v330
    %v752 = vpop.f32.mrb[0].mxu0
    %v753 = vadd.f32 0.0, %v752
    %v754 = vpop.f32.mrb[0].mxu0
    %755 = vmatprep.mubr.f32.mxu0 0.0
    %756 = vmatmul.mubr.f32.gmra.mrb[0].mxu0 %v333
    %v757 = vpop.f32.mrb[0].mxu0
    %v758 = vadd.f32 0.0, %v757
    %v759 = vpop.f32.mrb[0].mxu0
    %760 = vmatprep.mubr.f32.mxu0 0.0
    %761 = vmatmul.mubr.f32.gmra.mrb[0].mxu0 %v336
    %v762 = vpop.f32.mrb[0].mxu0
    %v763 = vadd.f32 0.0, %v762
    %v764 = vpop.f32.mrb[0].mxu0
    %765 = vmatprep.mubr.f32.mxu0 0.0
    %766 = vmatmul.mubr.f32.gmra.mrb[0].mxu0 %v339
    %v767 = vpop.f32.mrb[0].mxu0
    %v768 = vadd.f32 0.0, %v767
    %v769 = vpop.f32.mrb[0].mxu0
    %770 = vmatprep.mubr.f32.mxu0 0.0
    %771 = vmatmul.mubr.f32.gmra.mrb[0].mxu0 %v342
    %v772 = vpop.f32.mrb[0].mxu0
    %v773 = vadd.f32 0.0, %v772
    %v774 = vpop.f32.mrb[0].mxu0
    %775 = vmatprep.mubr.f32.mxu0 0.0
    %776 = vmatmul.mubr.f32.gmra.mrb[0].mxu0 %v345
    %v777 = vpop.f32.mrb[0].mxu0
    %v778 = vadd.f32 0.0, %v777
    %v779 = vpop.f32.mrb[0].mxu0
    %780 = vmatprep.mubr.f32.mxu0 0.0
    %781 = vmatmul.mubr.f32.gmra.mrb[0].mxu0 %v348
    %v782 = vpop.f32.mrb[0].mxu0
    %v783 = vadd.f32 0.0, %v782
    %v784 = vpop.f32.mrb[0].mxu0
    %785 = vmatprep.mubr.f32.mxu0 0.0
    %786 = vmatmul.mubr.f32.gmra.mrb[0].mxu0 %v351
    %v787 = vpop.f32.mrb[0].mxu0
    %v788 = vadd.f32 0.0, %v787
    %v789 = vpop.f32.mrb[0].mxu0
    %790 = vmatprep.mubr.f32.mxu0 0.0
    %791 = vmatmul.mubr.f32.gmra.mrb[0].mxu0 %v354
    %v792 = vpop.f32.mrb[0].mxu0
    %v793 = vadd.f32 0.0, %v792
    %v794 = vpop.f32.mrb[0].mxu0
    %795 = vmatprep.mubr.f32.mxu0 0.0
    %796 = vmatmul.mubr.f32.gmra.mrb[0].mxu0 %v357
    %v797 = vpop.f32.mrb[0].mxu0
    %v798 = vadd.f32 0.0, %v797
    %v799 = vpop.f32.mrb[0].mxu0
    %800 = vmatprep.mubr.f32.mxu0 0.0
    %801 = vmatmul.mubr.f32.gmra.mrb[0].mxu0 %v360
    %v802 = vpop.f32.mrb[0].mxu0
    %v803 = vadd.f32 0.0, %v802
    %v804 = vpop.f32.mrb[0].mxu0
    %805 = vmatprep.mubr.f32.mxu0 0.0
    %806 = vmatmul.mubr.f32.gmra.mrb[0].mxu0 %v363
    %v807 = vpop.f32.mrb[0].mxu0
    %v808 = vadd.f32 0.0, %v807
    %v809 = vpop.f32.mrb[0].mxu0
    %810 = vmatprep.mubr.f32.mxu0 0.0
    %811 = vmatmul.mubr.f32.gmra.mrb[0].mxu0 %v366
    %v812 = vpop.f32.mrb[0].mxu0
    %v813 = vadd.f32 0.0, %v812
    %v814 = vpop.f32.mrb[0].mxu0
    %815 = vmatprep.mubr.f32.mxu0 0.0
    %816 = vmatmul.mubr.f32.gmra.mrb[0].mxu0 %v369
    %v817 = vpop.f32.mrb[0].mxu0
    %v818 = vadd.f32 0.0, %v817
    %v819 = vpop.f32.mrb[0].mxu0
    %820 = vmatprep.mubr.f32.mxu0 0.0
    %821 = vmatmul.mubr.f32.gmra.mrb[0].mxu0 %v372
    %v822 = vpop.f32.mrb[0].mxu0
    %v823 = vadd.f32 0.0, %v822
    %v824 = vpop.f32.mrb[0].mxu0
    %825 = vmatprep.mubr.f32.mxu0 0.0
    %826 = vmatmul.mubr.f32.gmra.mrb[0].mxu0 %v375
    %v827 = vpop.f32.mrb[0].mxu0
    %v828 = vadd.f32 0.0, %v827
    %v829 = vpop.f32.mrb[0].mxu0
    %830 = vdwg.mxu0
    %v831 = vld [vmem:[%s2] sm:$0x1]
    %v832 = vld [vmem:[%s3] sm:$0x1]
    %vm833 = vcmask 64512
    %v834 = vsel %vm833, %v448, 0.0
    %v835 = vsel %vm833, %v453, 0.0
    %v836 = vadd.f32 %v834, %v835
    %v837 = vsel %vm833, %v458, 0.0
    %v838 = vadd.f32 %v836, %v837
    %v839 = vsel %vm833, %v463, 0.0
    %v840 = vadd.f32 %v838, %v839
    %v841 = vsel %vm833, %v468, 0.0
    %v842 = vadd.f32 %v840, %v841
    %v843 = vsel %vm833, %v473, 0.0
    %v844 = vadd.f32 %v842, %v843
    %v845 = vsel %vm833, %v478, 0.0
    %v846 = vadd.f32 %v844, %v845
    %v847 = vsel %vm833, %v483, 0.0
    %v848 = vadd.f32 %v846, %v847
    %v849 = vsel %vm833, %v488, 0.0
    %v850 = vadd.f32 %v848, %v849
    %v851 = vsel %vm833, %v493, 0.0
    %v852 = vadd.f32 %v850, %v851
    %v853 = vsel %vm833, %v498, 0.0
    %v854 = vadd.f32 %v852, %v853
    %v855 = vsel %vm833, %v503, 0.0
    %v856 = vadd.f32 %v854, %v855
    %v857 = vsel %vm833, %v508, 0.0
    %v858 = vadd.f32 %v856, %v857
    %v859 = vsel %vm833, %v513, 0.0
    %v860 = vadd.f32 %v858, %v859
    %v861 = vsel %vm833, %v518, 0.0
    %v862 = vadd.f32 %v860, %v861
    %v863 = vsel %vm833, %v523, 0.0
    %v864 = vadd.f32 %v862, %v863
    %v865 = vsel %vm833, %v528, 0.0
    %v866 = vadd.f32 %v864, %v865
    %v867 = vsel %vm833, %v533, 0.0
    %v868 = vadd.f32 %v866, %v867
    %v869 = vsel %vm833, %v538, 0.0
    %v870 = vadd.f32 %v868, %v869
    %v871 = vsel %vm833, %v543, 0.0
    %v872 = vadd.f32 %v870, %v871
    %v873 = vsel %vm833, %v548, 0.0
    %v874 = vadd.f32 %v872, %v873
    %v875 = vsel %vm833, %v553, 0.0
    %v876 = vadd.f32 %v874, %v875
    %v877 = vsel %vm833, %v558, 0.0
    %v878 = vadd.f32 %v876, %v877
    %v879 = vsel %vm833, %v563, 0.0
    %v880 = vadd.f32 %v878, %v879
    %v881 = vsel %vm833, %v568, 0.0
    %v882 = vadd.f32 %v880, %v881
    %v883 = vsel %vm833, %v573, 0.0
    %v884 = vadd.f32 %v882, %v883
    %v885 = vsel %vm833, %v578, 0.0
    %v886 = vadd.f32 %v884, %v885
    %v887 = vsel %vm833, %v583, 0.0
    %v888 = vadd.f32 %v886, %v887
    %v889 = vsel %vm833, %v588, 0.0
    %v890 = vadd.f32 %v888, %v889
    %v891 = vsel %vm833, %v593, 0.0
    %v892 = vadd.f32 %v890, %v891
    %v893 = vsel %vm833, %v598, 0.0
    %v894 = vadd.f32 %v892, %v893
    %v895 = vsel %vm833, %v603, 0.0
    %v896 = vadd.f32 %v894, %v895
    %v897 = vsel %vm833, %v608, 0.0
    %v898 = vadd.f32 %v896, %v897
    %v899 = vsel %vm833, %v613, 0.0
    %v900 = vadd.f32 %v898, %v899
    %v901 = vsel %vm833, %v618, 0.0
    %v902 = vadd.f32 %v900, %v901
    %v903 = vsel %vm833, %v623, 0.0
    %v904 = vadd.f32 %v902, %v903
    %v905 = vsel %vm833, %v628, 0.0
    %v906 = vadd.f32 %v904, %v905
    %v907 = vsel %vm833, %v633, 0.0
    %v908 = vadd.f32 %v906, %v907
    %v909 = vsel %vm833, %v638, 0.0
    %v910 = vadd.f32 %v908, %v909
    %v911 = vsel %vm833, %v643, 0.0
    %v912 = vadd.f32 %v910, %v911
    %v913 = vsel %vm833, %v648, 0.0
    %v914 = vadd.f32 %v912, %v913
    %v915 = vsel %vm833, %v653, 0.0
    %v916 = vadd.f32 %v914, %v915
    %v917 = vsel %vm833, %v658, 0.0
    %v918 = vadd.f32 %v916, %v917
    %v919 = vsel %vm833, %v663, 0.0
    %v920 = vadd.f32 %v918, %v919
    %v921 = vsel %vm833, %v668, 0.0
    %v922 = vadd.f32 %v920, %v921
    %v923 = vsel %vm833, %v673, 0.0
    %v924 = vadd.f32 %v922, %v923
    %v925 = vsel %vm833, %v678, 0.0
    %v926 = vadd.f32 %v924, %v925
    %v927 = vsel %vm833, %v683, 0.0
    %v928 = vadd.f32 %v926, %v927
    %v929 = vsel %vm833, %v688, 0.0
    %v930 = vadd.f32 %v928, %v929
    %v931 = vsel %vm833, %v693, 0.0
    %v932 = vadd.f32 %v930, %v931
    %v933 = vsel %vm833, %v698, 0.0
    %v934 = vadd.f32 %v932, %v933
    %v935 = vsel %vm833, %v703, 0.0
    %v936 = vadd.f32 %v934, %v935
    %v937 = vsel %vm833, %v708, 0.0
    %v938 = vadd.f32 %v936, %v937
    %v939 = vsel %vm833, %v713, 0.0
    %v940 = vadd.f32 %v938, %v939
    %v941 = vsel %vm833, %v718, 0.0
    %v942 = vadd.f32 %v940, %v941
    %v943 = vsel %vm833, %v723, 0.0
    %v944 = vadd.f32 %v942, %v943
    %v945 = vsel %vm833, %v728, 0.0
    %v946 = vadd.f32 %v944, %v945
    %v947 = vsel %vm833, %v733, 0.0
    %v948 = vadd.f32 %v946, %v947
    %v949 = vsel %vm833, %v738, 0.0
    %v950 = vadd.f32 %v948, %v949
    %v951 = vsel %vm833, %v743, 0.0
    %v952 = vadd.f32 %v950, %v951
    %v953 = vsel %vm833, %v748, 0.0
    %v954 = vadd.f32 %v952, %v953
    %v955 = vsel %vm833, %v753, 0.0
    %v956 = vadd.f32 %v954, %v955
    %v957 = vsel %vm833, %v758, 0.0
    %v958 = vadd.f32 %v956, %v957
    %v959 = vsel %vm833, %v763, 0.0
    %v960 = vadd.f32 %v958, %v959
    %v961 = vsel %vm833, %v768, 0.0
    %v962 = vadd.f32 %v960, %v961
    %v963 = vsel %vm833, %v773, 0.0
    %v964 = vadd.f32 %v962, %v963
    %v965 = vsel %vm833, %v778, 0.0
    %v966 = vadd.f32 %v964, %v965
    %v967 = vsel %vm833, %v783, 0.0
    %v968 = vadd.f32 %v966, %v967
    %v969 = vsel %vm833, %v788, 0.0
    %v970 = vadd.f32 %v968, %v969
    %v971 = vsel %vm833, %v793, 0.0
    %v972 = vadd.f32 %v970, %v971
    %v973 = vsel %vm833, %v798, 0.0
    %v974 = vadd.f32 %v972, %v973
    %v975 = vsel %vm833, %v803, 0.0
    %v976 = vadd.f32 %v974, %v975
    %v977 = vsel %vm833, %v808, 0.0
    %v978 = vadd.f32 %v976, %v977
    %v979 = vsel %vm833, %v813, 0.0
    %v980 = vadd.f32 %v978, %v979
    %v981 = vsel %vm833, %v818, 0.0
    %v982 = vadd.f32 %v980, %v981
    %v983 = vsel %vm833, %v823, 0.0
    %v984 = vadd.f32 %v982, %v983
    %v985 = vsel %vm833, %v828, 0.0
    %v986 = vadd.f32 %v984, %v985
    %v987 = vrot.slane %v986, 4
    %v988 = vadd.f32 %v986, %v987
    %v989 = vrot.slane %v988, 2
    %v990 = vadd.f32 %v988, %v989
    %v991 = vrot.slane %v990, 1
    %v992 = vadd.f32 %v990, %v991
    %v993 = vmul.f32 %v448, %v448
    %v994 = vmul.f32 %v453, %v453
    %v995 = vmul.f32 %v458, %v458
    %v996 = vmul.f32 %v463, %v463
    %v997 = vmul.f32 %v468, %v468
    %v998 = vmul.f32 %v473, %v473
    %v999 = vmul.f32 %v478, %v478
    %v1000 = vmul.f32 %v483, %v483
    %v1001 = vmul.f32 %v488, %v488
    %v1002 = vmul.f32 %v493, %v493
    %v1003 = vmul.f32 %v498, %v498
    %v1004 = vmul.f32 %v503, %v503
    %v1005 = vmul.f32 %v508, %v508
    %v1006 = vmul.f32 %v513, %v513
    %v1007 = vmul.f32 %v518, %v518
    %v1008 = vmul.f32 %v523, %v523
    %v1009 = vmul.f32 %v528, %v528
    %v1010 = vmul.f32 %v533, %v533
    %v1011 = vmul.f32 %v538, %v538
    %v1012 = vmul.f32 %v543, %v543
    %v1013 = vmul.f32 %v548, %v548
    %v1014 = vmul.f32 %v553, %v553
    %v1015 = vmul.f32 %v558, %v558
    %v1016 = vmul.f32 %v563, %v563
    %v1017 = vmul.f32 %v568, %v568
    %v1018 = vmul.f32 %v573, %v573
    %v1019 = vmul.f32 %v578, %v578
    %v1020 = vmul.f32 %v583, %v583
    %v1021 = vmul.f32 %v588, %v588
    %v1022 = vmul.f32 %v593, %v593
    %v1023 = vmul.f32 %v598, %v598
    %v1024 = vmul.f32 %v603, %v603
    %v1025 = vmul.f32 %v608, %v608
    %v1026 = vmul.f32 %v613, %v613
    %v1027 = vmul.f32 %v618, %v618
    %v1028 = vmul.f32 %v623, %v623
    %v1029 = vmul.f32 %v628, %v628
    %v1030 = vmul.f32 %v633, %v633
    %v1031 = vmul.f32 %v638, %v638
    %v1032 = vmul.f32 %v643, %v643
    %v1033 = vmul.f32 %v648, %v648
    %v1034 = vmul.f32 %v653, %v653
    %v1035 = vmul.f32 %v658, %v658
    %v1036 = vmul.f32 %v663, %v663
    %v1037 = vmul.f32 %v668, %v668
    %v1038 = vmul.f32 %v673, %v673
    %v1039 = vmul.f32 %v678, %v678
    %v1040 = vmul.f32 %v683, %v683
    %v1041 = vmul.f32 %v688, %v688
    %v1042 = vmul.f32 %v693, %v693
    %v1043 = vmul.f32 %v698, %v698
    %v1044 = vmul.f32 %v703, %v703
    %v1045 = vmul.f32 %v708, %v708
    %v1046 = vmul.f32 %v713, %v713
    %v1047 = vmul.f32 %v718, %v718
    %v1048 = vmul.f32 %v723, %v723
    %v1049 = vmul.f32 %v728, %v728
    %v1050 = vmul.f32 %v733, %v733
    %v1051 = vmul.f32 %v738, %v738
    %v1052 = vmul.f32 %v743, %v743
    %v1053 = vmul.f32 %v748, %v748
    %v1054 = vmul.f32 %v753, %v753
    %v1055 = vmul.f32 %v758, %v758
    %v1056 = vmul.f32 %v763, %v763
    %v1057 = vmul.f32 %v768, %v768
    %v1058 = vmul.f32 %v773, %v773
    %v1059 = vmul.f32 %v778, %v778
    %v1060 = vmul.f32 %v783, %v783
    %v1061 = vmul.f32 %v788, %v788
    %v1062 = vmul.f32 %v793, %v793
    %v1063 = vmul.f32 %v798, %v798
    %v1064 = vmul.f32 %v803, %v803
    %v1065 = vmul.f32 %v808, %v808
    %v1066 = vmul.f32 %v813, %v813
    %v1067 = vmul.f32 %v818, %v818
    %v1068 = vmul.f32 %v823, %v823
    %v1069 = vmul.f32 %v828, %v828
    %v1070 = vsel %vm833, %v993, 0.0
    %v1071 = vsel %vm833, %v994, 0.0
    %v1072 = vadd.f32 %v1070, %v1071
    %v1073 = vsel %vm833, %v995, 0.0
    %v1074 = vadd.f32 %v1072, %v1073
    %v1075 = vsel %vm833, %v996, 0.0
    %v1076 = vadd.f32 %v1074, %v1075
    %v1077 = vsel %vm833, %v997, 0.0
    %v1078 = vadd.f32 %v1076, %v1077
    %v1079 = vsel %vm833, %v998, 0.0
    %v1080 = vadd.f32 %v1078, %v1079
    %v1081 = vsel %vm833, %v999, 0.0
    %v1082 = vadd.f32 %v1080, %v1081
    %v1083 = vsel %vm833, %v1000, 0.0
    %v1084 = vadd.f32 %v1082, %v1083
    %v1085 = vsel %vm833, %v1001, 0.0
    %v1086 = vadd.f32 %v1084, %v1085
    %v1087 = vsel %vm833, %v1002, 0.0
    %v1088 = vadd.f32 %v1086, %v1087
    %v1089 = vsel %vm833, %v1003, 0.0
    %v1090 = vadd.f32 %v1088, %v1089
    %v1091 = vsel %vm833, %v1004, 0.0
    %v1092 = vadd.f32 %v1090, %v1091
    %v1093 = vsel %vm833, %v1005, 0.0
    %v1094 = vadd.f32 %v1092, %v1093
    %v1095 = vsel %vm833, %v1006, 0.0
    %v1096 = vadd.f32 %v1094, %v1095
    %v1097 = vsel %vm833, %v1007, 0.0
    %v1098 = vadd.f32 %v1096, %v1097
    %v1099 = vsel %vm833, %v1008, 0.0
    %v1100 = vadd.f32 %v1098, %v1099
    %v1101 = vsel %vm833, %v1009, 0.0
    %v1102 = vadd.f32 %v1100, %v1101
    %v1103 = vsel %vm833, %v1010, 0.0
    %v1104 = vadd.f32 %v1102, %v1103
    %v1105 = vsel %vm833, %v1011, 0.0
    %v1106 = vadd.f32 %v1104, %v1105
    %v1107 = vsel %vm833, %v1012, 0.0
    %v1108 = vadd.f32 %v1106, %v1107
    %v1109 = vsel %vm833, %v1013, 0.0
    %v1110 = vadd.f32 %v1108, %v1109
    %v1111 = vsel %vm833, %v1014, 0.0
    %v1112 = vadd.f32 %v1110, %v1111
    %v1113 = vsel %vm833, %v1015, 0.0
    %v1114 = vadd.f32 %v1112, %v1113
    %v1115 = vsel %vm833, %v1016, 0.0
    %v1116 = vadd.f32 %v1114, %v1115
    %v1117 = vsel %vm833, %v1017, 0.0
    %v1118 = vadd.f32 %v1116, %v1117
    %v1119 = vsel %vm833, %v1018, 0.0
    %v1120 = vadd.f32 %v1118, %v1119
    %v1121 = vsel %vm833, %v1019, 0.0
    %v1122 = vadd.f32 %v1120, %v1121
    %v1123 = vsel %vm833, %v1020, 0.0
    %v1124 = vadd.f32 %v1122, %v1123
    %v1125 = vsel %vm833, %v1021, 0.0
    %v1126 = vadd.f32 %v1124, %v1125
    %v1127 = vsel %vm833, %v1022, 0.0
    %v1128 = vadd.f32 %v1126, %v1127
    %v1129 = vsel %vm833, %v1023, 0.0
    %v1130 = vadd.f32 %v1128, %v1129
    %v1131 = vsel %vm833, %v1024, 0.0
    %v1132 = vadd.f32 %v1130, %v1131
    %v1133 = vsel %vm833, %v1025, 0.0
    %v1134 = vadd.f32 %v1132, %v1133
    %v1135 = vsel %vm833, %v1026, 0.0
    %v1136 = vadd.f32 %v1134, %v1135
    %v1137 = vsel %vm833, %v1027, 0.0
    %v1138 = vadd.f32 %v1136, %v1137
    %v1139 = vsel %vm833, %v1028, 0.0
    %v1140 = vadd.f32 %v1138, %v1139
    %v1141 = vsel %vm833, %v1029, 0.0
    %v1142 = vadd.f32 %v1140, %v1141
    %v1143 = vsel %vm833, %v1030, 0.0
    %v1144 = vadd.f32 %v1142, %v1143
    %v1145 = vsel %vm833, %v1031, 0.0
    %v1146 = vadd.f32 %v1144, %v1145
    %v1147 = vsel %vm833, %v1032, 0.0
    %v1148 = vadd.f32 %v1146, %v1147
    %v1149 = vsel %vm833, %v1033, 0.0
    %v1150 = vadd.f32 %v1148, %v1149
    %v1151 = vsel %vm833, %v1034, 0.0
    %v1152 = vadd.f32 %v1150, %v1151
    %v1153 = vsel %vm833, %v1035, 0.0
    %v1154 = vadd.f32 %v1152, %v1153
    %v1155 = vsel %vm833, %v1036, 0.0
    %v1156 = vadd.f32 %v1154, %v1155
    %v1157 = vsel %vm833, %v1037, 0.0
    %v1158 = vadd.f32 %v1156, %v1157
    %v1159 = vsel %vm833, %v1038, 0.0
    %v1160 = vadd.f32 %v1158, %v1159
    %v1161 = vsel %vm833, %v1039, 0.0
    %v1162 = vadd.f32 %v1160, %v1161
    %v1163 = vsel %vm833, %v1040, 0.0
    %v1164 = vadd.f32 %v1162, %v1163
    %v1165 = vsel %vm833, %v1041, 0.0
    %v1166 = vadd.f32 %v1164, %v1165
    %v1167 = vsel %vm833, %v1042, 0.0
    %v1168 = vadd.f32 %v1166, %v1167
    %v1169 = vsel %vm833, %v1043, 0.0
    %v1170 = vadd.f32 %v1168, %v1169
    %v1171 = vsel %vm833, %v1044, 0.0
    %v1172 = vadd.f32 %v1170, %v1171
    %v1173 = vsel %vm833, %v1045, 0.0
    %v1174 = vadd.f32 %v1172, %v1173
    %v1175 = vsel %vm833, %v1046, 0.0
    %v1176 = vadd.f32 %v1174, %v1175
    %v1177 = vsel %vm833, %v1047, 0.0
    %v1178 = vadd.f32 %v1176, %v1177
    %v1179 = vsel %vm833, %v1048, 0.0
    %v1180 = vadd.f32 %v1178, %v1179
    %v1181 = vsel %vm833, %v1049, 0.0
    %v1182 = vadd.f32 %v1180, %v1181
    %v1183 = vsel %vm833, %v1050, 0.0
    %v1184 = vadd.f32 %v1182, %v1183
    %v1185 = vsel %vm833, %v1051, 0.0
    %v1186 = vadd.f32 %v1184, %v1185
    %v1187 = vsel %vm833, %v1052, 0.0
    %v1188 = vadd.f32 %v1186, %v1187
    %v1189 = vsel %vm833, %v1053, 0.0
    %v1190 = vadd.f32 %v1188, %v1189
    %v1191 = vsel %vm833, %v1054, 0.0
    %v1192 = vadd.f32 %v1190, %v1191
    %v1193 = vsel %vm833, %v1055, 0.0
    %v1194 = vadd.f32 %v1192, %v1193
    %v1195 = vsel %vm833, %v1056, 0.0
    %v1196 = vadd.f32 %v1194, %v1195
    %v1197 = vsel %vm833, %v1057, 0.0
    %v1198 = vadd.f32 %v1196, %v1197
    %v1199 = vsel %vm833, %v1058, 0.0
    %v1200 = vadd.f32 %v1198, %v1199
    %v1201 = vsel %vm833, %v1059, 0.0
    %v1202 = vadd.f32 %v1200, %v1201
    %v1203 = vsel %vm833, %v1060, 0.0
    %v1204 = vadd.f32 %v1202, %v1203
    %v1205 = vsel %vm833, %v1061, 0.0
    %v1206 = vadd.f32 %v1204, %v1205
    %v1207 = vsel %vm833, %v1062, 0.0
    %v1208 = vadd.f32 %v1206, %v1207
    %v1209 = vsel %vm833, %v1063, 0.0
    %v1210 = vadd.f32 %v1208, %v1209
    %v1211 = vsel %vm833, %v1064, 0.0
    %v1212 = vadd.f32 %v1210, %v1211
    %v1213 = vsel %vm833, %v1065, 0.0
    %v1214 = vadd.f32 %v1212, %v1213
    %v1215 = vsel %vm833, %v1066, 0.0
    %v1216 = vadd.f32 %v1214, %v1215
    %v1217 = vsel %vm833, %v1067, 0.0
    %v1218 = vadd.f32 %v1216, %v1217
    %v1219 = vsel %vm833, %v1068, 0.0
    %v1220 = vadd.f32 %v1218, %v1219
    %v1221 = vsel %vm833, %v1069, 0.0
    %v1222 = vadd.f32 %v1220, %v1221
    %v1223 = vrot.slane %v1222, 4
    %v1224 = vadd.f32 %v1222, %v1223
    %v1225 = vrot.slane %v1224, 2
    %v1226 = vadd.f32 %v1224, %v1225
    %v1227 = vrot.slane %v1226, 1
    %v1228 = vadd.f32 %v1226, %v1227
    %v1229 = vmul.f32 %v992, 0.0016233766
    %v1230 = vmul.f32 %v1228, 0.0016233766
    %v1231 = vmul.f32 %v1229, %v1229
    %v1232 = vsub.f32 %v1230, %v1231
    %v1233 = vadd.f32 %v1232, 1e-05
    %v1234 = vrsqrt.pop %v1233
    %v1235 = vmul.f32 %v831, %v1234
    %v1236 = vmul.f32 %v1229, %v1235
    %v1237 = vsub.f32 %v832, %v1236
    %v1239 = vlaneseq
    %v1240 = vshrl.u32 %v1239, 7
    %v1241 = vsub.s32 0, %v1240
    %v1242 = vrot.slane %v1235, %v1241
    %v1244 = vmul.f32 %v448, %v1242
    %v1245 = vmul.f32 %v453, %v1242
    %v1246 = vmul.f32 %v458, %v1242
    %v1247 = vmul.f32 %v463, %v1242
    %v1248 = vmul.f32 %v468, %v1242
    %v1249 = vmul.f32 %v473, %v1242
    %v1250 = vmul.f32 %v478, %v1242
    %v1251 = vmul.f32 %v483, %v1242
    %v1252 = vmul.f32 %v488, %v1242
    %v1253 = vmul.f32 %v493, %v1242
    %v1254 = vmul.f32 %v498, %v1242
    %v1255 = vmul.f32 %v503, %v1242
    %v1256 = vmul.f32 %v508, %v1242
    %v1257 = vmul.f32 %v513, %v1242
    %v1258 = vmul.f32 %v518, %v1242
    %v1259 = vmul.f32 %v523, %v1242
    %v1260 = vmul.f32 %v528, %v1242
    %v1261 = vmul.f32 %v533, %v1242
    %v1262 = vmul.f32 %v538, %v1242
    %v1263 = vmul.f32 %v543, %v1242
    %v1264 = vmul.f32 %v548, %v1242
    %v1265 = vmul.f32 %v553, %v1242
    %v1266 = vmul.f32 %v558, %v1242
    %v1267 = vmul.f32 %v563, %v1242
    %v1268 = vmul.f32 %v568, %v1242
    %v1269 = vmul.f32 %v573, %v1242
    %v1270 = vmul.f32 %v578, %v1242
    %v1271 = vmul.f32 %v583, %v1242
    %v1272 = vmul.f32 %v588, %v1242
    %v1273 = vmul.f32 %v593, %v1242
    %v1274 = vmul.f32 %v598, %v1242
    %v1275 = vmul.f32 %v603, %v1242
    %v1276 = vmul.f32 %v608, %v1242
    %v1277 = vmul.f32 %v613, %v1242
    %v1278 = vmul.f32 %v618, %v1242
    %v1279 = vmul.f32 %v623, %v1242
    %v1280 = vmul.f32 %v628, %v1242
    %v1281 = vmul.f32 %v633, %v1242
    %v1282 = vmul.f32 %v638, %v1242
    %v1283 = vmul.f32 %v643, %v1242
    %v1284 = vmul.f32 %v648, %v1242
    %v1285 = vmul.f32 %v653, %v1242
    %v1286 = vmul.f32 %v658, %v1242
    %v1287 = vmul.f32 %v663, %v1242
    %v1288 = vmul.f32 %v668, %v1242
    %v1289 = vmul.f32 %v673, %v1242
    %v1290 = vmul.f32 %v678, %v1242
    %v1291 = vmul.f32 %v683, %v1242
    %v1292 = vmul.f32 %v688, %v1242
    %v1293 = vmul.f32 %v693, %v1242
    %v1294 = vmul.f32 %v698, %v1242
    %v1295 = vmul.f32 %v703, %v1242
    %v1296 = vmul.f32 %v708, %v1242
    %v1297 = vmul.f32 %v713, %v1242
    %v1298 = vmul.f32 %v718, %v1242
    %v1299 = vmul.f32 %v733, %v1242
    %v1300 = vmul.f32 %v738, %v1242
    %v1301 = vmul.f32 %v743, %v1242
    %v1302 = vmul.f32 %v748, %v1242
    %v1303 = vmul.f32 %v753, %v1242
    %v1304 = vmul.f32 %v758, %v1242
    %v1305 = vmul.f32 %v763, %v1242
    %v1306 = vmul.f32 %v768, %v1242
    %v1307 = vmul.f32 %v773, %v1242
    %v1308 = vmul.f32 %v778, %v1242
    %v1309 = vmul.f32 %v783, %v1242
    %v1310 = vmul.f32 %v788, %v1242
    %v1311 = vmul.f32 %v793, %v1242
    %v1312 = vmul.f32 %v798, %v1242
    %v1313 = vmul.f32 %v803, %v1242
    %v1314 = vmul.f32 %v808, %v1242
    %v1315 = vmul.f32 %v813, %v1242
    %v1317 = vlaneseq
    %v1318 = vshrl.u32 %v1317, 7
    %v1319 = vsub.s32 0, %v1318
    %v1320 = vrot.slane %v1237, %v1319
    %v1322 = vadd.f32 %v1244, %v1320
    %v1323 = vadd.f32 %v1245, %v1320
    %v1324 = vadd.f32 %v1246, %v1320
    %v1325 = vadd.f32 %v1247, %v1320
    %v1326 = vadd.f32 %v1248, %v1320
    %v1327 = vadd.f32 %v1249, %v1320
    %v1328 = vadd.f32 %v1250, %v1320
    %v1329 = vadd.f32 %v1251, %v1320
    %v1330 = vadd.f32 %v1252, %v1320
    %v1331 = vadd.f32 %v1253, %v1320
    %v1332 = vadd.f32 %v1254, %v1320
    %v1333 = vadd.f32 %v1255, %v1320
    %v1334 = vadd.f32 %v1256, %v1320
    %v1335 = vadd.f32 %v1257, %v1320
    %v1336 = vadd.f32 %v1258, %v1320
    %v1337 = vadd.f32 %v1259, %v1320
    %v1338 = vadd.f32 %v1260, %v1320
    %v1339 = vadd.f32 %v1261, %v1320
    %v1340 = vadd.f32 %v1262, %v1320
    %v1341 = vadd.f32 %v1263, %v1320
    %v1342 = vadd.f32 %v1264, %v1320
    %v1343 = vadd.f32 %v1265, %v1320
    %v1344 = vadd.f32 %v1266, %v1320
    %v1345 = vadd.f32 %v1267, %v1320
    %v1346 = vadd.f32 %v1268, %v1320
    %v1347 = vadd.f32 %v1269, %v1320
    %v1348 = vadd.f32 %v1270, %v1320
    %v1349 = vadd.f32 %v1271, %v1320
    %v1350 = vadd.f32 %v1272, %v1320
    %v1351 = vadd.f32 %v1273, %v1320
    %v1352 = vadd.f32 %v1274, %v1320
    %v1353 = vadd.f32 %v1275, %v1320
    %v1354 = vadd.f32 %v1276, %v1320
    %v1355 = vadd.f32 %v1277, %v1320
    %v1356 = vadd.f32 %v1278, %v1320
    %v1357 = vadd.f32 %v1279, %v1320
    %v1358 = vadd.f32 %v1280, %v1320
    %v1359 = vadd.f32 %v1281, %v1320
    %v1360 = vadd.f32 %v1282, %v1320
    %v1361 = vadd.f32 %v1283, %v1320
    %v1362 = vadd.f32 %v1284, %v1320
    %v1363 = vadd.f32 %v1285, %v1320
    %v1364 = vadd.f32 %v1286, %v1320
    %v1365 = vadd.f32 %v1287, %v1320
    %v1366 = vadd.f32 %v1288, %v1320
    %v1367 = vadd.f32 %v1289, %v1320
    %v1368 = vadd.f32 %v1290, %v1320
    %v1369 = vadd.f32 %v1291, %v1320
    %v1370 = vadd.f32 %v1292, %v1320
    %v1371 = vadd.f32 %v1293, %v1320
    %v1372 = vadd.f32 %v1294, %v1320
    %v1373 = vadd.f32 %v1295, %v1320
    %v1374 = vadd.f32 %v1296, %v1320
    %v1375 = vadd.f32 %v1297, %v1320
    %v1376 = vadd.f32 %v1298, %v1320
    %v1377 = vadd.f32 %v1299, %v1320
    %v1378 = vadd.f32 %v1300, %v1320
    %v1379 = vadd.f32 %v1301, %v1320
    %v1380 = vadd.f32 %v1302, %v1320
    %v1381 = vadd.f32 %v1303, %v1320
    %v1382 = vadd.f32 %v1304, %v1320
    %v1383 = vadd.f32 %v1305, %v1320
    %v1384 = vadd.f32 %v1306, %v1320
    %v1385 = vadd.f32 %v1307, %v1320
    %v1386 = vadd.f32 %v1308, %v1320
    %v1387 = vadd.f32 %v1309, %v1320
    %v1388 = vadd.f32 %v1310, %v1320
    %v1389 = vadd.f32 %v1311, %v1320
    %v1390 = vadd.f32 %v1312, %v1320
    %v1391 = vadd.f32 %v1313, %v1320
    %v1392 = vadd.f32 %v1314, %v1320
    %v1393 = vadd.f32 %v1315, %v1320
    %v1394 = vmax.f32 %v1322, 0.0
    %v1395 = vmax.f32 %v1323, 0.0
    %v1396 = vmax.f32 %v1324, 0.0
    %v1397 = vmax.f32 %v1325, 0.0
    %v1398 = vmax.f32 %v1326, 0.0
    %v1399 = vmax.f32 %v1327, 0.0
    %v1400 = vmax.f32 %v1328, 0.0
    %v1401 = vmax.f32 %v1329, 0.0
    %v1402 = vmax.f32 %v1330, 0.0
    %v1403 = vmax.f32 %v1331, 0.0
    %v1404 = vmax.f32 %v1332, 0.0
    %v1405 = vmax.f32 %v1333, 0.0
    %v1406 = vmax.f32 %v1334, 0.0
    %v1407 = vmax.f32 %v1335, 0.0
    %v1408 = vmax.f32 %v1336, 0.0
    %v1409 = vmax.f32 %v1337, 0.0
    %v1410 = vmax.f32 %v1338, 0.0
    %v1411 = vmax.f32 %v1339, 0.0
    %v1412 = vmax.f32 %v1340, 0.0
    %v1413 = vmax.f32 %v1341, 0.0
    %v1414 = vmax.f32 %v1342, 0.0
    %v1415 = vmax.f32 %v1343, 0.0
    %v1416 = vmax.f32 %v1344, 0.0
    %v1417 = vmax.f32 %v1345, 0.0
    %v1418 = vmax.f32 %v1346, 0.0
    %v1419 = vmax.f32 %v1347, 0.0
    %v1420 = vmax.f32 %v1348, 0.0
    %v1421 = vmax.f32 %v1349, 0.0
    %v1422 = vmax.f32 %v1350, 0.0
    %v1423 = vmax.f32 %v1351, 0.0
    %v1424 = vmax.f32 %v1352, 0.0
    %v1425 = vmax.f32 %v1353, 0.0
    %v1426 = vmax.f32 %v1354, 0.0
    %v1427 = vmax.f32 %v1355, 0.0
    %v1428 = vmax.f32 %v1356, 0.0
    %v1429 = vmax.f32 %v1357, 0.0
    %v1430 = vmax.f32 %v1358, 0.0
    %v1431 = vmax.f32 %v1359, 0.0
    %v1432 = vmax.f32 %v1360, 0.0
    %v1433 = vmax.f32 %v1361, 0.0
    %v1434 = vmax.f32 %v1362, 0.0
    %v1435 = vmax.f32 %v1363, 0.0
    %v1436 = vmax.f32 %v1364, 0.0
    %v1437 = vmax.f32 %v1365, 0.0
    %v1438 = vmax.f32 %v1366, 0.0
    %v1439 = vmax.f32 %v1367, 0.0
    %v1440 = vmax.f32 %v1368, 0.0
    %v1441 = vmax.f32 %v1369, 0.0
    %v1442 = vmax.f32 %v1370, 0.0
    %v1443 = vmax.f32 %v1371, 0.0
    %v1444 = vmax.f32 %v1372, 0.0
    %v1445 = vmax.f32 %v1373, 0.0
    %v1446 = vmax.f32 %v1374, 0.0
    %v1447 = vmax.f32 %v1375, 0.0
    %v1448 = vmax.f32 %v1376, 0.0
    %v1449 = vmax.f32 %v1377, 0.0
    %v1450 = vmax.f32 %v1378, 0.0
    %v1451 = vmax.f32 %v1379, 0.0
    %v1452 = vmax.f32 %v1380, 0.0
    %v1453 = vmax.f32 %v1381, 0.0
    %v1454 = vmax.f32 %v1382, 0.0
    %v1455 = vmax.f32 %v1383, 0.0
    %v1456 = vmax.f32 %v1384, 0.0
    %v1457 = vmax.f32 %v1385, 0.0
    %v1458 = vmax.f32 %v1386, 0.0
    %v1459 = vmax.f32 %v1387, 0.0
    %v1460 = vmax.f32 %v1388, 0.0
    %v1461 = vmax.f32 %v1389, 0.0
    %v1462 = vmax.f32 %v1390, 0.0
    %v1463 = vmax.f32 %v1391, 0.0
    %v1464 = vmax.f32 %v1392, 0.0
    %v1465 = vmax.f32 %v1393, 0.0
    %v1466 = vld [vmem:[%s7] sm:$0xff]
    %v1467 = vld [vmem:[%s7 + $0x8] sm:$0xff]
    %v1468 = vld [vmem:[%s7 + $0x10] sm:$0xff]
    %v1469 = vld [vmem:[%s7 + $0x18] sm:$0xff]
    %v1470 = vld [vmem:[%s7 + $0x20] sm:$0xff]
    %v1471 = vld [vmem:[%s7 + $0x28] sm:$0xff]
    %v1472 = vld [vmem:[%s7 + $0x30] sm:$0xff]
    %v1473 = vld [vmem:[%s7 + $0x38] sm:$0xff]
    %v1474 = vld [vmem:[%s7 + $0x40] sm:$0xff]
    %v1475 = vld [vmem:[%s7 + $0x48] sm:$0xff]
    %v1476 = vld [vmem:[%s7 + $0x50] sm:$0xff]
    %v1477 = vld [vmem:[%s7 + $0x58] sm:$0xff]
    %v1478 = vld [vmem:[%s7 + $0x60] sm:$0xff]
    %v1479 = vld [vmem:[%s7 + $0x68] sm:$0xff]
    %v1480 = vld [vmem:[%s7 + $0x70] sm:$0xff]
    %v1481 = vld [vmem:[%s7 + $0x78] sm:$0xff]
    %v1482 = vld [vmem:[%s7 + $0x80] sm:$0x3]
    %vm1500 = vcmask 1045504
    %v1501 = vrot.slane %v1413, 2
    %v1502 = vrot.slane %v1414, 2
    %v1503 = vsel %vm1500, %v1501, %v1502
    %v1504 = vrot.slane %v1415, 2
    %v1505 = vsel %vm1500, %v1502, %v1504
    %v1506 = vrot.slane %v1416, 2
    %v1507 = vsel %vm1500, %v1504, %v1506
    %v1508 = vrot.slane %v1417, 2
    %v1509 = vsel %vm1500, %v1506, %v1508
    %v1510 = vrot.slane %v1418, 2
    %v1511 = vsel %vm1500, %v1508, %v1510
    %v1512 = vrot.slane %v1419, 2
    %v1513 = vsel %vm1500, %v1510, %v1512
    %v1514 = vrot.slane %v1420, 2
    %v1515 = vsel %vm1500, %v1512, %v1514
    %v1516 = vrot.slane %v1421, 2
    %v1517 = vsel %vm1500, %v1514, %v1516
    %v1518 = vrot.slane %v1422, 2
    %v1519 = vsel %vm1500, %v1516, %v1518
    %v1520 = vrot.slane %v1423, 2
    %v1521 = vsel %vm1500, %v1518, %v1520
    %v1522 = vrot.slane %v1424, 2
    %v1523 = vsel %vm1500, %v1520, %v1522
    %v1524 = vrot.slane %v1425, 2
    %v1525 = vsel %vm1500, %v1522, %v1524
    %v1526 = vrot.slane %v1426, 2
    %v1527 = vsel %vm1500, %v1524, %v1526
    %v1528 = vrot.slane %v1427, 2
    %v1529 = vsel %vm1500, %v1526, %v1528
    %v1530 = vrot.slane %v1428, 2
    %v1531 = vsel %vm1500, %v1528, %v1530
    %v1532 = vrot.slane %v1429, 2
    %v1533 = vsel %vm1500, %v1530, %v1532
    %1534 = vrot.lane.b32.xlu0 %v1503, 8
    %v1535 = vpop.permute.xlu0 %1534
    %1536 = vrot.lane.b32.xlu0 %v1505, 8
    %v1537 = vpop.permute.xlu0 %1536
    %1538 = vrot.lane.b32.xlu0 %v1507, 8
    %v1539 = vpop.permute.xlu0 %1538
    %1540 = vrot.lane.b32.xlu0 %v1509, 8
    %v1541 = vpop.permute.xlu0 %1540
    %1542 = vrot.lane.b32.xlu0 %v1511, 8
    %v1543 = vpop.permute.xlu0 %1542
    %1544 = vrot.lane.b32.xlu0 %v1513, 8
    %v1545 = vpop.permute.xlu0 %1544
    %1546 = vrot.lane.b32.xlu0 %v1515, 8
    %v1547 = vpop.permute.xlu0 %1546
    %1548 = vrot.lane.b32.xlu0 %v1517, 8
    %v1549 = vpop.permute.xlu0 %1548
    %1550 = vrot.lane.b32.xlu0 %v1519, 8
    %v1551 = vpop.permute.xlu0 %1550
    %1552 = vrot.lane.b32.xlu0 %v1521, 8
    %v1553 = vpop.permute.xlu0 %1552
    %1554 = vrot.lane.b32.xlu0 %v1523, 8
    %v1555 = vpop.permute.xlu0 %1554
    %1556 = vrot.lane.b32.xlu0 %v1525, 8
    %v1557 = vpop.permute.xlu0 %1556
    %1558 = vrot.lane.b32.xlu0 %v1527, 8
    %v1559 = vpop.permute.xlu0 %1558
    %1560 = vrot.lane.b32.xlu0 %v1529, 8
    %v1561 = vpop.permute.xlu0 %1560
    %1562 = vrot.lane.b32.xlu0 %v1531, 8
    %v1563 = vpop.permute.xlu0 %1562
    %1564 = vrot.lane.b32.xlu0 %v1533, 8
    %v1565 = vpop.permute.xlu0 %1564
    %1566 = vrot.lane.b32.xlu0 %v1532, 8
    %v1567 = vpop.permute.xlu0 %1566
    %v1602 = vrot.slane %v1394, 2
    %v1603 = vrot.slane %v1395, 2
    %v1604 = vsel %vm1500, %v1602, %v1603
    %v1605 = vrot.slane %v1396, 2
    %v1606 = vsel %vm1500, %v1603, %v1605
    %v1607 = vrot.slane %v1397, 2
    %v1608 = vsel %vm1500, %v1605, %v1607
    %v1609 = vrot.slane %v1398, 2
    %v1610 = vsel %vm1500, %v1607, %v1609
    %v1611 = vrot.slane %v1399, 2
    %v1612 = vsel %vm1500, %v1609, %v1611
    %v1613 = vrot.slane %v1400, 2
    %v1614 = vsel %vm1500, %v1611, %v1613
    %v1615 = vrot.slane %v1401, 2
    %v1616 = vsel %vm1500, %v1613, %v1615
    %v1617 = vrot.slane %v1402, 2
    %v1618 = vsel %vm1500, %v1615, %v1617
    %v1619 = vrot.slane %v1403, 2
    %v1620 = vsel %vm1500, %v1617, %v1619
    %v1621 = vrot.slane %v1404, 2
    %v1622 = vsel %vm1500, %v1619, %v1621
    %v1623 = vrot.slane %v1405, 2
    %v1624 = vsel %vm1500, %v1621, %v1623
    %v1625 = vrot.slane %v1406, 2
    %v1626 = vsel %vm1500, %v1623, %v1625
    %v1627 = vrot.slane %v1407, 2
    %v1628 = vsel %vm1500, %v1625, %v1627
    %v1629 = vrot.slane %v1408, 2
    %v1630 = vsel %vm1500, %v1627, %v1629
    %v1631 = vrot.slane %v1409, 2
    %v1632 = vsel %vm1500, %v1629, %v1631
    %v1633 = vrot.slane %v1410, 2
    %v1634 = vsel %vm1500, %v1631, %v1633
    %1635 = vrot.lane.b32.xlu0 %v1604, 16
    %v1636 = vpop.permute.xlu0 %1635
    %1637 = vrot.lane.b32.xlu0 %v1606, 16
    %v1638 = vpop.permute.xlu0 %1637
    %1639 = vrot.lane.b32.xlu0 %v1608, 16
    %v1640 = vpop.permute.xlu0 %1639
    %1641 = vrot.lane.b32.xlu0 %v1610, 16
    %v1642 = vpop.permute.xlu0 %1641
    %1643 = vrot.lane.b32.xlu0 %v1612, 16
    %v1644 = vpop.permute.xlu0 %1643
    %1645 = vrot.lane.b32.xlu0 %v1614, 16
    %v1646 = vpop.permute.xlu0 %1645
    %1647 = vrot.lane.b32.xlu0 %v1616, 16
    %v1648 = vpop.permute.xlu0 %1647
    %1649 = vrot.lane.b32.xlu0 %v1618, 16
    %v1650 = vpop.permute.xlu0 %1649
    %1651 = vrot.lane.b32.xlu0 %v1620, 16
    %v1652 = vpop.permute.xlu0 %1651
    %1653 = vrot.lane.b32.xlu0 %v1622, 16
    %v1654 = vpop.permute.xlu0 %1653
    %1655 = vrot.lane.b32.xlu0 %v1624, 16
    %v1656 = vpop.permute.xlu0 %1655
    %1657 = vrot.lane.b32.xlu0 %v1626, 16
    %v1658 = vpop.permute.xlu0 %1657
    %1659 = vrot.lane.b32.xlu0 %v1628, 16
    %v1660 = vpop.permute.xlu0 %1659
    %1661 = vrot.lane.b32.xlu0 %v1630, 16
    %v1662 = vpop.permute.xlu0 %1661
    %1663 = vrot.lane.b32.xlu0 %v1632, 16
    %v1664 = vpop.permute.xlu0 %1663
    %1665 = vrot.lane.b32.xlu0 %v1634, 16
    %v1666 = vpop.permute.xlu0 %1665
    %1667 = vrot.lane.b32.xlu0 %v1633, 16
    %v1668 = vpop.permute.xlu0 %1667
    %vm1703 = vcmask 1043456
    %v1704 = vrot.slane %v1432, 4
    %v1705 = vrot.slane %v1433, 4
    %v1706 = vsel %vm1703, %v1704, %v1705
    %v1707 = vrot.slane %v1434, 4
    %v1708 = vsel %vm1703, %v1705, %v1707
    %v1709 = vrot.slane %v1435, 4
    %v1710 = vsel %vm1703, %v1707, %v1709
    %v1711 = vrot.slane %v1436, 4
    %v1712 = vsel %vm1703, %v1709, %v1711
    %v1713 = vrot.slane %v1437, 4
    %v1714 = vsel %vm1703, %v1711, %v1713
    %v1715 = vrot.slane %v1438, 4
    %v1716 = vsel %vm1703, %v1713, %v1715
    %v1717 = vrot.slane %v1439, 4
    %v1718 = vsel %vm1703, %v1715, %v1717
    %v1719 = vrot.slane %v1440, 4
    %v1720 = vsel %vm1703, %v1717, %v1719
    %v1721 = vrot.slane %v1441, 4
    %v1722 = vsel %vm1703, %v1719, %v1721
    %v1723 = vrot.slane %v1442, 4
    %v1724 = vsel %vm1703, %v1721, %v1723
    %v1725 = vrot.slane %v1443, 4
    %v1726 = vsel %vm1703, %v1723, %v1725
    %v1727 = vrot.slane %v1444, 4
    %v1728 = vsel %vm1703, %v1725, %v1727
    %v1729 = vrot.slane %v1445, 4
    %v1730 = vsel %vm1703, %v1727, %v1729
    %v1731 = vrot.slane %v1446, 4
    %v1732 = vsel %vm1703, %v1729, %v1731
    %v1733 = vrot.slane %v1447, 4
    %v1734 = vsel %vm1703, %v1731, %v1733
    %v1735 = vrot.slane %v1448, 4
    %v1736 = vsel %vm1703, %v1733, %v1735
    %1737 = vrot.lane.b32.xlu0 %v1706, 24
    %v1738 = vpop.permute.xlu0 %1737
    %1739 = vrot.lane.b32.xlu0 %v1708, 24
    %v1740 = vpop.permute.xlu0 %1739
    %1741 = vrot.lane.b32.xlu0 %v1710, 24
    %v1742 = vpop.permute.xlu0 %1741
    %1743 = vrot.lane.b32.xlu0 %v1712, 24
    %v1744 = vpop.permute.xlu0 %1743
    %1745 = vrot.lane.b32.xlu0 %v1714, 24
    %v1746 = vpop.permute.xlu0 %1745
    %1747 = vrot.lane.b32.xlu0 %v1716, 24
    %v1748 = vpop.permute.xlu0 %1747
    %1749 = vrot.lane.b32.xlu0 %v1718, 24
    %v1750 = vpop.permute.xlu0 %1749
    %1751 = vrot.lane.b32.xlu0 %v1720, 24
    %v1752 = vpop.permute.xlu0 %1751
    %1753 = vrot.lane.b32.xlu0 %v1722, 24
    %v1754 = vpop.permute.xlu0 %1753
    %1755 = vrot.lane.b32.xlu0 %v1724, 24
    %v1756 = vpop.permute.xlu0 %1755
    %1757 = vrot.lane.b32.xlu0 %v1726, 24
    %v1758 = vpop.permute.xlu0 %1757
    %1759 = vrot.lane.b32.xlu0 %v1728, 24
    %v1760 = vpop.permute.xlu0 %1759
    %1761 = vrot.lane.b32.xlu0 %v1730, 24
    %v1762 = vpop.permute.xlu0 %1761
    %1763 = vrot.lane.b32.xlu0 %v1732, 24
    %v1764 = vpop.permute.xlu0 %1763
    %1765 = vrot.lane.b32.xlu0 %v1734, 24
    %v1766 = vpop.permute.xlu0 %1765
    %1767 = vrot.lane.b32.xlu0 %v1736, 24
    %v1768 = vpop.permute.xlu0 %1767
    %1769 = vrot.lane.b32.xlu0 %v1735, 24
    %v1770 = vpop.permute.xlu0 %1769
    %vm1805 = vcmask 1041408
    %v1806 = vrot.slane %v1449, 6
    %v1807 = vrot.slane %v1450, 6
    %v1808 = vsel %vm1805, %v1806, %v1807
    %v1809 = vrot.slane %v1451, 6
    %v1810 = vsel %vm1805, %v1807, %v1809
    %v1811 = vrot.slane %v1452, 6
    %v1812 = vsel %vm1805, %v1809, %v1811
    %v1813 = vrot.slane %v1453, 6
    %v1814 = vsel %vm1805, %v1811, %v1813
    %v1815 = vrot.slane %v1454, 6
    %v1816 = vsel %vm1805, %v1813, %v1815
    %v1817 = vrot.slane %v1455, 6
    %v1818 = vsel %vm1805, %v1815, %v1817
    %v1819 = vrot.slane %v1456, 6
    %v1820 = vsel %vm1805, %v1817, %v1819
    %v1821 = vrot.slane %v1457, 6
    %v1822 = vsel %vm1805, %v1819, %v1821
    %v1823 = vrot.slane %v1458, 6
    %v1824 = vsel %vm1805, %v1821, %v1823
    %v1825 = vrot.slane %v1459, 6
    %v1826 = vsel %vm1805, %v1823, %v1825
    %v1827 = vrot.slane %v1460, 6
    %v1828 = vsel %vm1805, %v1825, %v1827
    %v1829 = vrot.slane %v1461, 6
    %v1830 = vsel %vm1805, %v1827, %v1829
    %v1831 = vrot.slane %v1462, 6
    %v1832 = vsel %vm1805, %v1829, %v1831
    %v1833 = vrot.slane %v1463, 6
    %v1834 = vsel %vm1805, %v1831, %v1833
    %v1835 = vrot.slane %v1464, 6
    %v1836 = vsel %vm1805, %v1833, %v1835
    %v1837 = vrot.slane %v1465, 6
    %v1838 = vsel %vm1805, %v1835, %v1837
    %1839 = vrot.lane.b32.xlu0 %v1808, 32
    %v1840 = vpop.permute.xlu0 %1839
    %1841 = vrot.lane.b32.xlu0 %v1810, 32
    %v1842 = vpop.permute.xlu0 %1841
    %1843 = vrot.lane.b32.xlu0 %v1812, 32
    %v1844 = vpop.permute.xlu0 %1843
    %1845 = vrot.lane.b32.xlu0 %v1814, 32
    %v1846 = vpop.permute.xlu0 %1845
    %1847 = vrot.lane.b32.xlu0 %v1816, 32
    %v1848 = vpop.permute.xlu0 %1847
    %1849 = vrot.lane.b32.xlu0 %v1818, 32
    %v1850 = vpop.permute.xlu0 %1849
    %1851 = vrot.lane.b32.xlu0 %v1820, 32
    %v1852 = vpop.permute.xlu0 %1851
    %1853 = vrot.lane.b32.xlu0 %v1822, 32
    %v1854 = vpop.permute.xlu0 %1853
    %1855 = vrot.lane.b32.xlu0 %v1824, 32
    %v1856 = vpop.permute.xlu0 %1855
    %1857 = vrot.lane.b32.xlu0 %v1826, 32
    %v1858 = vpop.permute.xlu0 %1857
    %1859 = vrot.lane.b32.xlu0 %v1828, 32
    %v1860 = vpop.permute.xlu0 %1859
    %1861 = vrot.lane.b32.xlu0 %v1830, 32
    %v1862 = vpop.permute.xlu0 %1861
    %1863 = vrot.lane.b32.xlu0 %v1832, 32
    %v1864 = vpop.permute.xlu0 %1863
    %1865 = vrot.lane.b32.xlu0 %v1834, 32
    %v1866 = vpop.permute.xlu0 %1865
    %1867 = vrot.lane.b32.xlu0 %v1836, 32
    %v1868 = vpop.permute.xlu0 %1867
    %1869 = vrot.lane.b32.xlu0 %v1838, 32
    %v1870 = vpop.permute.xlu0 %1869
    %1871 = vrot.lane.b32.xlu0 %v1837, 32
    %v1872 = vpop.permute.xlu0 %1871
    %v1890 = vrot.slane %v1432, 6
    %v1891 = vrot.slane %v1433, 6
    %v1892 = vsel %vm1805, %v1890, %v1891
    %v1893 = vrot.slane %v1434, 6
    %v1894 = vsel %vm1805, %v1891, %v1893
    %v1895 = vrot.slane %v1435, 6
    %v1896 = vsel %vm1805, %v1893, %v1895
    %v1897 = vrot.slane %v1436, 6
    %v1898 = vsel %vm1805, %v1895, %v1897
    %v1899 = vrot.slane %v1437, 6
    %v1900 = vsel %vm1805, %v1897, %v1899
    %v1901 = vrot.slane %v1438, 6
    %v1902 = vsel %vm1805, %v1899, %v1901
    %v1903 = vrot.slane %v1439, 6
    %v1904 = vsel %vm1805, %v1901, %v1903
    %v1905 = vrot.slane %v1440, 6
    %v1906 = vsel %vm1805, %v1903, %v1905
    %v1907 = vrot.slane %v1441, 6
    %v1908 = vsel %vm1805, %v1905, %v1907
    %v1909 = vrot.slane %v1442, 6
    %v1910 = vsel %vm1805, %v1907, %v1909
    %v1911 = vrot.slane %v1443, 6
    %v1912 = vsel %vm1805, %v1909, %v1911
    %v1913 = vrot.slane %v1444, 6
    %v1914 = vsel %vm1805, %v1911, %v1913
    %v1915 = vrot.slane %v1445, 6
    %v1916 = vsel %vm1805, %v1913, %v1915
    %v1917 = vrot.slane %v1446, 6
    %v1918 = vsel %vm1805, %v1915, %v1917
    %v1919 = vrot.slane %v1447, 6
    %v1920 = vsel %vm1805, %v1917, %v1919
    %v1921 = vrot.slane %v1448, 6
    %v1922 = vsel %vm1805, %v1919, %v1921
    %1923 = vrot.lane.b32.xlu0 %v1892, 40
    %v1924 = vpop.permute.xlu0 %1923
    %1925 = vrot.lane.b32.xlu0 %v1894, 40
    %v1926 = vpop.permute.xlu0 %1925
    %1927 = vrot.lane.b32.xlu0 %v1896, 40
    %v1928 = vpop.permute.xlu0 %1927
    %1929 = vrot.lane.b32.xlu0 %v1898, 40
    %v1930 = vpop.permute.xlu0 %1929
    %1931 = vrot.lane.b32.xlu0 %v1900, 40
    %v1932 = vpop.permute.xlu0 %1931
    %1933 = vrot.lane.b32.xlu0 %v1902, 40
    %v1934 = vpop.permute.xlu0 %1933
    %1935 = vrot.lane.b32.xlu0 %v1904, 40
    %v1936 = vpop.permute.xlu0 %1935
    %1937 = vrot.lane.b32.xlu0 %v1906, 40
    %v1938 = vpop.permute.xlu0 %1937
    %1939 = vrot.lane.b32.xlu0 %v1908, 40
    %v1940 = vpop.permute.xlu0 %1939
    %1941 = vrot.lane.b32.xlu0 %v1910, 40
    %v1942 = vpop.permute.xlu0 %1941
    %1943 = vrot.lane.b32.xlu0 %v1912, 40
    %v1944 = vpop.permute.xlu0 %1943
    %1945 = vrot.lane.b32.xlu0 %v1914, 40
    %v1946 = vpop.permute.xlu0 %1945
    %1947 = vrot.lane.b32.xlu0 %v1916, 40
    %v1948 = vpop.permute.xlu0 %1947
    %1949 = vrot.lane.b32.xlu0 %v1918, 40
    %v1950 = vpop.permute.xlu0 %1949
    %1951 = vrot.lane.b32.xlu0 %v1920, 40
    %v1952 = vpop.permute.xlu0 %1951
    %1953 = vrot.lane.b32.xlu0 %v1922, 40
    %v1954 = vpop.permute.xlu0 %1953
    %1955 = vrot.lane.b32.xlu0 %v1921, 40
    %v1956 = vpop.permute.xlu0 %1955
    %v1976 = vrot.slane %v1396, 6
    %v1977 = vrot.slane %v1397, 6
    %v1978 = vsel %vm1805, %v1976, %v1977
    %v1979 = vrot.slane %v1398, 6
    %v1980 = vsel %vm1805, %v1977, %v1979
    %v1981 = vrot.slane %v1399, 6
    %v1982 = vsel %vm1805, %v1979, %v1981
    %v1983 = vrot.slane %v1400, 6
    %v1984 = vsel %vm1805, %v1981, %v1983
    %v1985 = vrot.slane %v1401, 6
    %v1986 = vsel %vm1805, %v1983, %v1985
    %v1987 = vrot.slane %v1402, 6
    %v1988 = vsel %vm1805, %v1985, %v1987
    %v1989 = vrot.slane %v1403, 6
    %v1990 = vsel %vm1805, %v1987, %v1989
    %v1991 = vrot.slane %v1404, 6
    %v1992 = vsel %vm1805, %v1989, %v1991
    %v1993 = vrot.slane %v1405, 6
    %v1994 = vsel %vm1805, %v1991, %v1993
    %v1995 = vrot.slane %v1406, 6
    %v1996 = vsel %vm1805, %v1993, %v1995
    %v1997 = vrot.slane %v1407, 6
    %v1998 = vsel %vm1805, %v1995, %v1997
    %v1999 = vrot.slane %v1408, 6
    %v2000 = vsel %vm1805, %v1997, %v1999
    %v2001 = vrot.slane %v1409, 6
    %v2002 = vsel %vm1805, %v1999, %v2001
    %v2003 = vrot.slane %v1410, 6
    %v2004 = vsel %vm1805, %v2001, %v2003
    %v2005 = vrot.slane %v1411, 6
    %v2006 = vsel %vm1805, %v2003, %v2005
    %v2007 = vrot.slane %v1412, 6
    %v2008 = vsel %vm1805, %v2005, %v2007
    %2009 = vrot.lane.b32.xlu0 %v1978, 48
    %v2010 = vpop.permute.xlu0 %2009
    %2011 = vrot.lane.b32.xlu0 %v1980, 48
    %v2012 = vpop.permute.xlu0 %2011
    %2013 = vrot.lane.b32.xlu0 %v1982, 48
    %v2014 = vpop.permute.xlu0 %2013
    %2015 = vrot.lane.b32.xlu0 %v1984, 48
    %v2016 = vpop.permute.xlu0 %2015
    %2017 = vrot.lane.b32.xlu0 %v1986, 48
    %v2018 = vpop.permute.xlu0 %2017
    %2019 = vrot.lane.b32.xlu0 %v1988, 48
    %v2020 = vpop.permute.xlu0 %2019
    %2021 = vrot.lane.b32.xlu0 %v1990, 48
    %v2022 = vpop.permute.xlu0 %2021
    %2023 = vrot.lane.b32.xlu0 %v1992, 48
    %v2024 = vpop.permute.xlu0 %2023
    %2025 = vrot.lane.b32.xlu0 %v1994, 48
    %v2026 = vpop.permute.xlu0 %2025
    %2027 = vrot.lane.b32.xlu0 %v1996, 48
    %v2028 = vpop.permute.xlu0 %2027
    %2029 = vrot.lane.b32.xlu0 %v1998, 48
    %v2030 = vpop.permute.xlu0 %2029
    %2031 = vrot.lane.b32.xlu0 %v2000, 48
    %v2032 = vpop.permute.xlu0 %2031
    %2033 = vrot.lane.b32.xlu0 %v2002, 48
    %v2034 = vpop.permute.xlu0 %2033
    %2035 = vrot.lane.b32.xlu0 %v2004, 48
    %v2036 = vpop.permute.xlu0 %2035
    %2037 = vrot.lane.b32.xlu0 %v2006, 48
    %v2038 = vpop.permute.xlu0 %2037
    %2039 = vrot.lane.b32.xlu0 %v2008, 48
    %v2040 = vpop.permute.xlu0 %2039
    %2041 = vrot.lane.b32.xlu0 %v2007, 48
    %v2042 = vpop.permute.xlu0 %2041
    %2062 = vrot.lane.b32.xlu0 %v1416, 56
    %v2063 = vpop.permute.xlu0 %2062
    %2064 = vrot.lane.b32.xlu0 %v1417, 56
    %v2065 = vpop.permute.xlu0 %2064
    %2066 = vrot.lane.b32.xlu0 %v1418, 56
    %v2067 = vpop.permute.xlu0 %2066
    %2068 = vrot.lane.b32.xlu0 %v1419, 56
    %v2069 = vpop.permute.xlu0 %2068
    %2070 = vrot.lane.b32.xlu0 %v1420, 56
    %v2071 = vpop.permute.xlu0 %2070
    %2072 = vrot.lane.b32.xlu0 %v1421, 56
    %v2073 = vpop.permute.xlu0 %2072
    %2074 = vrot.lane.b32.xlu0 %v1422, 56
    %v2075 = vpop.permute.xlu0 %2074
    %2076 = vrot.lane.b32.xlu0 %v1423, 56
    %v2077 = vpop.permute.xlu0 %2076
    %2078 = vrot.lane.b32.xlu0 %v1424, 56
    %v2079 = vpop.permute.xlu0 %2078
    %2080 = vrot.lane.b32.xlu0 %v1425, 56
    %v2081 = vpop.permute.xlu0 %2080
    %2082 = vrot.lane.b32.xlu0 %v1426, 56
    %v2083 = vpop.permute.xlu0 %2082
    %2084 = vrot.lane.b32.xlu0 %v1427, 56
    %v2085 = vpop.permute.xlu0 %2084
    %2086 = vrot.lane.b32.xlu0 %v1428, 56
    %v2087 = vpop.permute.xlu0 %2086
    %2088 = vrot.lane.b32.xlu0 %v1429, 56
    %v2089 = vpop.permute.xlu0 %2088
    %2090 = vrot.lane.b32.xlu0 %v1430, 56
    %v2091 = vpop.permute.xlu0 %2090
    %2092 = vrot.lane.b32.xlu0 %v1431, 56
    %v2093 = vpop.permute.xlu0 %2092
    %2094 = vrot.lane.b32.xlu0 %v1432, 56
    %v2095 = vpop.permute.xlu0 %2094
    %2113 = vrot.lane.b32.xlu0 %v1397, 64
    %v2114 = vpop.permute.xlu0 %2113
    %2115 = vrot.lane.b32.xlu0 %v1398, 64
    %v2116 = vpop.permute.xlu0 %2115
    %2117 = vrot.lane.b32.xlu0 %v1399, 64
    %v2118 = vpop.permute.xlu0 %2117
    %2119 = vrot.lane.b32.xlu0 %v1400, 64
    %v2120 = vpop.permute.xlu0 %2119
    %2121 = vrot.lane.b32.xlu0 %v1401, 64
    %v2122 = vpop.permute.xlu0 %2121
    %2123 = vrot.lane.b32.xlu0 %v1402, 64
    %v2124 = vpop.permute.xlu0 %2123
    %2125 = vrot.lane.b32.xlu0 %v1403, 64
    %v2126 = vpop.permute.xlu0 %2125
    %2127 = vrot.lane.b32.xlu0 %v1404, 64
    %v2128 = vpop.permute.xlu0 %2127
    %2129 = vrot.lane.b32.xlu0 %v1405, 64
    %v2130 = vpop.permute.xlu0 %2129
    %2131 = vrot.lane.b32.xlu0 %v1406, 64
    %v2132 = vpop.permute.xlu0 %2131
    %2133 = vrot.lane.b32.xlu0 %v1407, 64
    %v2134 = vpop.permute.xlu0 %2133
    %2135 = vrot.lane.b32.xlu0 %v1408, 64
    %v2136 = vpop.permute.xlu0 %2135
    %2137 = vrot.lane.b32.xlu0 %v1409, 64
    %v2138 = vpop.permute.xlu0 %2137
    %2139 = vrot.lane.b32.xlu0 %v1410, 64
    %v2140 = vpop.permute.xlu0 %2139
    %2141 = vrot.lane.b32.xlu0 %v1411, 64
    %v2142 = vpop.permute.xlu0 %2141
    %2143 = vrot.lane.b32.xlu0 %v1412, 64
    %v2144 = vpop.permute.xlu0 %2143
    %2145 = vrot.lane.b32.xlu0 %v1413, 64
    %v2146 = vpop.permute.xlu0 %2145
    %v2164 = vsel %vm833, %v1394, %v1535
    %v2165 = vsel %vm833, %v1395, %v1537
    %v2166 = vsel %vm833, %v1396, %v1539
    %v2167 = vsel %vm833, %v1397, %v1541
    %v2168 = vsel %vm833, %v1398, %v1543
    %v2169 = vsel %vm833, %v1399, %v1545
    %v2170 = vsel %vm833, %v1400, %v1547
    %v2171 = vsel %vm833, %v1401, %v1549
    %v2172 = vsel %vm833, %v1402, %v1551
    %v2173 = vsel %vm833, %v1403, %v1553
    %v2174 = vsel %vm833, %v1404, %v1555
    %v2175 = vsel %vm833, %v1405, %v1557
    %v2176 = vsel %vm833, %v1406, %v1559
    %v2177 = vsel %vm833, %v1407, %v1561
    %v2178 = vsel %vm833, %v1408, %v1563
    %v2179 = vsel %vm833, %v1409, %v1565
    %v2180 = vsel %vm833, %v1410, %v1567
    %vm2181 = vcmask 130048
    %v2182 = vsel %vm2181, %v2164, %v1636
    %v2183 = vsel %vm2181, %v2165, %v1638
    %v2184 = vsel %vm2181, %v2166, %v1640
    %v2185 = vsel %vm2181, %v2167, %v1642
    %v2186 = vsel %vm2181, %v2168, %v1644
    %v2187 = vsel %vm2181, %v2169, %v1646
    %v2188 = vsel %vm2181, %v2170, %v1648
    %v2189 = vsel %vm2181, %v2171, %v1650
    %v2190 = vsel %vm2181, %v2172, %v1652
    %v2191 = vsel %vm2181, %v2173, %v1654
    %v2192 = vsel %vm2181, %v2174, %v1656
    %v2193 = vsel %vm2181, %v2175, %v1658
    %v2194 = vsel %vm2181, %v2176, %v1660
    %v2195 = vsel %vm2181, %v2177, %v1662
    %v2196 = vsel %vm2181, %v2178, %v1664
    %v2197 = vsel %vm2181, %v2179, %v1666
    %v2198 = vsel %vm2181, %v2180, %v1668
    %vm2199 = vcmask 195584
    %v2200 = vsel %vm2199, %v2182, %v1738
    %v2201 = vsel %vm2199, %v2183, %v1740
    %v2202 = vsel %vm2199, %v2184, %v1742
    %v2203 = vsel %vm2199, %v2185, %v1744
    %v2204 = vsel %vm2199, %v2186, %v1746
    %v2205 = vsel %vm2199, %v2187, %v1748
    %v2206 = vsel %vm2199, %v2188, %v1750
    %v2207 = vsel %vm2199, %v2189, %v1752
    %v2208 = vsel %vm2199, %v2190, %v1754
    %v2209 = vsel %vm2199, %v2191, %v1756
    %v2210 = vsel %vm2199, %v2192, %v1758
    %v2211 = vsel %vm2199, %v2193, %v1760
    %v2212 = vsel %vm2199, %v2194, %v1762
    %v2213 = vsel %vm2199, %v2195, %v1764
    %v2214 = vsel %vm2199, %v2196, %v1766
    %v2215 = vsel %vm2199, %v2197, %v1768
    %v2216 = vsel %vm2199, %v2198, %v1770
    %vm2217 = vcmask 261120
    %v2218 = vsel %vm2217, %v2200, %v1840
    %v2219 = vsel %vm2217, %v2201, %v1842
    %v2220 = vsel %vm2217, %v2202, %v1844
    %v2221 = vsel %vm2217, %v2203, %v1846
    %v2222 = vsel %vm2217, %v2204, %v1848
    %v2223 = vsel %vm2217, %v2205, %v1850
    %v2224 = vsel %vm2217, %v2206, %v1852
    %v2225 = vsel %vm2217, %v2207, %v1854
    %v2226 = vsel %vm2217, %v2208, %v1856
    %v2227 = vsel %vm2217, %v2209, %v1858
    %v2228 = vsel %vm2217, %v2210, %v1860
    %v2229 = vsel %vm2217, %v2211, %v1862
    %v2230 = vsel %vm2217, %v2212, %v1864
    %v2231 = vsel %vm2217, %v2213, %v1866
    %v2232 = vsel %vm2217, %v2214, %v1868
    %v2233 = vsel %vm2217, %v2215, %v1870
    %v2234 = vsel %vm2217, %v2216, %v1872
    %vm2235 = vcmask 326656
    %v2236 = vsel %vm2235, %v2218, %v1924
    %v2237 = vsel %vm2235, %v2219, %v1926
    %v2238 = vsel %vm2235, %v2220, %v1928
    %v2239 = vsel %vm2235, %v2221, %v1930
    %v2240 = vsel %vm2235, %v2222, %v1932
    %v2241 = vsel %vm2235, %v2223, %v1934
    %v2242 = vsel %vm2235, %v2224, %v1936
    %v2243 = vsel %vm2235, %v2225, %v1938
    %v2244 = vsel %vm2235, %v2226, %v1940
    %v2245 = vsel %vm2235, %v2227, %v1942
    %v2246 = vsel %vm2235, %v2228, %v1944
    %v2247 = vsel %vm2235, %v2229, %v1946
    %v2248 = vsel %vm2235, %v2230, %v1948
    %v2249 = vsel %vm2235, %v2231, %v1950
    %v2250 = vsel %vm2235, %v2232, %v1952
    %v2251 = vsel %vm2235, %v2233, %v1954
    %v2252 = vsel %vm2235, %v2234, %v1956
    %vm2253 = vcmask 392192
    %v2254 = vsel %vm2253, %v2236, %v2010
    %v2255 = vsel %vm2253, %v2237, %v2012
    %v2256 = vsel %vm2253, %v2238, %v2014
    %v2257 = vsel %vm2253, %v2239, %v2016
    %v2258 = vsel %vm2253, %v2240, %v2018
    %v2259 = vsel %vm2253, %v2241, %v2020
    %v2260 = vsel %vm2253, %v2242, %v2022
    %v2261 = vsel %vm2253, %v2243, %v2024
    %v2262 = vsel %vm2253, %v2244, %v2026
    %v2263 = vsel %vm2253, %v2245, %v2028
    %v2264 = vsel %vm2253, %v2246, %v2030
    %v2265 = vsel %vm2253, %v2247, %v2032
    %v2266 = vsel %vm2253, %v2248, %v2034
    %v2267 = vsel %vm2253, %v2249, %v2036
    %v2268 = vsel %vm2253, %v2250, %v2038
    %v2269 = vsel %vm2253, %v2251, %v2040
    %v2270 = vsel %vm2253, %v2252, %v2042
    %vm2271 = vcmask 457728
    %v2272 = vsel %vm2271, %v2254, %v2063
    %v2273 = vsel %vm2271, %v2255, %v2065
    %v2274 = vsel %vm2271, %v2256, %v2067
    %v2275 = vsel %vm2271, %v2257, %v2069
    %v2276 = vsel %vm2271, %v2258, %v2071
    %v2277 = vsel %vm2271, %v2259, %v2073
    %v2278 = vsel %vm2271, %v2260, %v2075
    %v2279 = vsel %vm2271, %v2261, %v2077
    %v2280 = vsel %vm2271, %v2262, %v2079
    %v2281 = vsel %vm2271, %v2263, %v2081
    %v2282 = vsel %vm2271, %v2264, %v2083
    %v2283 = vsel %vm2271, %v2265, %v2085
    %v2284 = vsel %vm2271, %v2266, %v2087
    %v2285 = vsel %vm2271, %v2267, %v2089
    %v2286 = vsel %vm2271, %v2268, %v2091
    %v2287 = vsel %vm2271, %v2269, %v2093
    %v2288 = vsel %vm2271, %v2270, %v2095
    %vm2289 = vcmask 523264
    %v2290 = vsel %vm2289, %v2272, %v2114
    %v2291 = vsel %vm2289, %v2273, %v2116
    %v2292 = vsel %vm2289, %v2274, %v2118
    %v2293 = vsel %vm2289, %v2275, %v2120
    %v2294 = vsel %vm2289, %v2276, %v2122
    %v2295 = vsel %vm2289, %v2277, %v2124
    %v2296 = vsel %vm2289, %v2278, %v2126
    %v2297 = vsel %vm2289, %v2279, %v2128
    %v2298 = vsel %vm2289, %v2280, %v2130
    %v2299 = vsel %vm2289, %v2281, %v2132
    %v2300 = vsel %vm2289, %v2282, %v2134
    %v2301 = vsel %vm2289, %v2283, %v2136
    %v2302 = vsel %vm2289, %v2284, %v2138
    %v2303 = vsel %vm2289, %v2285, %v2140
    %v2304 = vsel %vm2289, %v2286, %v2142
    %v2305 = vsel %vm2289, %v2287, %v2144
    %v2306 = vsel %vm2289, %v2288, %v2146
    %v2307 = vld [vmem:[%s4] sm:$0xff]
    %v2308 = vld [vmem:[%s4 + $0x8] sm:$0xff]
    %v2309 = vld [vmem:[%s4 + $0x10] sm:$0xff]
    %v2310 = vld [vmem:[%s4 + $0x18] sm:$0xff]
    %v2311 = vld [vmem:[%s4 + $0x20] sm:$0xff]
    %v2312 = vld [vmem:[%s4 + $0x28] sm:$0xff]
    %v2313 = vld [vmem:[%s4 + $0x30] sm:$0xff]
    %v2314 = vld [vmem:[%s4 + $0x38] sm:$0xff]
    %v2315 = vld [vmem:[%s4 + $0x40] sm:$0xff]
    %vm2316 = vcmask 588800
    %v2318 = vsel %vm2316, %v2290, 0
    %v2321 = vsel %vm2316, %v2291, 0
    %v2324 = vsel %vm2316, %v2292, 0
    %v2327 = vsel %vm2316, %v2293, 0
    %v2330 = vsel %vm2316, %v2294, 0
    %v2333 = vsel %vm2316, %v2295, 0
    %v2336 = vsel %vm2316, %v2296, 0
    %v2339 = vsel %vm2316, %v2297, 0
    %v2342 = vsel %vm2316, %v2298, 0
    %v2345 = vsel %vm2316, %v2299, 0
    %v2348 = vsel %vm2316, %v2300, 0
    %v2351 = vsel %vm2316, %v2301, 0
    %v2354 = vsel %vm2316, %v2302, 0
    %v2357 = vsel %vm2316, %v2303, 0
    %v2360 = vsel %vm2316, %v2304, 0
    %v2363 = vsel %vm2316, %v2305, 0
    %v2366 = vsel %vm2316, %v2306, 0
    %2368 = vmatprep.subr.mxu0 0.0
    %2369 = vmatpush1.msra.mxu0 %v2307
    %2370 = vmatprep.subr.mxu0 0.0
    %2371 = vmatpush1.msra.mxu0 %v2308
    %2372 = vmatprep.subr.mxu0 0.0
    %2373 = vmatpush1.msra.mxu0 %v2309
    %2374 = vmatprep.subr.mxu0 0.0
    %2375 = vmatpush1.msra.mxu0 %v2310
    %2376 = vmatprep.subr.mxu0 0.0
    %2377 = vmatpush1.msra.mxu0 %v2311
    %2378 = vmatprep.subr.mxu0 0.0
    %2379 = vmatpush1.msra.mxu0 %v2312
    %2380 = vmatprep.subr.mxu0 0.0
    %2381 = vmatpush1.msra.mxu0 %v2313
    %2382 = vmatprep.subr.mxu0 0.0
    %2383 = vmatpush1.msra.mxu0 %v2314
    %2384 = vmatprep.subr.mxu0 0.0
    %2385 = vmatpush1.msra.mxu0 %v2315
    %2386 = vmatprep.subr.mxu0 0.0
    %2387 = vmatpush1.msra.mxu0 0.0
    %2388 = vmatprep.subr.mxu0 0.0
    %2389 = vmatpush1.msra.mxu0 0.0
    %2390 = vmatprep.subr.mxu0 0.0
    %2391 = vmatpush1.msra.mxu0 0.0
    %2392 = vmatprep.subr.mxu0 0.0
    %2393 = vmatpush1.msra.mxu0 0.0
    %2394 = vmatprep.subr.mxu0 0.0
    %2395 = vmatpush1.msra.mxu0 0.0
    %2396 = vmatprep.subr.mxu0 0.0
    %2397 = vmatpush1.msra.mxu0 0.0
    %2398 = vmatprep.subr.mxu0 0.0
    %2399 = vmatpush1.msra.mxu0 0.0
    %2400 = vmatprep.subr.mxu0 0.0
    %2401 = vmatpush1.msra.mxu0 0.0
    %2402 = vmatprep.subr.mxu0 0.0
    %2403 = vmatpush1.msra.mxu0 0.0
    %2404 = vmatprep.subr.mxu0 0.0
    %2405 = vmatpush1.msra.mxu0 0.0
    %2406 = vmatprep.subr.mxu0 0.0
    %2407 = vmatpush1.msra.mxu0 0.0
    %2408 = vmatprep.subr.mxu0 0.0
    %2409 = vmatpush1.msra.mxu0 0.0
    %2410 = vmatprep.subr.mxu0 0.0
    %2411 = vmatpush1.msra.mxu0 0.0
    %2412 = vmatprep.subr.mxu0 0.0
    %2413 = vmatpush1.msra.mxu0 0.0
    %2414 = vmatprep.subr.mxu0 0.0
    %2415 = vmatpush1.msra.mxu0 0.0
    %2416 = vmatprep.subr.mxu0 0.0
    %2417 = vmatpush1.msra.mxu0 0.0
    %2418 = vmatprep.subr.mxu0 0.0
    %2419 = vmatpush1.msra.mxu0 0.0
    %2420 = vmatprep.subr.mxu0 0.0
    %2421 = vmatpush1.msra.mxu0 0.0
    %2422 = vmatprep.subr.mxu0 0.0
    %2423 = vmatpush1.msra.mxu0 0.0
    %2424 = vmatprep.subr.mxu0 0.0
    %2425 = vmatpush1.msra.mxu0 0.0
    %2426 = vmatprep.subr.mxu0 0.0
    %2427 = vmatpush1.msra.mxu0 0.0
    %2428 = vmatprep.subr.mxu0 0.0
    %2429 = vmatpush1.msra.mxu0 0.0
    %2430 = vmatprep.subr.mxu0 0.0
    %2431 = vmatpush1.msra.mxu0 0.0
    %2432 = vmatprep.mubr.f32.mxu0 0.0
    %2433 = vmatmul.mubr.f32.gmra.mrb[0].mxu0 %v2318
    %v2434 = vpop.f32.mrb[0].mxu0
    %v2435 = vadd.f32 0.0, %v2434
    %v2436 = vpop.f32.mrb[0].mxu0
    %2437 = vmatprep.mubr.f32.mxu0 0.0
    %2438 = vmatmul.mubr.f32.gmra.mrb[0].mxu0 %v2321
    %v2439 = vpop.f32.mrb[0].mxu0
    %v2440 = vadd.f32 0.0, %v2439
    %v2441 = vpop.f32.mrb[0].mxu0
    %2442 = vmatprep.mubr.f32.mxu0 0.0
    %2443 = vmatmul.mubr.f32.gmra.mrb[0].mxu0 %v2324
    %v2444 = vpop.f32.mrb[0].mxu0
    %v2445 = vadd.f32 0.0, %v2444
    %v2446 = vpop.f32.mrb[0].mxu0
    %2447 = vmatprep.mubr.f32.mxu0 0.0
    %2448 = vmatmul.mubr.f32.gmra.mrb[0].mxu0 %v2327
    %v2449 = vpop.f32.mrb[0].mxu0
    %v2450 = vadd.f32 0.0, %v2449
    %v2451 = vpop.f32.mrb[0].mxu0
    %2452 = vmatprep.mubr.f32.mxu0 0.0
    %2453 = vmatmul.mubr.f32.gmra.mrb[0].mxu0 %v2330
    %v2454 = vpop.f32.mrb[0].mxu0
    %v2455 = vadd.f32 0.0, %v2454
    %v2456 = vpop.f32.mrb[0].mxu0
    %2457 = vmatprep.mubr.f32.mxu0 0.0
    %2458 = vmatmul.mubr.f32.gmra.mrb[0].mxu0 %v2333
    %v2459 = vpop.f32.mrb[0].mxu0
    %v2460 = vadd.f32 0.0, %v2459
    %v2461 = vpop.f32.mrb[0].mxu0
    %2462 = vmatprep.mubr.f32.mxu0 0.0
    %2463 = vmatmul.mubr.f32.gmra.mrb[0].mxu0 %v2336
    %v2464 = vpop.f32.mrb[0].mxu0
    %v2465 = vadd.f32 0.0, %v2464
    %v2466 = vpop.f32.mrb[0].mxu0
    %2467 = vmatprep.mubr.f32.mxu0 0.0
    %2468 = vmatmul.mubr.f32.gmra.mrb[0].mxu0 %v2339
    %v2469 = vpop.f32.mrb[0].mxu0
    %v2470 = vadd.f32 0.0, %v2469
    %v2471 = vpop.f32.mrb[0].mxu0
    %2472 = vmatprep.mubr.f32.mxu0 0.0
    %2473 = vmatmul.mubr.f32.gmra.mrb[0].mxu0 %v2342
    %v2474 = vpop.f32.mrb[0].mxu0
    %v2475 = vadd.f32 0.0, %v2474
    %v2476 = vpop.f32.mrb[0].mxu0
    %2477 = vmatprep.mubr.f32.mxu0 0.0
    %2478 = vmatmul.mubr.f32.gmra.mrb[0].mxu0 %v2345
    %v2479 = vpop.f32.mrb[0].mxu0
    %v2480 = vadd.f32 0.0, %v2479
    %v2481 = vpop.f32.mrb[0].mxu0
    %2482 = vmatprep.mubr.f32.mxu0 0.0
    %2483 = vmatmul.mubr.f32.gmra.mrb[0].mxu0 %v2348
    %v2484 = vpop.f32.mrb[0].mxu0
    %v2485 = vadd.f32 0.0, %v2484
    %v2486 = vpop.f32.mrb[0].mxu0
    %2487 = vmatprep.mubr.f32.mxu0 0.0
    %2488 = vmatmul.mubr.f32.gmra.mrb[0].mxu0 %v2351
    %v2489 = vpop.f32.mrb[0].mxu0
    %v2490 = vadd.f32 0.0, %v2489
    %v2491 = vpop.f32.mrb[0].mxu0
    %2492 = vmatprep.mubr.f32.mxu0 0.0
    %2493 = vmatmul.mubr.f32.gmra.mrb[0].mxu0 %v2354
    %v2494 = vpop.f32.mrb[0].mxu0
    %v2495 = vadd.f32 0.0, %v2494
    %v2496 = vpop.f32.mrb[0].mxu0
    %2497 = vmatprep.mubr.f32.mxu0 0.0
    %2498 = vmatmul.mubr.f32.gmra.mrb[0].mxu0 %v2357
    %v2499 = vpop.f32.mrb[0].mxu0
    %v2500 = vadd.f32 0.0, %v2499
    %v2501 = vpop.f32.mrb[0].mxu0
    %2502 = vmatprep.mubr.f32.mxu0 0.0
    %2503 = vmatmul.mubr.f32.gmra.mrb[0].mxu0 %v2360
    %v2504 = vpop.f32.mrb[0].mxu0
    %v2505 = vadd.f32 0.0, %v2504
    %v2506 = vpop.f32.mrb[0].mxu0
    %2507 = vmatprep.mubr.f32.mxu0 0.0
    %2508 = vmatmul.mubr.f32.gmra.mrb[0].mxu0 %v2363
    %v2509 = vpop.f32.mrb[0].mxu0
    %v2510 = vadd.f32 0.0, %v2509
    %v2511 = vpop.f32.mrb[0].mxu0
    %2512 = vmatprep.mubr.f32.mxu0 0.0
    %2513 = vmatmul.mubr.f32.gmra.mrb[0].mxu0 %v2366
    %v2514 = vpop.f32.mrb[0].mxu0
    %v2515 = vadd.f32 0.0, %v2514
    %v2516 = vpop.f32.mrb[0].mxu0
    %2517 = vdwg.mxu0
    %v2518 = vld [vmem:[%s5] sm:$0x1]
    %v2519 = vld [vmem:[%s6] sm:$0x1]
    %2521 = vset.pattern.permute.xlu0 0
    %2522 = vperm.xlu0 %2521, %v1466
    %v2523 = vpop.permute.xlu0 %2522
    %2526 = vset.pattern.permute.xlu0 0
    %2527 = vperm.xlu0 %2526, %v1467
    %v2528 = vpop.permute.xlu0 %2527
    %2531 = vset.pattern.permute.xlu0 0
    %2532 = vperm.xlu0 %2531, %v1468
    %v2533 = vpop.permute.xlu0 %2532
    %2536 = vset.pattern.permute.xlu0 0
    %2537 = vperm.xlu0 %2536, %v1469
    %v2538 = vpop.permute.xlu0 %2537
    %2541 = vset.pattern.permute.xlu0 0
    %2542 = vperm.xlu0 %2541, %v1470
    %v2543 = vpop.permute.xlu0 %2542
    %2546 = vset.pattern.permute.xlu0 0
    %2547 = vperm.xlu0 %2546, %v1471
    %v2548 = vpop.permute.xlu0 %2547
    %2551 = vset.pattern.permute.xlu0 0
    %2552 = vperm.xlu0 %2551, %v1472
    %v2553 = vpop.permute.xlu0 %2552
    %2556 = vset.pattern.permute.xlu0 0
    %2557 = vperm.xlu0 %2556, %v1473
    %v2558 = vpop.permute.xlu0 %2557
    %2561 = vset.pattern.permute.xlu0 0
    %2562 = vperm.xlu0 %2561, %v1474
    %v2563 = vpop.permute.xlu0 %2562
    %2566 = vset.pattern.permute.xlu0 0
    %2567 = vperm.xlu0 %2566, %v1475
    %v2568 = vpop.permute.xlu0 %2567
    %2571 = vset.pattern.permute.xlu0 0
    %2572 = vperm.xlu0 %2571, %v1476
    %v2573 = vpop.permute.xlu0 %2572
    %2576 = vset.pattern.permute.xlu0 0
    %2577 = vperm.xlu0 %2576, %v1477
    %v2578 = vpop.permute.xlu0 %2577
    %2581 = vset.pattern.permute.xlu0 0
    %2582 = vperm.xlu0 %2581, %v1478
    %v2583 = vpop.permute.xlu0 %2582
    %2586 = vset.pattern.permute.xlu0 0
    %2587 = vperm.xlu0 %2586, %v1479
    %v2588 = vpop.permute.xlu0 %2587
    %2591 = vset.pattern.permute.xlu0 0
    %2592 = vperm.xlu0 %2591, %v1480
    %v2593 = vpop.permute.xlu0 %2592
    %2596 = vset.pattern.permute.xlu0 0
    %2597 = vperm.xlu0 %2596, %v1481
    %v2598 = vpop.permute.xlu0 %2597
    %2601 = vset.pattern.permute.xlu0 0
    %2602 = vperm.xlu0 %2601, %v1482
    %v2603 = vpop.permute.xlu0 %2602
    %v2605 = vmul.f32 %v2435, %v2523
    %v2606 = vmul.f32 %v2440, %v2528
    %v2607 = vmul.f32 %v2445, %v2533
    %v2608 = vmul.f32 %v2450, %v2538
    %v2609 = vmul.f32 %v2455, %v2543
    %v2610 = vmul.f32 %v2460, %v2548
    %v2611 = vmul.f32 %v2465, %v2553
    %v2612 = vmul.f32 %v2470, %v2558
    %v2613 = vmul.f32 %v2475, %v2563
    %v2614 = vmul.f32 %v2480, %v2568
    %v2615 = vmul.f32 %v2485, %v2573
    %v2616 = vmul.f32 %v2490, %v2578
    %v2617 = vmul.f32 %v2495, %v2583
    %v2618 = vmul.f32 %v2500, %v2588
    %v2619 = vmul.f32 %v2505, %v2593
    %v2620 = vmul.f32 %v2510, %v2598
    %v2621 = vmul.f32 %v2515, %v2603
    %v2622 = vsel %vm833, %v2605, 0.0
    %v2623 = vsel %vm833, %v2606, 0.0
    %v2624 = vadd.f32 %v2622, %v2623
    %v2625 = vsel %vm833, %v2607, 0.0
    %v2626 = vadd.f32 %v2624, %v2625
    %v2627 = vsel %vm833, %v2608, 0.0
    %v2628 = vadd.f32 %v2626, %v2627
    %v2629 = vsel %vm833, %v2609, 0.0
    %v2630 = vadd.f32 %v2628, %v2629
    %v2631 = vsel %vm833, %v2610, 0.0
    %v2632 = vadd.f32 %v2630, %v2631
    %v2633 = vsel %vm833, %v2611, 0.0
    %v2634 = vadd.f32 %v2632, %v2633
    %v2635 = vsel %vm833, %v2612, 0.0
    %v2636 = vadd.f32 %v2634, %v2635
    %v2637 = vsel %vm833, %v2613, 0.0
    %v2638 = vadd.f32 %v2636, %v2637
    %v2639 = vsel %vm833, %v2614, 0.0
    %v2640 = vadd.f32 %v2638, %v2639
    %v2641 = vsel %vm833, %v2615, 0.0
    %v2642 = vadd.f32 %v2640, %v2641
    %v2643 = vsel %vm833, %v2616, 0.0
    %v2644 = vadd.f32 %v2642, %v2643
    %v2645 = vsel %vm833, %v2617, 0.0
    %v2646 = vadd.f32 %v2644, %v2645
    %v2647 = vsel %vm833, %v2618, 0.0
    %v2648 = vadd.f32 %v2646, %v2647
    %v2649 = vsel %vm833, %v2619, 0.0
    %v2650 = vadd.f32 %v2648, %v2649
    %v2651 = vsel %vm833, %v2620, 0.0
    %v2652 = vadd.f32 %v2650, %v2651
    %vm2653 = vcmask 58368
    %v2654 = vsel %vm2653, %v2621, 0.0
    %v2655 = vadd.f32 %v2652, %v2654
    %v2656 = vrot.slane %v2655, 4
    %v2657 = vadd.f32 %v2655, %v2656
    %v2658 = vrot.slane %v2657, 2
    %v2659 = vadd.f32 %v2657, %v2658
    %v2660 = vrot.slane %v2659, 1
    %v2661 = vadd.f32 %v2659, %v2660
    %v2662 = vmul.f32 %v2605, %v2435
    %v2663 = vmul.f32 %v2606, %v2440
    %v2664 = vmul.f32 %v2607, %v2445
    %v2665 = vmul.f32 %v2608, %v2450
    %v2666 = vmul.f32 %v2609, %v2455
    %v2667 = vmul.f32 %v2610, %v2460
    %v2668 = vmul.f32 %v2611, %v2465
    %v2669 = vmul.f32 %v2612, %v2470
    %v2670 = vmul.f32 %v2613, %v2475
    %v2671 = vmul.f32 %v2614, %v2480
    %v2672 = vmul.f32 %v2615, %v2485
    %v2673 = vmul.f32 %v2616, %v2490
    %v2674 = vmul.f32 %v2617, %v2495
    %v2675 = vmul.f32 %v2618, %v2500
    %v2676 = vmul.f32 %v2619, %v2505
    %v2677 = vmul.f32 %v2620, %v2510
    %v2678 = vmul.f32 %v2621, %v2515
    %v2679 = vsel %vm833, %v2662, 0.0
    %v2680 = vsel %vm833, %v2663, 0.0
    %v2681 = vadd.f32 %v2679, %v2680
    %v2682 = vsel %vm833, %v2664, 0.0
    %v2683 = vadd.f32 %v2681, %v2682
    %v2684 = vsel %vm833, %v2665, 0.0
    %v2685 = vadd.f32 %v2683, %v2684
    %v2686 = vsel %vm833, %v2666, 0.0
    %v2687 = vadd.f32 %v2685, %v2686
    %v2688 = vsel %vm833, %v2667, 0.0
    %v2689 = vadd.f32 %v2687, %v2688
    %v2690 = vsel %vm833, %v2668, 0.0
    %v2691 = vadd.f32 %v2689, %v2690
    %v2692 = vsel %vm833, %v2669, 0.0
    %v2693 = vadd.f32 %v2691, %v2692
    %v2694 = vsel %vm833, %v2670, 0.0
    %v2695 = vadd.f32 %v2693, %v2694
    %v2696 = vsel %vm833, %v2671, 0.0
    %v2697 = vadd.f32 %v2695, %v2696
    %v2698 = vsel %vm833, %v2672, 0.0
    %v2699 = vadd.f32 %v2697, %v2698
    %v2700 = vsel %vm833, %v2673, 0.0
    %v2701 = vadd.f32 %v2699, %v2700
    %v2702 = vsel %vm833, %v2674, 0.0
    %v2703 = vadd.f32 %v2701, %v2702
    %v2704 = vsel %vm833, %v2675, 0.0
    %v2705 = vadd.f32 %v2703, %v2704
    %v2706 = vsel %vm833, %v2676, 0.0
    %v2707 = vadd.f32 %v2705, %v2706
    %v2708 = vsel %vm833, %v2677, 0.0
    %v2709 = vadd.f32 %v2707, %v2708
    %v2710 = vsel %vm2653, %v2678, 0.0
    %v2711 = vadd.f32 %v2709, %v2710
    %v2712 = vrot.slane %v2711, 4
    %v2713 = vadd.f32 %v2711, %v2712
    %v2714 = vrot.slane %v2713, 2
    %v2715 = vadd.f32 %v2713, %v2714
    %v2716 = vrot.slane %v2715, 1
    %v2717 = vadd.f32 %v2715, %v2716
    %v2718 = vmul.f32 %v2661, 0.008333334
    %v2719 = vmul.f32 %v2717, 0.008333334
    %v2720 = vmul.f32 %v2718, %v2718
    %v2721 = vsub.f32 %v2719, %v2720
    %v2722 = vadd.f32 %v2721, 1e-05
    %v2723 = vrsqrt.pop %v2722
    %v2724 = vmul.f32 %v2518, %v2723
    %v2725 = vmul.f32 %v2718, %v2724
    %v2726 = vsub.f32 %v2519, %v2725
    %v2728 = vlaneseq
    %v2729 = vshrl.u32 %v2728, 7
    %v2730 = vsub.s32 0, %v2729
    %v2731 = vrot.slane %v2724, %v2730
    %v2733 = vmul.f32 %v2435, %v2731
    %v2734 = vmul.f32 %v2440, %v2731
    %v2735 = vmul.f32 %v2445, %v2731
    %v2736 = vmul.f32 %v2450, %v2731
    %v2737 = vmul.f32 %v2455, %v2731
    %v2738 = vmul.f32 %v2460, %v2731
    %v2739 = vmul.f32 %v2465, %v2731
    %v2740 = vmul.f32 %v2470, %v2731
    %v2741 = vmul.f32 %v2475, %v2731
    %v2742 = vmul.f32 %v2480, %v2731
    %v2743 = vmul.f32 %v2485, %v2731
    %v2744 = vmul.f32 %v2490, %v2731
    %v2745 = vmul.f32 %v2495, %v2731
    %v2746 = vmul.f32 %v2500, %v2731
    %v2747 = vmul.f32 %v2505, %v2731
    %v2748 = vmul.f32 %v2510, %v2731
    %v2749 = vmul.f32 %v2515, %v2731
    %v2751 = vlaneseq
    %v2752 = vshrl.u32 %v2751, 7
    %v2753 = vsub.s32 0, %v2752
    %v2754 = vrot.slane %v2726, %v2753
    %v2756 = vadd.f32 %v2733, %v2754
    %v2757 = vadd.f32 %v2734, %v2754
    %v2758 = vadd.f32 %v2735, %v2754
    %v2759 = vadd.f32 %v2736, %v2754
    %v2760 = vadd.f32 %v2737, %v2754
    %v2761 = vadd.f32 %v2738, %v2754
    %v2762 = vadd.f32 %v2739, %v2754
    %v2763 = vadd.f32 %v2740, %v2754
    %v2764 = vadd.f32 %v2741, %v2754
    %v2765 = vadd.f32 %v2742, %v2754
    %v2766 = vadd.f32 %v2743, %v2754
    %v2767 = vadd.f32 %v2744, %v2754
    %v2768 = vadd.f32 %v2745, %v2754
    %v2769 = vadd.f32 %v2746, %v2754
    %v2770 = vadd.f32 %v2747, %v2754
    %v2771 = vadd.f32 %v2748, %v2754
    %v2772 = vadd.f32 %v2749, %v2754
    %v2773 = vmax.f32 %v2756, 0.0
    %v2774 = vmax.f32 %v2757, 0.0
    %v2775 = vmax.f32 %v2758, 0.0
    %v2776 = vmax.f32 %v2759, 0.0
    %v2777 = vmax.f32 %v2760, 0.0
    %v2778 = vmax.f32 %v2761, 0.0
    %v2779 = vmax.f32 %v2762, 0.0
    %v2780 = vmax.f32 %v2763, 0.0
    %v2781 = vmax.f32 %v2764, 0.0
    %v2782 = vmax.f32 %v2765, 0.0
    %v2783 = vmax.f32 %v2766, 0.0
    %v2784 = vmax.f32 %v2767, 0.0
    %v2785 = vmax.f32 %v2768, 0.0
    %v2786 = vmax.f32 %v2769, 0.0
    %v2787 = vmax.f32 %v2770, 0.0
    %v2788 = vmax.f32 %v2771, 0.0
    %v2789 = vmax.f32 %v2772, 0.0
    %v2790 = vld [vmem:[%s11] sm:$0xff]
    %v2791 = vld [vmem:[%s11 + $0x8] sm:$0xff]
    %v2792 = vld [vmem:[%s11 + $0x10] sm:$0xff]
    %v2793 = vld [vmem:[%s11 + $0x18] sm:$0xff]
    %v2794 = vld [vmem:[%s11 + $0x20] sm:$0xff]
    %v2795 = vld [vmem:[%s11 + $0x28] sm:$0xff]
    %v2796 = vld [vmem:[%s11 + $0x30] sm:$0xff]
    %v2797 = vld [vmem:[%s11 + $0x38] sm:$0xff]
    %v2798 = vld [vmem:[%s11 + $0x40] sm:$0xff]
    %v2799 = vld [vmem:[%s11 + $0x48] sm:$0xff]
    %v2800 = vld [vmem:[%s11 + $0x50] sm:$0x3]
    %v2812 = vrot.slane %v2773, 2
    %v2813 = vrot.slane %v2774, 2
    %v2814 = vsel %vm1500, %v2812, %v2813
    %v2815 = vrot.slane %v2775, 2
    %v2816 = vsel %vm1500, %v2813, %v2815
    %v2817 = vrot.slane %v2776, 2
    %v2818 = vsel %vm1500, %v2815, %v2817
    %v2819 = vrot.slane %v2777, 2
    %v2820 = vsel %vm1500, %v2817, %v2819
    %v2821 = vrot.slane %v2778, 2
    %v2822 = vsel %vm1500, %v2819, %v2821
    %v2823 = vrot.slane %v2779, 2
    %v2824 = vsel %vm1500, %v2821, %v2823
    %v2825 = vrot.slane %v2780, 2
    %v2826 = vsel %vm1500, %v2823, %v2825
    %v2827 = vrot.slane %v2781, 2
    %v2828 = vsel %vm1500, %v2825, %v2827
    %v2829 = vrot.slane %v2782, 2
    %v2830 = vsel %vm1500, %v2827, %v2829
    %v2831 = vrot.slane %v2783, 2
    %v2832 = vsel %vm1500, %v2829, %v2831
    %2833 = vrot.lane.b32.xlu0 %v2814, 8
    %v2834 = vpop.permute.xlu0 %2833
    %2835 = vrot.lane.b32.xlu0 %v2816, 8
    %v2836 = vpop.permute.xlu0 %2835
    %2837 = vrot.lane.b32.xlu0 %v2818, 8
    %v2838 = vpop.permute.xlu0 %2837
    %2839 = vrot.lane.b32.xlu0 %v2820, 8
    %v2840 = vpop.permute.xlu0 %2839
    %2841 = vrot.lane.b32.xlu0 %v2822, 8
    %v2842 = vpop.permute.xlu0 %2841
    %2843 = vrot.lane.b32.xlu0 %v2824, 8
    %v2844 = vpop.permute.xlu0 %2843
    %2845 = vrot.lane.b32.xlu0 %v2826, 8
    %v2846 = vpop.permute.xlu0 %2845
    %2847 = vrot.lane.b32.xlu0 %v2828, 8
    %v2848 = vpop.permute.xlu0 %2847
    %2849 = vrot.lane.b32.xlu0 %v2830, 8
    %v2850 = vpop.permute.xlu0 %2849
    %2851 = vrot.lane.b32.xlu0 %v2832, 8
    %v2852 = vpop.permute.xlu0 %2851
    %2853 = vrot.lane.b32.xlu0 %v2831, 8
    %v2854 = vpop.permute.xlu0 %2853
    %v2866 = vrot.slane %v2773, 4
    %v2867 = vrot.slane %v2774, 4
    %v2868 = vsel %vm1703, %v2866, %v2867
    %v2869 = vrot.slane %v2775, 4
    %v2870 = vsel %vm1703, %v2867, %v2869
    %v2871 = vrot.slane %v2776, 4
    %v2872 = vsel %vm1703, %v2869, %v2871
    %v2873 = vrot.slane %v2777, 4
    %v2874 = vsel %vm1703, %v2871, %v2873
    %v2875 = vrot.slane %v2778, 4
    %v2876 = vsel %vm1703, %v2873, %v2875
    %v2877 = vrot.slane %v2779, 4
    %v2878 = vsel %vm1703, %v2875, %v2877
    %v2879 = vrot.slane %v2780, 4
    %v2880 = vsel %vm1703, %v2877, %v2879
    %v2881 = vrot.slane %v2781, 4
    %v2882 = vsel %vm1703, %v2879, %v2881
    %v2883 = vrot.slane %v2782, 4
    %v2884 = vsel %vm1703, %v2881, %v2883
    %v2885 = vrot.slane %v2783, 4
    %v2886 = vsel %vm1703, %v2883, %v2885
    %2887 = vrot.lane.b32.xlu0 %v2868, 16
    %v2888 = vpop.permute.xlu0 %2887
    %2889 = vrot.lane.b32.xlu0 %v2870, 16
    %v2890 = vpop.permute.xlu0 %2889
    %2891 = vrot.lane.b32.xlu0 %v2872, 16
    %v2892 = vpop.permute.xlu0 %2891
    %2893 = vrot.lane.b32.xlu0 %v2874, 16
    %v2894 = vpop.permute.xlu0 %2893
    %2895 = vrot.lane.b32.xlu0 %v2876, 16
    %v2896 = vpop.permute.xlu0 %2895
    %2897 = vrot.lane.b32.xlu0 %v2878, 16
    %v2898 = vpop.permute.xlu0 %2897
    %2899 = vrot.lane.b32.xlu0 %v2880, 16
    %v2900 = vpop.permute.xlu0 %2899
    %2901 = vrot.lane.b32.xlu0 %v2882, 16
    %v2902 = vpop.permute.xlu0 %2901
    %2903 = vrot.lane.b32.xlu0 %v2884, 16
    %v2904 = vpop.permute.xlu0 %2903
    %2905 = vrot.lane.b32.xlu0 %v2886, 16
    %v2906 = vpop.permute.xlu0 %2905
    %2907 = vrot.lane.b32.xlu0 %v2885, 16
    %v2908 = vpop.permute.xlu0 %2907
    %v2922 = vrot.slane %v2775, 6
    %v2923 = vrot.slane %v2776, 6
    %v2924 = vsel %vm1805, %v2922, %v2923
    %v2925 = vrot.slane %v2777, 6
    %v2926 = vsel %vm1805, %v2923, %v2925
    %v2927 = vrot.slane %v2778, 6
    %v2928 = vsel %vm1805, %v2925, %v2927
    %v2929 = vrot.slane %v2779, 6
    %v2930 = vsel %vm1805, %v2927, %v2929
    %v2931 = vrot.slane %v2780, 6
    %v2932 = vsel %vm1805, %v2929, %v2931
    %v2933 = vrot.slane %v2781, 6
    %v2934 = vsel %vm1805, %v2931, %v2933
    %v2935 = vrot.slane %v2782, 6
    %v2936 = vsel %vm1805, %v2933, %v2935
    %v2937 = vrot.slane %v2783, 6
    %v2938 = vsel %vm1805, %v2935, %v2937
    %v2939 = vrot.slane %v2784, 6
    %v2940 = vsel %vm1805, %v2937, %v2939
    %v2941 = vrot.slane %v2785, 6
    %v2942 = vsel %vm1805, %v2939, %v2941
    %2943 = vrot.lane.b32.xlu0 %v2924, 24
    %v2944 = vpop.permute.xlu0 %2943
    %2945 = vrot.lane.b32.xlu0 %v2926, 24
    %v2946 = vpop.permute.xlu0 %2945
    %2947 = vrot.lane.b32.xlu0 %v2928, 24
    %v2948 = vpop.permute.xlu0 %2947
    %2949 = vrot.lane.b32.xlu0 %v2930, 24
    %v2950 = vpop.permute.xlu0 %2949
    %2951 = vrot.lane.b32.xlu0 %v2932, 24
    %v2952 = vpop.permute.xlu0 %2951
    %2953 = vrot.lane.b32.xlu0 %v2934, 24
    %v2954 = vpop.permute.xlu0 %2953
    %2955 = vrot.lane.b32.xlu0 %v2936, 24
    %v2956 = vpop.permute.xlu0 %2955
    %2957 = vrot.lane.b32.xlu0 %v2938, 24
    %v2958 = vpop.permute.xlu0 %2957
    %2959 = vrot.lane.b32.xlu0 %v2940, 24
    %v2960 = vpop.permute.xlu0 %2959
    %2961 = vrot.lane.b32.xlu0 %v2942, 24
    %v2962 = vpop.permute.xlu0 %2961
    %2963 = vrot.lane.b32.xlu0 %v2941, 24
    %v2964 = vpop.permute.xlu0 %2963
    %2977 = vrot.lane.b32.xlu0 %v2776, 32
    %v2978 = vpop.permute.xlu0 %2977
    %2979 = vrot.lane.b32.xlu0 %v2777, 32
    %v2980 = vpop.permute.xlu0 %2979
    %2981 = vrot.lane.b32.xlu0 %v2778, 32
    %v2982 = vpop.permute.xlu0 %2981
    %2983 = vrot.lane.b32.xlu0 %v2779, 32
    %v2984 = vpop.permute.xlu0 %2983
    %2985 = vrot.lane.b32.xlu0 %v2780, 32
    %v2986 = vpop.permute.xlu0 %2985
    %2987 = vrot.lane.b32.xlu0 %v2781, 32
    %v2988 = vpop.permute.xlu0 %2987
    %2989 = vrot.lane.b32.xlu0 %v2782, 32
    %v2990 = vpop.permute.xlu0 %2989
    %2991 = vrot.lane.b32.xlu0 %v2783, 32
    %v2992 = vpop.permute.xlu0 %2991
    %2993 = vrot.lane.b32.xlu0 %v2784, 32
    %v2994 = vpop.permute.xlu0 %2993
    %2995 = vrot.lane.b32.xlu0 %v2785, 32
    %v2996 = vpop.permute.xlu0 %2995
    %2997 = vrot.lane.b32.xlu0 %v2786, 32
    %v2998 = vpop.permute.xlu0 %2997
    %v3010 = vrot.slane %v2784, 2
    %v3011 = vsel %vm1500, %v2831, %v3010
    %v3012 = vrot.slane %v2785, 2
    %v3013 = vsel %vm1500, %v3010, %v3012
    %v3014 = vrot.slane %v2786, 2
    %v3015 = vsel %vm1500, %v3012, %v3014
    %3016 = vrot.lane.b32.xlu0 %v2820, 40
    %v3017 = vpop.permute.xlu0 %3016
    %3018 = vrot.lane.b32.xlu0 %v2822, 40
    %v3019 = vpop.permute.xlu0 %3018
    %3020 = vrot.lane.b32.xlu0 %v2824, 40
    %v3021 = vpop.permute.xlu0 %3020
    %3022 = vrot.lane.b32.xlu0 %v2826, 40
    %v3023 = vpop.permute.xlu0 %3022
    %3024 = vrot.lane.b32.xlu0 %v2828, 40
    %v3025 = vpop.permute.xlu0 %3024
    %3026 = vrot.lane.b32.xlu0 %v2830, 40
    %v3027 = vpop.permute.xlu0 %3026
    %3028 = vrot.lane.b32.xlu0 %v2832, 40
    %v3029 = vpop.permute.xlu0 %3028
    %3030 = vrot.lane.b32.xlu0 %v3011, 40
    %v3031 = vpop.permute.xlu0 %3030
    %3032 = vrot.lane.b32.xlu0 %v3013, 40
    %v3033 = vpop.permute.xlu0 %3032
    %3034 = vrot.lane.b32.xlu0 %v3015, 40
    %v3035 = vpop.permute.xlu0 %3034
    %3036 = vrot.lane.b32.xlu0 %v3014, 40
    %v3037 = vpop.permute.xlu0 %3036
    %v3051 = vrot.slane %v2784, 4
    %v3052 = vsel %vm1703, %v2885, %v3051
    %v3053 = vrot.slane %v2785, 4
    %v3054 = vsel %vm1703, %v3051, %v3053
    %v3055 = vrot.slane %v2786, 4
    %v3056 = vsel %vm1703, %v3053, %v3055
    %v3057 = vrot.slane %v2787, 4
    %v3058 = vsel %vm1703, %v3055, %v3057
    %v3059 = vrot.slane %v2788, 4
    %v3060 = vsel %vm1703, %v3057, %v3059
    %3061 = vrot.lane.b32.xlu0 %v2878, 48
    %v3062 = vpop.permute.xlu0 %3061
    %3063 = vrot.lane.b32.xlu0 %v2880, 48
    %v3064 = vpop.permute.xlu0 %3063
    %3065 = vrot.lane.b32.xlu0 %v2882, 48
    %v3066 = vpop.permute.xlu0 %3065
    %3067 = vrot.lane.b32.xlu0 %v2884, 48
    %v3068 = vpop.permute.xlu0 %3067
    %3069 = vrot.lane.b32.xlu0 %v2886, 48
    %v3070 = vpop.permute.xlu0 %3069
    %3071 = vrot.lane.b32.xlu0 %v3052, 48
    %v3072 = vpop.permute.xlu0 %3071
    %3073 = vrot.lane.b32.xlu0 %v3054, 48
    %v3074 = vpop.permute.xlu0 %3073
    %3075 = vrot.lane.b32.xlu0 %v3056, 48
    %v3076 = vpop.permute.xlu0 %3075
    %3077 = vrot.lane.b32.xlu0 %v3058, 48
    %v3078 = vpop.permute.xlu0 %3077
    %3079 = vrot.lane.b32.xlu0 %v3060, 48
    %v3080 = vpop.permute.xlu0 %3079
    %3081 = vrot.lane.b32.xlu0 %v3059, 48
    %v3082 = vpop.permute.xlu0 %3081
    %v3094 = vrot.slane %v2786, 6
    %v3095 = vsel %vm1805, %v2941, %v3094
    %v3096 = vrot.slane %v2787, 6
    %v3097 = vsel %vm1805, %v3094, %v3096
    %v3098 = vrot.slane %v2788, 6
    %v3099 = vsel %vm1805, %v3096, %v3098
    %3100 = vrot.lane.b32.xlu0 %v2930, 56
    %v3101 = vpop.permute.xlu0 %3100
    %3102 = vrot.lane.b32.xlu0 %v2932, 56
    %v3103 = vpop.permute.xlu0 %3102
    %3104 = vrot.lane.b32.xlu0 %v2934, 56
    %v3105 = vpop.permute.xlu0 %3104
    %3106 = vrot.lane.b32.xlu0 %v2936, 56
    %v3107 = vpop.permute.xlu0 %3106
    %3108 = vrot.lane.b32.xlu0 %v2938, 56
    %v3109 = vpop.permute.xlu0 %3108
    %3110 = vrot.lane.b32.xlu0 %v2940, 56
    %v3111 = vpop.permute.xlu0 %3110
    %3112 = vrot.lane.b32.xlu0 %v2942, 56
    %v3113 = vpop.permute.xlu0 %3112
    %3114 = vrot.lane.b32.xlu0 %v3095, 56
    %v3115 = vpop.permute.xlu0 %3114
    %3116 = vrot.lane.b32.xlu0 %v3097, 56
    %v3117 = vpop.permute.xlu0 %3116
    %3118 = vrot.lane.b32.xlu0 %v3099, 56
    %v3119 = vpop.permute.xlu0 %3118
    %3120 = vrot.lane.b32.xlu0 %v3098, 56
    %v3121 = vpop.permute.xlu0 %3120
    %3134 = vrot.lane.b32.xlu0 %v2779, 64
    %v3135 = vpop.permute.xlu0 %3134
    %3136 = vrot.lane.b32.xlu0 %v2780, 64
    %v3137 = vpop.permute.xlu0 %3136
    %3138 = vrot.lane.b32.xlu0 %v2781, 64
    %v3139 = vpop.permute.xlu0 %3138
    %3140 = vrot.lane.b32.xlu0 %v2782, 64
    %v3141 = vpop.permute.xlu0 %3140
    %3142 = vrot.lane.b32.xlu0 %v2783, 64
    %v3143 = vpop.permute.xlu0 %3142
    %3144 = vrot.lane.b32.xlu0 %v2784, 64
    %v3145 = vpop.permute.xlu0 %3144
    %3146 = vrot.lane.b32.xlu0 %v2785, 64
    %v3147 = vpop.permute.xlu0 %3146
    %3148 = vrot.lane.b32.xlu0 %v2786, 64
    %v3149 = vpop.permute.xlu0 %3148
    %3150 = vrot.lane.b32.xlu0 %v2787, 64
    %v3151 = vpop.permute.xlu0 %3150
    %3152 = vrot.lane.b32.xlu0 %v2788, 64
    %v3153 = vpop.permute.xlu0 %3152
    %3154 = vrot.lane.b32.xlu0 %v2789, 64
    %v3155 = vpop.permute.xlu0 %3154
    %v3167 = vsel %vm833, %v2773, %v2834
    %v3168 = vsel %vm833, %v2774, %v2836
    %v3169 = vsel %vm833, %v2775, %v2838
    %v3170 = vsel %vm833, %v2776, %v2840
    %v3171 = vsel %vm833, %v2777, %v2842
    %v3172 = vsel %vm833, %v2778, %v2844
    %v3173 = vsel %vm833, %v2779, %v2846
    %v3174 = vsel %vm833, %v2780, %v2848
    %v3175 = vsel %vm833, %v2781, %v2850
    %v3176 = vsel %vm833, %v2782, %v2852
    %v3177 = vsel %vm833, %v2783, %v2854
    %v3178 = vsel %vm2181, %v3167, %v2888
    %v3179 = vsel %vm2181, %v3168, %v2890
    %v3180 = vsel %vm2181, %v3169, %v2892
    %v3181 = vsel %vm2181, %v3170, %v2894
    %v3182 = vsel %vm2181, %v3171, %v2896
    %v3183 = vsel %vm2181, %v3172, %v2898
    %v3184 = vsel %vm2181, %v3173, %v2900
    %v3185 = vsel %vm2181, %v3174, %v2902
    %v3186 = vsel %vm2181, %v3175, %v2904
    %v3187 = vsel %vm2181, %v3176, %v2906
    %v3188 = vsel %vm2181, %v3177, %v2908
    %v3189 = vsel %vm2199, %v3178, %v2944
    %v3190 = vsel %vm2199, %v3179, %v2946
    %v3191 = vsel %vm2199, %v3180, %v2948
    %v3192 = vsel %vm2199, %v3181, %v2950
    %v3193 = vsel %vm2199, %v3182, %v2952
    %v3194 = vsel %vm2199, %v3183, %v2954
    %v3195 = vsel %vm2199, %v3184, %v2956
    %v3196 = vsel %vm2199, %v3185, %v2958
    %v3197 = vsel %vm2199, %v3186, %v2960
    %v3198 = vsel %vm2199, %v3187, %v2962
    %v3199 = vsel %vm2199, %v3188, %v2964
    %v3200 = vsel %vm2217, %v3189, %v2978
    %v3201 = vsel %vm2217, %v3190, %v2980
    %v3202 = vsel %vm2217, %v3191, %v2982
    %v3203 = vsel %vm2217, %v3192, %v2984
    %v3204 = vsel %vm2217, %v3193, %v2986
    %v3205 = vsel %vm2217, %v3194, %v2988
    %v3206 = vsel %vm2217, %v3195, %v2990
    %v3207 = vsel %vm2217, %v3196, %v2992
    %v3208 = vsel %vm2217, %v3197, %v2994
    %v3209 = vsel %vm2217, %v3198, %v2996
    %v3210 = vsel %vm2217, %v3199, %v2998
    %v3211 = vsel %vm2235, %v3200, %v3017
    %v3212 = vsel %vm2235, %v3201, %v3019
    %v3213 = vsel %vm2235, %v3202, %v3021
    %v3214 = vsel %vm2235, %v3203, %v3023
    %v3215 = vsel %vm2235, %v3204, %v3025
    %v3216 = vsel %vm2235, %v3205, %v3027
    %v3217 = vsel %vm2235, %v3206, %v3029
    %v3218 = vsel %vm2235, %v3207, %v3031
    %v3219 = vsel %vm2235, %v3208, %v3033
    %v3220 = vsel %vm2235, %v3209, %v3035
    %v3221 = vsel %vm2235, %v3210, %v3037
    %v3222 = vsel %vm2253, %v3211, %v3062
    %v3223 = vsel %vm2253, %v3212, %v3064
    %v3224 = vsel %vm2253, %v3213, %v3066
    %v3225 = vsel %vm2253, %v3214, %v3068
    %v3226 = vsel %vm2253, %v3215, %v3070
    %v3227 = vsel %vm2253, %v3216, %v3072
    %v3228 = vsel %vm2253, %v3217, %v3074
    %v3229 = vsel %vm2253, %v3218, %v3076
    %v3230 = vsel %vm2253, %v3219, %v3078
    %v3231 = vsel %vm2253, %v3220, %v3080
    %v3232 = vsel %vm2253, %v3221, %v3082
    %v3233 = vsel %vm2271, %v3222, %v3101
    %v3234 = vsel %vm2271, %v3223, %v3103
    %v3235 = vsel %vm2271, %v3224, %v3105
    %v3236 = vsel %vm2271, %v3225, %v3107
    %v3237 = vsel %vm2271, %v3226, %v3109
    %v3238 = vsel %vm2271, %v3227, %v3111
    %v3239 = vsel %vm2271, %v3228, %v3113
    %v3240 = vsel %vm2271, %v3229, %v3115
    %v3241 = vsel %vm2271, %v3230, %v3117
    %v3242 = vsel %vm2271, %v3231, %v3119
    %v3243 = vsel %vm2271, %v3232, %v3121
    %v3244 = vsel %vm2289, %v3233, %v3135
    %v3245 = vsel %vm2289, %v3234, %v3137
    %v3246 = vsel %vm2289, %v3235, %v3139
    %v3247 = vsel %vm2289, %v3236, %v3141
    %v3248 = vsel %vm2289, %v3237, %v3143
    %v3249 = vsel %vm2289, %v3238, %v3145
    %v3250 = vsel %vm2289, %v3239, %v3147
    %v3251 = vsel %vm2289, %v3240, %v3149
    %v3252 = vsel %vm2289, %v3241, %v3151
    %v3253 = vsel %vm2289, %v3242, %v3153
    %v3254 = vsel %vm2289, %v3243, %v3155
    %v3255 = vld [vmem:[%s8] sm:$0xff]
    %v3256 = vld [vmem:[%s8 + $0x8] sm:$0xff]
    %v3257 = vld [vmem:[%s8 + $0x10] sm:$0xff]
    %v3258 = vld [vmem:[%s8 + $0x18] sm:$0xff]
    %v3259 = vld [vmem:[%s8 + $0x20] sm:$0xff]
    %v3260 = vld [vmem:[%s8 + $0x28] sm:$0xff]
    %v3261 = vld [vmem:[%s8 + $0x30] sm:$0xff]
    %v3262 = vld [vmem:[%s8 + $0x38] sm:$0xff]
    %v3263 = vld [vmem:[%s8 + $0x40] sm:$0xff]
    %v3265 = vsel %vm2316, %v3244, 0
    %v3268 = vsel %vm2316, %v3245, 0
    %v3271 = vsel %vm2316, %v3246, 0
    %v3274 = vsel %vm2316, %v3247, 0
    %v3277 = vsel %vm2316, %v3248, 0
    %v3280 = vsel %vm2316, %v3249, 0
    %v3283 = vsel %vm2316, %v3250, 0
    %v3286 = vsel %vm2316, %v3251, 0
    %v3289 = vsel %vm2316, %v3252, 0
    %v3292 = vsel %vm2316, %v3253, 0
    %v3295 = vsel %vm2316, %v3254, 0
    %3297 = vmatprep.subr.mxu0 0.0
    %3298 = vmatpush1.msra.mxu0 %v3255
    %3299 = vmatprep.subr.mxu0 0.0
    %3300 = vmatpush1.msra.mxu0 %v3256
    %3301 = vmatprep.subr.mxu0 0.0
    %3302 = vmatpush1.msra.mxu0 %v3257
    %3303 = vmatprep.subr.mxu0 0.0
    %3304 = vmatpush1.msra.mxu0 %v3258
    %3305 = vmatprep.subr.mxu0 0.0
    %3306 = vmatpush1.msra.mxu0 %v3259
    %3307 = vmatprep.subr.mxu0 0.0
    %3308 = vmatpush1.msra.mxu0 %v3260
    %3309 = vmatprep.subr.mxu0 0.0
    %3310 = vmatpush1.msra.mxu0 %v3261
    %3311 = vmatprep.subr.mxu0 0.0
    %3312 = vmatpush1.msra.mxu0 %v3262
    %3313 = vmatprep.subr.mxu0 0.0
    %3314 = vmatpush1.msra.mxu0 %v3263
    %3315 = vmatprep.subr.mxu0 0.0
    %3316 = vmatpush1.msra.mxu0 0.0
    %3317 = vmatprep.subr.mxu0 0.0
    %3318 = vmatpush1.msra.mxu0 0.0
    %3319 = vmatprep.subr.mxu0 0.0
    %3320 = vmatpush1.msra.mxu0 0.0
    %3321 = vmatprep.subr.mxu0 0.0
    %3322 = vmatpush1.msra.mxu0 0.0
    %3323 = vmatprep.subr.mxu0 0.0
    %3324 = vmatpush1.msra.mxu0 0.0
    %3325 = vmatprep.subr.mxu0 0.0
    %3326 = vmatpush1.msra.mxu0 0.0
    %3327 = vmatprep.subr.mxu0 0.0
    %3328 = vmatpush1.msra.mxu0 0.0
    %3329 = vmatprep.subr.mxu0 0.0
    %3330 = vmatpush1.msra.mxu0 0.0
    %3331 = vmatprep.subr.mxu0 0.0
    %3332 = vmatpush1.msra.mxu0 0.0
    %3333 = vmatprep.subr.mxu0 0.0
    %3334 = vmatpush1.msra.mxu0 0.0
    %3335 = vmatprep.subr.mxu0 0.0
    %3336 = vmatpush1.msra.mxu0 0.0
    %3337 = vmatprep.subr.mxu0 0.0
    %3338 = vmatpush1.msra.mxu0 0.0
    %3339 = vmatprep.subr.mxu0 0.0
    %3340 = vmatpush1.msra.mxu0 0.0
    %3341 = vmatprep.subr.mxu0 0.0
    %3342 = vmatpush1.msra.mxu0 0.0
    %3343 = vmatprep.subr.mxu0 0.0
    %3344 = vmatpush1.msra.mxu0 0.0
    %3345 = vmatprep.subr.mxu0 0.0
    %3346 = vmatpush1.msra.mxu0 0.0
    %3347 = vmatprep.subr.mxu0 0.0
    %3348 = vmatpush1.msra.mxu0 0.0
    %3349 = vmatprep.subr.mxu0 0.0
    %3350 = vmatpush1.msra.mxu0 0.0
    %3351 = vmatprep.subr.mxu0 0.0
    %3352 = vmatpush1.msra.mxu0 0.0
    %3353 = vmatprep.subr.mxu0 0.0
    %3354 = vmatpush1.msra.mxu0 0.0
    %3355 = vmatprep.subr.mxu0 0.0
    %3356 = vmatpush1.msra.mxu0 0.0
    %3357 = vmatprep.subr.mxu0 0.0
    %3358 = vmatpush1.msra.mxu0 0.0
    %3359 = vmatprep.subr.mxu0 0.0
    %3360 = vmatpush1.msra.mxu0 0.0
    %3361 = vmatprep.mubr.f32.mxu0 0.0
    %3362 = vmatmul.mubr.f32.gmra.mrb[0].mxu0 %v3265
    %v3363 = vpop.f32.mrb[0].mxu0
    %v3364 = vadd.f32 0.0, %v3363
    %v3365 = vpop.f32.mrb[0].mxu0
    %3366 = vmatprep.mubr.f32.mxu0 0.0
    %3367 = vmatmul.mubr.f32.gmra.mrb[0].mxu0 %v3268
    %v3368 = vpop.f32.mrb[0].mxu0
    %v3369 = vadd.f32 0.0, %v3368
    %v3370 = vpop.f32.mrb[0].mxu0
    %3371 = vmatprep.mubr.f32.mxu0 0.0
    %3372 = vmatmul.mubr.f32.gmra.mrb[0].mxu0 %v3271
    %v3373 = vpop.f32.mrb[0].mxu0
    %v3374 = vadd.f32 0.0, %v3373
    %v3375 = vpop.f32.mrb[0].mxu0
    %3376 = vmatprep.mubr.f32.mxu0 0.0
    %3377 = vmatmul.mubr.f32.gmra.mrb[0].mxu0 %v3274
    %v3378 = vpop.f32.mrb[0].mxu0
    %v3379 = vadd.f32 0.0, %v3378
    %v3380 = vpop.f32.mrb[0].mxu0
    %3381 = vmatprep.mubr.f32.mxu0 0.0
    %3382 = vmatmul.mubr.f32.gmra.mrb[0].mxu0 %v3277
    %v3383 = vpop.f32.mrb[0].mxu0
    %v3384 = vadd.f32 0.0, %v3383
    %v3385 = vpop.f32.mrb[0].mxu0
    %3386 = vmatprep.mubr.f32.mxu0 0.0
    %3387 = vmatmul.mubr.f32.gmra.mrb[0].mxu0 %v3280
    %v3388 = vpop.f32.mrb[0].mxu0
    %v3389 = vadd.f32 0.0, %v3388
    %v3390 = vpop.f32.mrb[0].mxu0
    %3391 = vmatprep.mubr.f32.mxu0 0.0
    %3392 = vmatmul.mubr.f32.gmra.mrb[0].mxu0 %v3283
    %v3393 = vpop.f32.mrb[0].mxu0
    %v3394 = vadd.f32 0.0, %v3393
    %v3395 = vpop.f32.mrb[0].mxu0
    %3396 = vmatprep.mubr.f32.mxu0 0.0
    %3397 = vmatmul.mubr.f32.gmra.mrb[0].mxu0 %v3286
    %v3398 = vpop.f32.mrb[0].mxu0
    %v3399 = vadd.f32 0.0, %v3398
    %v3400 = vpop.f32.mrb[0].mxu0
    %3401 = vmatprep.mubr.f32.mxu0 0.0
    %3402 = vmatmul.mubr.f32.gmra.mrb[0].mxu0 %v3289
    %v3403 = vpop.f32.mrb[0].mxu0
    %v3404 = vadd.f32 0.0, %v3403
    %v3405 = vpop.f32.mrb[0].mxu0
    %3406 = vmatprep.mubr.f32.mxu0 0.0
    %3407 = vmatmul.mubr.f32.gmra.mrb[0].mxu0 %v3292
    %v3408 = vpop.f32.mrb[0].mxu0
    %v3409 = vadd.f32 0.0, %v3408
    %v3410 = vpop.f32.mrb[0].mxu0
    %3411 = vmatprep.mubr.f32.mxu0 0.0
    %3412 = vmatmul.mubr.f32.gmra.mrb[0].mxu0 %v3295
    %v3413 = vpop.f32.mrb[0].mxu0
    %v3414 = vadd.f32 0.0, %v3413
    %v3415 = vpop.f32.mrb[0].mxu0
    %3416 = vdwg.mxu0
    %v3417 = vld [vmem:[%s9] sm:$0x1]
    %v3418 = vld [vmem:[%s10] sm:$0x1]
    %3420 = vset.pattern.permute.xlu0 0
    %3421 = vperm.xlu0 %3420, %v2790
    %v3422 = vpop.permute.xlu0 %3421
    %3425 = vset.pattern.permute.xlu0 0
    %3426 = vperm.xlu0 %3425, %v2791
    %v3427 = vpop.permute.xlu0 %3426
    %3430 = vset.pattern.permute.xlu0 0
    %3431 = vperm.xlu0 %3430, %v2792
    %v3432 = vpop.permute.xlu0 %3431
    %3435 = vset.pattern.permute.xlu0 0
    %3436 = vperm.xlu0 %3435, %v2793
    %v3437 = vpop.permute.xlu0 %3436
    %3440 = vset.pattern.permute.xlu0 0
    %3441 = vperm.xlu0 %3440, %v2794
    %v3442 = vpop.permute.xlu0 %3441
    %3445 = vset.pattern.permute.xlu0 0
    %3446 = vperm.xlu0 %3445, %v2795
    %v3447 = vpop.permute.xlu0 %3446
    %3450 = vset.pattern.permute.xlu0 0
    %3451 = vperm.xlu0 %3450, %v2796
    %v3452 = vpop.permute.xlu0 %3451
    %3455 = vset.pattern.permute.xlu0 0
    %3456 = vperm.xlu0 %3455, %v2797
    %v3457 = vpop.permute.xlu0 %3456
    %3460 = vset.pattern.permute.xlu0 0
    %3461 = vperm.xlu0 %3460, %v2798
    %v3462 = vpop.permute.xlu0 %3461
    %3465 = vset.pattern.permute.xlu0 0
    %3466 = vperm.xlu0 %3465, %v2799
    %v3467 = vpop.permute.xlu0 %3466
    %3470 = vset.pattern.permute.xlu0 0
    %3471 = vperm.xlu0 %3470, %v2800
    %v3472 = vpop.permute.xlu0 %3471
    %v3474 = vmul.f32 %v3364, %v3422
    %v3475 = vmul.f32 %v3369, %v3427
    %v3476 = vmul.f32 %v3374, %v3432
    %v3477 = vmul.f32 %v3379, %v3437
    %v3478 = vmul.f32 %v3384, %v3442
    %v3479 = vmul.f32 %v3389, %v3447
    %v3480 = vmul.f32 %v3394, %v3452
    %v3481 = vmul.f32 %v3399, %v3457
    %v3482 = vmul.f32 %v3404, %v3462
    %v3483 = vmul.f32 %v3409, %v3467
    %v3484 = vmul.f32 %v3414, %v3472
    %v3485 = vsel %vm833, %v3474, 0.0
    %v3486 = vsel %vm833, %v3475, 0.0
    %v3487 = vadd.f32 %v3485, %v3486
    %v3488 = vsel %vm833, %v3476, 0.0
    %v3489 = vadd.f32 %v3487, %v3488
    %v3490 = vsel %vm833, %v3477, 0.0
    %v3491 = vadd.f32 %v3489, %v3490
    %v3492 = vsel %vm833, %v3478, 0.0
    %v3493 = vadd.f32 %v3491, %v3492
    %v3494 = vsel %vm833, %v3479, 0.0
    %v3495 = vadd.f32 %v3493, %v3494
    %v3496 = vsel %vm833, %v3480, 0.0
    %v3497 = vadd.f32 %v3495, %v3496
    %v3498 = vsel %vm833, %v3481, 0.0
    %v3499 = vadd.f32 %v3497, %v3498
    %v3500 = vsel %vm833, %v3482, 0.0
    %v3501 = vadd.f32 %v3499, %v3500
    %v3502 = vsel %vm833, %v3483, 0.0
    %v3503 = vadd.f32 %v3501, %v3502
    %v3504 = vsel %vm2653, %v3484, 0.0
    %v3505 = vadd.f32 %v3503, %v3504
    %v3506 = vrot.slane %v3505, 4
    %v3507 = vadd.f32 %v3505, %v3506
    %v3508 = vrot.slane %v3507, 2
    %v3509 = vadd.f32 %v3507, %v3508
    %v3510 = vrot.slane %v3509, 1
    %v3511 = vadd.f32 %v3509, %v3510
    %v3512 = vmul.f32 %v3474, %v3364
    %v3513 = vmul.f32 %v3475, %v3369
    %v3514 = vmul.f32 %v3476, %v3374
    %v3515 = vmul.f32 %v3477, %v3379
    %v3516 = vmul.f32 %v3478, %v3384
    %v3517 = vmul.f32 %v3479, %v3389
    %v3518 = vmul.f32 %v3480, %v3394
    %v3519 = vmul.f32 %v3481, %v3399
    %v3520 = vmul.f32 %v3482, %v3404
    %v3521 = vmul.f32 %v3483, %v3409
    %v3522 = vmul.f32 %v3484, %v3414
    %v3523 = vsel %vm833, %v3512, 0.0
    %v3524 = vsel %vm833, %v3513, 0.0
    %v3525 = vadd.f32 %v3523, %v3524
    %v3526 = vsel %vm833, %v3514, 0.0
    %v3527 = vadd.f32 %v3525, %v3526
    %v3528 = vsel %vm833, %v3515, 0.0
    %v3529 = vadd.f32 %v3527, %v3528
    %v3530 = vsel %vm833, %v3516, 0.0
    %v3531 = vadd.f32 %v3529, %v3530
    %v3532 = vsel %vm833, %v3517, 0.0
    %v3533 = vadd.f32 %v3531, %v3532
    %v3534 = vsel %vm833, %v3518, 0.0
    %v3535 = vadd.f32 %v3533, %v3534
    %v3536 = vsel %vm833, %v3519, 0.0
    %v3537 = vadd.f32 %v3535, %v3536
    %v3538 = vsel %vm833, %v3520, 0.0
    %v3539 = vadd.f32 %v3537, %v3538
    %v3540 = vsel %vm833, %v3521, 0.0
    %v3541 = vadd.f32 %v3539, %v3540
    %v3542 = vsel %vm2653, %v3522, 0.0
    %v3543 = vadd.f32 %v3541, %v3542
    %v3544 = vrot.slane %v3543, 4
    %v3545 = vadd.f32 %v3543, %v3544
    %v3546 = vrot.slane %v3545, 2
    %v3547 = vadd.f32 %v3545, %v3546
    %v3548 = vrot.slane %v3547, 1
    %v3549 = vadd.f32 %v3547, %v3548
    %v3550 = vmul.f32 %v3511, 0.015625
    %v3551 = vmul.f32 %v3549, 0.015625
    %v3552 = vmul.f32 %v3550, %v3550
    %v3553 = vsub.f32 %v3551, %v3552
    %v3554 = vadd.f32 %v3553, 1e-05
    %v3555 = vrsqrt.pop %v3554
    %v3556 = vmul.f32 %v3417, %v3555
    %v3557 = vmul.f32 %v3550, %v3556
    %v3558 = vsub.f32 %v3418, %v3557
    %v3560 = vlaneseq
    %v3561 = vshrl.u32 %v3560, 7
    %v3562 = vsub.s32 0, %v3561
    %v3563 = vrot.slane %v3556, %v3562
    %v3565 = vmul.f32 %v3364, %v3563
    %v3566 = vmul.f32 %v3369, %v3563
    %v3567 = vmul.f32 %v3374, %v3563
    %v3568 = vmul.f32 %v3379, %v3563
    %v3569 = vmul.f32 %v3384, %v3563
    %v3570 = vmul.f32 %v3389, %v3563
    %v3571 = vmul.f32 %v3394, %v3563
    %v3572 = vmul.f32 %v3399, %v3563
    %v3573 = vmul.f32 %v3404, %v3563
    %v3574 = vmul.f32 %v3409, %v3563
    %v3575 = vmul.f32 %v3414, %v3563
    %v3577 = vlaneseq
    %v3578 = vshrl.u32 %v3577, 7
    %v3579 = vsub.s32 0, %v3578
    %v3580 = vrot.slane %v3558, %v3579
    %v3582 = vadd.f32 %v3565, %v3580
    %v3583 = vadd.f32 %v3566, %v3580
    %v3584 = vadd.f32 %v3567, %v3580
    %v3585 = vadd.f32 %v3568, %v3580
    %v3586 = vadd.f32 %v3569, %v3580
    %v3587 = vadd.f32 %v3570, %v3580
    %v3588 = vadd.f32 %v3571, %v3580
    %v3589 = vadd.f32 %v3572, %v3580
    %v3590 = vadd.f32 %v3573, %v3580
    %v3591 = vadd.f32 %v3574, %v3580
    %v3592 = vadd.f32 %v3575, %v3580
    %v3593 = vmax.f32 %v3582, 0.0
    %v3594 = vmax.f32 %v3583, 0.0
    %v3595 = vmax.f32 %v3584, 0.0
    %v3596 = vmax.f32 %v3585, 0.0
    %v3597 = vmax.f32 %v3586, 0.0
    %v3598 = vmax.f32 %v3587, 0.0
    %v3599 = vmax.f32 %v3588, 0.0
    %v3600 = vmax.f32 %v3589, 0.0
    %v3601 = vmax.f32 %v3590, 0.0
    %v3602 = vmax.f32 %v3591, 0.0
    %v3603 = vmax.f32 %v3592, 0.0
    %v3604 = vld [vmem:[%s15] sm:$0xff]
    %v3605 = vld [vmem:[%s15 + $0x8] sm:$0xff]
    %v3606 = vld [vmem:[%s15 + $0x10] sm:$0xff]
    %v3607 = vld [vmem:[%s15 + $0x18] sm:$0xff]
    %v3608 = vld [vmem:[%s15 + $0x20] sm:$0x3]
    %v3614 = vrot.slane %v3593, 2
    %v3615 = vrot.slane %v3594, 2
    %v3616 = vsel %vm1500, %v3614, %v3615
    %v3617 = vrot.slane %v3595, 2
    %v3618 = vsel %vm1500, %v3615, %v3617
    %v3619 = vrot.slane %v3596, 2
    %v3620 = vsel %vm1500, %v3617, %v3619
    %v3621 = vrot.slane %v3597, 2
    %v3622 = vsel %vm1500, %v3619, %v3621
    %3623 = vrot.lane.b32.xlu0 %v3616, 8
    %v3624 = vpop.permute.xlu0 %3623
    %3625 = vrot.lane.b32.xlu0 %v3618, 8
    %v3626 = vpop.permute.xlu0 %3625
    %3627 = vrot.lane.b32.xlu0 %v3620, 8
    %v3628 = vpop.permute.xlu0 %3627
    %3629 = vrot.lane.b32.xlu0 %v3622, 8
    %v3630 = vpop.permute.xlu0 %3629
    %3631 = vrot.lane.b32.xlu0 %v3621, 8
    %v3632 = vpop.permute.xlu0 %3631
    %v3638 = vrot.slane %v3593, 4
    %v3639 = vrot.slane %v3594, 4
    %v3640 = vsel %vm1703, %v3638, %v3639
    %v3641 = vrot.slane %v3595, 4
    %v3642 = vsel %vm1703, %v3639, %v3641
    %v3643 = vrot.slane %v3596, 4
    %v3644 = vsel %vm1703, %v3641, %v3643
    %v3645 = vrot.slane %v3597, 4
    %v3646 = vsel %vm1703, %v3643, %v3645
    %3647 = vrot.lane.b32.xlu0 %v3640, 16
    %v3648 = vpop.permute.xlu0 %3647
    %3649 = vrot.lane.b32.xlu0 %v3642, 16
    %v3650 = vpop.permute.xlu0 %3649
    %3651 = vrot.lane.b32.xlu0 %v3644, 16
    %v3652 = vpop.permute.xlu0 %3651
    %3653 = vrot.lane.b32.xlu0 %v3646, 16
    %v3654 = vpop.permute.xlu0 %3653
    %3655 = vrot.lane.b32.xlu0 %v3645, 16
    %v3656 = vpop.permute.xlu0 %3655
    %v3664 = vrot.slane %v3595, 6
    %v3665 = vrot.slane %v3596, 6
    %v3666 = vsel %vm1805, %v3664, %v3665
    %v3667 = vrot.slane %v3597, 6
    %v3668 = vsel %vm1805, %v3665, %v3667
    %v3669 = vrot.slane %v3598, 6
    %v3670 = vsel %vm1805, %v3667, %v3669
    %v3671 = vrot.slane %v3599, 6
    %v3672 = vsel %vm1805, %v3669, %v3671
    %3673 = vrot.lane.b32.xlu0 %v3666, 24
    %v3674 = vpop.permute.xlu0 %3673
    %3675 = vrot.lane.b32.xlu0 %v3668, 24
    %v3676 = vpop.permute.xlu0 %3675
    %3677 = vrot.lane.b32.xlu0 %v3670, 24
    %v3678 = vpop.permute.xlu0 %3677
    %3679 = vrot.lane.b32.xlu0 %v3672, 24
    %v3680 = vpop.permute.xlu0 %3679
    %3681 = vrot.lane.b32.xlu0 %v3671, 24
    %v3682 = vpop.permute.xlu0 %3681
    %3689 = vrot.lane.b32.xlu0 %v3596, 32
    %v3690 = vpop.permute.xlu0 %3689
    %3691 = vrot.lane.b32.xlu0 %v3597, 32
    %v3692 = vpop.permute.xlu0 %3691
    %3693 = vrot.lane.b32.xlu0 %v3598, 32
    %v3694 = vpop.permute.xlu0 %3693
    %3695 = vrot.lane.b32.xlu0 %v3599, 32
    %v3696 = vpop.permute.xlu0 %3695
    %3697 = vrot.lane.b32.xlu0 %v3600, 32
    %v3698 = vpop.permute.xlu0 %3697
    %v3704 = vrot.slane %v3598, 2
    %v3705 = vsel %vm1500, %v3621, %v3704
    %v3706 = vrot.slane %v3599, 2
    %v3707 = vsel %vm1500, %v3704, %v3706
    %v3708 = vrot.slane %v3600, 2
    %v3709 = vsel %vm1500, %v3706, %v3708
    %3710 = vrot.lane.b32.xlu0 %v3622, 40
    %v3711 = vpop.permute.xlu0 %3710
    %3712 = vrot.lane.b32.xlu0 %v3705, 40
    %v3713 = vpop.permute.xlu0 %3712
    %3714 = vrot.lane.b32.xlu0 %v3707, 40
    %v3715 = vpop.permute.xlu0 %3714
    %3716 = vrot.lane.b32.xlu0 %v3709, 40
    %v3717 = vpop.permute.xlu0 %3716
    %3718 = vrot.lane.b32.xlu0 %v3708, 40
    %v3719 = vpop.permute.xlu0 %3718
    %v3727 = vrot.slane %v3598, 4
    %v3728 = vrot.slane %v3599, 4
    %v3729 = vsel %vm1703, %v3727, %v3728
    %v3730 = vrot.slane %v3600, 4
    %v3731 = vsel %vm1703, %v3728, %v3730
    %v3732 = vrot.slane %v3601, 4
    %v3733 = vsel %vm1703, %v3730, %v3732
    %v3734 = vrot.slane %v3602, 4
    %v3735 = vsel %vm1703, %v3732, %v3734
    %3736 = vrot.lane.b32.xlu0 %v3729, 48
    %v3737 = vpop.permute.xlu0 %3736
    %3738 = vrot.lane.b32.xlu0 %v3731, 48
    %v3739 = vpop.permute.xlu0 %3738
    %3740 = vrot.lane.b32.xlu0 %v3733, 48
    %v3741 = vpop.permute.xlu0 %3740
    %3742 = vrot.lane.b32.xlu0 %v3735, 48
    %v3743 = vpop.permute.xlu0 %3742
    %3744 = vrot.lane.b32.xlu0 %v3734, 48
    %v3745 = vpop.permute.xlu0 %3744
    %v3751 = vrot.slane %v3600, 6
    %v3752 = vsel %vm1805, %v3671, %v3751
    %v3753 = vrot.slane %v3601, 6
    %v3754 = vsel %vm1805, %v3751, %v3753
    %v3755 = vrot.slane %v3602, 6
    %v3756 = vsel %vm1805, %v3753, %v3755
    %3757 = vrot.lane.b32.xlu0 %v3672, 56
    %v3758 = vpop.permute.xlu0 %3757
    %3759 = vrot.lane.b32.xlu0 %v3752, 56
    %v3760 = vpop.permute.xlu0 %3759
    %3761 = vrot.lane.b32.xlu0 %v3754, 56
    %v3762 = vpop.permute.xlu0 %3761
    %3763 = vrot.lane.b32.xlu0 %v3756, 56
    %v3764 = vpop.permute.xlu0 %3763
    %3765 = vrot.lane.b32.xlu0 %v3755, 56
    %v3766 = vpop.permute.xlu0 %3765
    %3773 = vrot.lane.b32.xlu0 %v3599, 64
    %v3774 = vpop.permute.xlu0 %3773
    %3775 = vrot.lane.b32.xlu0 %v3600, 64
    %v3776 = vpop.permute.xlu0 %3775
    %3777 = vrot.lane.b32.xlu0 %v3601, 64
    %v3778 = vpop.permute.xlu0 %3777
    %3779 = vrot.lane.b32.xlu0 %v3602, 64
    %v3780 = vpop.permute.xlu0 %3779
    %3781 = vrot.lane.b32.xlu0 %v3603, 64
    %v3782 = vpop.permute.xlu0 %3781
    %v3788 = vsel %vm833, %v3593, %v3624
    %v3789 = vsel %vm833, %v3594, %v3626
    %v3790 = vsel %vm833, %v3595, %v3628
    %v3791 = vsel %vm833, %v3596, %v3630
    %v3792 = vsel %vm833, %v3597, %v3632
    %v3793 = vsel %vm2181, %v3788, %v3648
    %v3794 = vsel %vm2181, %v3789, %v3650
    %v3795 = vsel %vm2181, %v3790, %v3652
    %v3796 = vsel %vm2181, %v3791, %v3654
    %v3797 = vsel %vm2181, %v3792, %v3656
    %v3798 = vsel %vm2199, %v3793, %v3674
    %v3799 = vsel %vm2199, %v3794, %v3676
    %v3800 = vsel %vm2199, %v3795, %v3678
    %v3801 = vsel %vm2199, %v3796, %v3680
    %v3802 = vsel %vm2199, %v3797, %v3682
    %v3803 = vsel %vm2217, %v3798, %v3690
    %v3804 = vsel %vm2217, %v3799, %v3692
    %v3805 = vsel %vm2217, %v3800, %v3694
    %v3806 = vsel %vm2217, %v3801, %v3696
    %v3807 = vsel %vm2217, %v3802, %v3698
    %v3808 = vsel %vm2235, %v3803, %v3711
    %v3809 = vsel %vm2235, %v3804, %v3713
    %v3810 = vsel %vm2235, %v3805, %v3715
    %v3811 = vsel %vm2235, %v3806, %v3717
    %v3812 = vsel %vm2235, %v3807, %v3719
    %v3813 = vsel %vm2253, %v3808, %v3737
    %v3814 = vsel %vm2253, %v3809, %v3739
    %v3815 = vsel %vm2253, %v3810, %v3741
    %v3816 = vsel %vm2253, %v3811, %v3743
    %v3817 = vsel %vm2253, %v3812, %v3745
    %v3818 = vsel %vm2271, %v3813, %v3758
    %v3819 = vsel %vm2271, %v3814, %v3760
    %v3820 = vsel %vm2271, %v3815, %v3762
    %v3821 = vsel %vm2271, %v3816, %v3764
    %v3822 = vsel %vm2271, %v3817, %v3766
    %v3823 = vsel %vm2289, %v3818, %v3774
    %v3824 = vsel %vm2289, %v3819, %v3776
    %v3825 = vsel %vm2289, %v3820, %v3778
    %v3826 = vsel %vm2289, %v3821, %v3780
    %v3827 = vsel %vm2289, %v3822, %v3782
    %v3828 = vld [vmem:[%s12] sm:$0xff]
    %v3829 = vld [vmem:[%s12 + $0x8] sm:$0xff]
    %v3830 = vld [vmem:[%s12 + $0x10] sm:$0xff]
    %v3831 = vld [vmem:[%s12 + $0x18] sm:$0xff]
    %v3832 = vld [vmem:[%s12 + $0x20] sm:$0xff]
    %v3833 = vld [vmem:[%s12 + $0x28] sm:$0xff]
    %v3834 = vld [vmem:[%s12 + $0x30] sm:$0xff]
    %v3835 = vld [vmem:[%s12 + $0x38] sm:$0xff]
    %v3836 = vld [vmem:[%s12 + $0x40] sm:$0xff]
    %v3838 = vsel %vm2316, %v3823, 0
    %v3841 = vsel %vm2316, %v3824, 0
    %v3844 = vsel %vm2316, %v3825, 0
    %v3847 = vsel %vm2316, %v3826, 0
    %v3850 = vsel %vm2316, %v3827, 0
    %3852 = vmatprep.subr.mxu0 0.0
    %3853 = vmatpush1.msra.mxu0 %v3828
    %3854 = vmatprep.subr.mxu0 0.0
    %3855 = vmatpush1.msra.mxu0 %v3829
    %3856 = vmatprep.subr.mxu0 0.0
    %3857 = vmatpush1.msra.mxu0 %v3830
    %3858 = vmatprep.subr.mxu0 0.0
    %3859 = vmatpush1.msra.mxu0 %v3831
    %3860 = vmatprep.subr.mxu0 0.0
    %3861 = vmatpush1.msra.mxu0 %v3832
    %3862 = vmatprep.subr.mxu0 0.0
    %3863 = vmatpush1.msra.mxu0 %v3833
    %3864 = vmatprep.subr.mxu0 0.0
    %3865 = vmatpush1.msra.mxu0 %v3834
    %3866 = vmatprep.subr.mxu0 0.0
    %3867 = vmatpush1.msra.mxu0 %v3835
    %3868 = vmatprep.subr.mxu0 0.0
    %3869 = vmatpush1.msra.mxu0 %v3836
    %3870 = vmatprep.subr.mxu0 0.0
    %3871 = vmatpush1.msra.mxu0 0.0
    %3872 = vmatprep.subr.mxu0 0.0
    %3873 = vmatpush1.msra.mxu0 0.0
    %3874 = vmatprep.subr.mxu0 0.0
    %3875 = vmatpush1.msra.mxu0 0.0
    %3876 = vmatprep.subr.mxu0 0.0
    %3877 = vmatpush1.msra.mxu0 0.0
    %3878 = vmatprep.subr.mxu0 0.0
    %3879 = vmatpush1.msra.mxu0 0.0
    %3880 = vmatprep.subr.mxu0 0.0
    %3881 = vmatpush1.msra.mxu0 0.0
    %3882 = vmatprep.subr.mxu0 0.0
    %3883 = vmatpush1.msra.mxu0 0.0
    %3884 = vmatprep.subr.mxu0 0.0
    %3885 = vmatpush1.msra.mxu0 0.0
    %3886 = vmatprep.subr.mxu0 0.0
    %3887 = vmatpush1.msra.mxu0 0.0
    %3888 = vmatprep.subr.mxu0 0.0
    %3889 = vmatpush1.msra.mxu0 0.0
    %3890 = vmatprep.subr.mxu0 0.0
    %3891 = vmatpush1.msra.mxu0 0.0
    %3892 = vmatprep.subr.mxu0 0.0
    %3893 = vmatpush1.msra.mxu0 0.0
    %3894 = vmatprep.subr.mxu0 0.0
    %3895 = vmatpush1.msra.mxu0 0.0
    %3896 = vmatprep.subr.mxu0 0.0
    %3897 = vmatpush1.msra.mxu0 0.0
    %3898 = vmatprep.subr.mxu0 0.0
    %3899 = vmatpush1.msra.mxu0 0.0
    %3900 = vmatprep.subr.mxu0 0.0
    %3901 = vmatpush1.msra.mxu0 0.0
    %3902 = vmatprep.subr.mxu0 0.0
    %3903 = vmatpush1.msra.mxu0 0.0
    %3904 = vmatprep.subr.mxu0 0.0
    %3905 = vmatpush1.msra.mxu0 0.0
    %3906 = vmatprep.subr.mxu0 0.0
    %3907 = vmatpush1.msra.mxu0 0.0
    %3908 = vmatprep.subr.mxu0 0.0
    %3909 = vmatpush1.msra.mxu0 0.0
    %3910 = vmatprep.subr.mxu0 0.0
    %3911 = vmatpush1.msra.mxu0 0.0
    %3912 = vmatprep.subr.mxu0 0.0
    %3913 = vmatpush1.msra.mxu0 0.0
    %3914 = vmatprep.subr.mxu0 0.0
    %3915 = vmatpush1.msra.mxu0 0.0
    %3916 = vmatprep.mubr.f32.mxu0 0.0
    %3917 = vmatmul.mubr.f32.gmra.mrb[0].mxu0 %v3838
    %v3918 = vpop.f32.mrb[0].mxu0
    %v3919 = vadd.f32 0.0, %v3918
    %v3920 = vpop.f32.mrb[0].mxu0
    %3921 = vmatprep.mubr.f32.mxu0 0.0
    %3922 = vmatmul.mubr.f32.gmra.mrb[0].mxu0 %v3841
    %v3923 = vpop.f32.mrb[0].mxu0
    %v3924 = vadd.f32 0.0, %v3923
    %v3925 = vpop.f32.mrb[0].mxu0
    %3926 = vmatprep.mubr.f32.mxu0 0.0
    %3927 = vmatmul.mubr.f32.gmra.mrb[0].mxu0 %v3844
    %v3928 = vpop.f32.mrb[0].mxu0
    %v3929 = vadd.f32 0.0, %v3928
    %v3930 = vpop.f32.mrb[0].mxu0
    %3931 = vmatprep.mubr.f32.mxu0 0.0
    %3932 = vmatmul.mubr.f32.gmra.mrb[0].mxu0 %v3847
    %v3933 = vpop.f32.mrb[0].mxu0
    %v3934 = vadd.f32 0.0, %v3933
    %v3935 = vpop.f32.mrb[0].mxu0
    %3936 = vmatprep.mubr.f32.mxu0 0.0
    %3937 = vmatmul.mubr.f32.gmra.mrb[0].mxu0 %v3850
    %v3938 = vpop.f32.mrb[0].mxu0
    %v3939 = vadd.f32 0.0, %v3938
    %v3940 = vpop.f32.mrb[0].mxu0
    %3941 = vdwg.mxu0
    %v3942 = vld [vmem:[%s13] sm:$0x1]
    %v3943 = vld [vmem:[%s14] sm:$0x1]
    %3945 = vset.pattern.permute.xlu0 0
    %3946 = vperm.xlu0 %3945, %v3604
    %v3947 = vpop.permute.xlu0 %3946
    %3950 = vset.pattern.permute.xlu0 0
    %3951 = vperm.xlu0 %3950, %v3605
    %v3952 = vpop.permute.xlu0 %3951
    %3955 = vset.pattern.permute.xlu0 0
    %3956 = vperm.xlu0 %3955, %v3606
    %v3957 = vpop.permute.xlu0 %3956
    %3960 = vset.pattern.permute.xlu0 0
    %3961 = vperm.xlu0 %3960, %v3607
    %v3962 = vpop.permute.xlu0 %3961
    %3965 = vset.pattern.permute.xlu0 0
    %3966 = vperm.xlu0 %3965, %v3608
    %v3967 = vpop.permute.xlu0 %3966
    %v3969 = vmul.f32 %v3919, %v3947
    %v3970 = vmul.f32 %v3924, %v3952
    %v3971 = vmul.f32 %v3929, %v3957
    %v3972 = vmul.f32 %v3934, %v3962
    %v3973 = vmul.f32 %v3939, %v3967
    %v3974 = vsel %vm2181, %v3969, 0.0
    %v3975 = vsel %vm2181, %v3970, 0.0
    %v3976 = vadd.f32 %v3974, %v3975
    %v3977 = vsel %vm2181, %v3971, 0.0
    %v3978 = vadd.f32 %v3976, %v3977
    %v3979 = vsel %vm2181, %v3972, 0.0
    %v3980 = vadd.f32 %v3978, %v3979
    %vm3981 = vcmask 123904
    %v3982 = vsel %vm3981, %v3973, 0.0
    %v3983 = vadd.f32 %v3980, %v3982
    %v3984 = vrot.slane %v3983, 4
    %v3985 = vadd.f32 %v3983, %v3984
    %v3986 = vrot.slane %v3985, 2
    %v3987 = vadd.f32 %v3985, %v3986
    %v3988 = vrot.slane %v3987, 1
    %v3989 = vadd.f32 %v3987, %v3988
    %v3990 = vmul.f32 %v3969, %v3919
    %v3991 = vmul.f32 %v3970, %v3924
    %v3992 = vmul.f32 %v3971, %v3929
    %v3993 = vmul.f32 %v3972, %v3934
    %v3994 = vmul.f32 %v3973, %v3939
    %v3995 = vsel %vm2181, %v3990, 0.0
    %v3996 = vsel %vm2181, %v3991, 0.0
    %v3997 = vadd.f32 %v3995, %v3996
    %v3998 = vsel %vm2181, %v3992, 0.0
    %v3999 = vadd.f32 %v3997, %v3998
    %v4000 = vsel %vm2181, %v3993, 0.0
    %v4001 = vadd.f32 %v3999, %v4000
    %v4002 = vsel %vm3981, %v3994, 0.0
    %v4003 = vadd.f32 %v4001, %v4002
    %v4004 = vrot.slane %v4003, 4
    %v4005 = vadd.f32 %v4003, %v4004
    %v4006 = vrot.slane %v4005, 2
    %v4007 = vadd.f32 %v4005, %v4006
    %v4008 = vrot.slane %v4007, 1
    %v4009 = vadd.f32 %v4007, %v4008
    %v4010 = vmul.f32 %v3989, 0.041666668
    %v4011 = vmul.f32 %v4009, 0.041666668
    %v4012 = vmul.f32 %v4010, %v4010
    %v4013 = vsub.f32 %v4011, %v4012
    %v4014 = vadd.f32 %v4013, 1e-05
    %v4015 = vrsqrt.pop %v4014
    %v4016 = vmul.f32 %v3942, %v4015
    %v4017 = vmul.f32 %v4010, %v4016
    %v4018 = vsub.f32 %v3943, %v4017
    %v4020 = vlaneseq
    %v4021 = vshrl.u32 %v4020, 7
    %v4022 = vsub.s32 0, %v4021
    %v4023 = vrot.slane %v4016, %v4022
    %v4025 = vmul.f32 %v3919, %v4023
    %v4026 = vmul.f32 %v3924, %v4023
    %v4027 = vmul.f32 %v3929, %v4023
    %v4028 = vmul.f32 %v3934, %v4023
    %v4029 = vmul.f32 %v3939, %v4023
    %v4031 = vlaneseq
    %v4032 = vshrl.u32 %v4031, 7
    %v4033 = vsub.s32 0, %v4032
    %v4034 = vrot.slane %v4018, %v4033
    %v4036 = vadd.f32 %v4025, %v4034
    %v4037 = vadd.f32 %v4026, %v4034
    %v4038 = vadd.f32 %v4027, %v4034
    %v4039 = vadd.f32 %v4028, %v4034
    %v4040 = vadd.f32 %v4029, %v4034
    %v4041 = vmax.f32 %v4036, 0.0
    %v4042 = vmax.f32 %v4037, 0.0
    %v4043 = vmax.f32 %v4038, 0.0
    %v4044 = vmax.f32 %v4039, 0.0
    %v4045 = vmax.f32 %v4040, 0.0
    %v4047 = vrot.slane %v4041, 2
    %4048 = vrot.lane.b32.xlu0 %v4047, 16
    %v4049 = vpop.permute.xlu0 %4048
    %v4051 = vrot.slane %v4041, 4
    %4052 = vrot.lane.b32.xlu0 %v4051, 32
    %v4053 = vpop.permute.xlu0 %4052
    %v4055 = vrot.slane %v4041, 6
    %4056 = vrot.lane.b32.xlu0 %v4055, 48
    %v4057 = vpop.permute.xlu0 %4056
    %4060 = vrot.lane.b32.xlu0 %v4042, 64
    %v4061 = vpop.permute.xlu0 %4060
    %v4063 = vrot.slane %v4042, 2
    %4064 = vrot.lane.b32.xlu0 %v4063, 80
    %v4065 = vpop.permute.xlu0 %4064
    %v4068 = vrot.slane %v4043, 6
    %4069 = vrot.lane.b32.xlu0 %v4068, 96
    %v4070 = vpop.permute.xlu0 %4069
    %4073 = vrot.lane.b32.xlu0 %v4044, 112
    %v4074 = vpop.permute.xlu0 %4073
    %v4076 = vrot.slane %v4044, 2
    %v4078 = vrot.slane %v4044, 4
    %4079 = vrot.lane.b32.xlu0 %v4078, 16
    %v4080 = vpop.permute.xlu0 %4079
    %v4082 = vrot.slane %v4044, 6
    %4083 = vrot.lane.b32.xlu0 %v4082, 32
    %v4084 = vpop.permute.xlu0 %4083
    %4087 = vrot.lane.b32.xlu0 %v4045, 48
    %v4088 = vpop.permute.xlu0 %4087
    %v4090 = vsel %vm2181, %v4041, %v4049
    %v4091 = vsel %vm2217, %v4090, %v4053
    %v4092 = vsel %vm2253, %v4091, %v4057
    %v4093 = vsel %vm2289, %v4092, %v4061
    %vm4094 = vcmask 654336
    %v4095 = vsel %vm4094, %v4093, %v4065
    %vm4096 = vcmask 785408
    %v4097 = vsel %vm4096, %v4095, %v4070
    %vm4098 = vcmask 916480
    %v4099 = vsel %vm4098, %v4097, %v4074
    %v4100 = vsel %vm2181, %v4076, %v4080
    %v4101 = vsel %vm2217, %v4100, %v4084
    %v4102 = vsel %vm2253, %v4101, %v4088
    %v4103 = vld [vmem:[%s16] sm:$0xff]
    %v4104 = vld [vmem:[%s16 + $0x8] sm:$0xff]
    %v4105 = vld [vmem:[%s16 + $0x10] sm:$0xff]
    %v4106 = vld [vmem:[%s16 + $0x18] sm:$0xff]
    %v4107 = vld [vmem:[%s16 + $0x20] sm:$0xff]
    %v4108 = vld [vmem:[%s16 + $0x28] sm:$0xff]
    %v4109 = vld [vmem:[%s16 + $0x30] sm:$0xff]
    %v4110 = vld [vmem:[%s16 + $0x38] sm:$0xff]
    %v4111 = vld [vmem:[%s16 + $0x40] sm:$0xff]
    %v4112 = vld [vmem:[%s16 + $0x48] sm:$0xff]
    %v4113 = vld [vmem:[%s16 + $0x50] sm:$0xff]
    %v4114 = vld [vmem:[%s16 + $0x58] sm:$0xff]
    %v4115 = vld [vmem:[%s16 + $0x60] sm:$0xff]
    %v4116 = vld [vmem:[%s16 + $0x68] sm:$0xff]
    %v4117 = vld [vmem:[%s16 + $0x70] sm:$0xff]
    %v4118 = vld [vmem:[%s16 + $0x78] sm:$0xff]
    %v4119 = vld [vmem:[%s16 + $0x80] sm:$0xff]
    %v4120 = vld [vmem:[%s16 + $0x88] sm:$0xff]
    %v4121 = vld [vmem:[%s16 + $0x90] sm:$0xff]
    %v4122 = vld [vmem:[%s16 + $0x98] sm:$0xff]
    %v4123 = vld [vmem:[%s16 + $0xa0] sm:$0xff]
    %v4124 = vld [vmem:[%s16 + $0xa8] sm:$0xff]
    %v4125 = vld [vmem:[%s16 + $0xb0] sm:$0xff]
    %v4126 = vld [vmem:[%s16 + $0xb8] sm:$0xff]
    %v4127 = vld [vmem:[%s17] sm:$0x1]
    %v4129 = vlaneseq
    %v4130 = vshrl.u32 %v4129, 7
    %v4131 = vsub.s32 0, %v4130
    %v4132 = vrot.slane %v4127, %v4131
    %v4135 = vsel %vm2289, %v4102, 0
    %4137 = vmatprep.subr.mxu0 0.0
    %4138 = vmatpush1.msra.mxu0 %v4103
    %4139 = vmatprep.subr.mxu0 0.0
    %4140 = vmatpush1.msra.mxu0 %v4104
    %4141 = vmatprep.subr.mxu0 0.0
    %4142 = vmatpush1.msra.mxu0 %v4105
    %4143 = vmatprep.subr.mxu0 0.0
    %4144 = vmatpush1.msra.mxu0 %v4106
    %4145 = vmatprep.subr.mxu0 0.0
    %4146 = vmatpush1.msra.mxu0 %v4107
    %4147 = vmatprep.subr.mxu0 0.0
    %4148 = vmatpush1.msra.mxu0 %v4108
    %4149 = vmatprep.subr.mxu0 0.0
    %4150 = vmatpush1.msra.mxu0 %v4109
    %4151 = vmatprep.subr.mxu0 0.0
    %4152 = vmatpush1.msra.mxu0 %v4110
    %4153 = vmatprep.subr.mxu0 0.0
    %4154 = vmatpush1.msra.mxu0 %v4111
    %4155 = vmatprep.subr.mxu0 0.0
    %4156 = vmatpush1.msra.mxu0 %v4112
    %4157 = vmatprep.subr.mxu0 0.0
    %4158 = vmatpush1.msra.mxu0 %v4113
    %4159 = vmatprep.subr.mxu0 0.0
    %4160 = vmatpush1.msra.mxu0 %v4114
    %4161 = vmatprep.subr.mxu0 0.0
    %4162 = vmatpush1.msra.mxu0 %v4115
    %4163 = vmatprep.subr.mxu0 0.0
    %4164 = vmatpush1.msra.mxu0 %v4116
    %4165 = vmatprep.subr.mxu0 0.0
    %4166 = vmatpush1.msra.mxu0 %v4117
    %4167 = vmatprep.subr.mxu0 0.0
    %4168 = vmatpush1.msra.mxu0 %v4118
    %4169 = vmatprep.subr.mxu0 0.0
    %4170 = vmatpush1.msra.mxu0 %v4119
    %4171 = vmatprep.subr.mxu0 0.0
    %4172 = vmatpush1.msra.mxu0 %v4120
    %4173 = vmatprep.subr.mxu0 0.0
    %4174 = vmatpush1.msra.mxu0 %v4121
    %4175 = vmatprep.subr.mxu0 0.0
    %4176 = vmatpush1.msra.mxu0 %v4122
    %4177 = vmatprep.subr.mxu0 0.0
    %4178 = vmatpush1.msra.mxu0 %v4123
    %4179 = vmatprep.subr.mxu0 0.0
    %4180 = vmatpush1.msra.mxu0 %v4124
    %4181 = vmatprep.subr.mxu0 0.0
    %4182 = vmatpush1.msra.mxu0 %v4125
    %4183 = vmatprep.subr.mxu0 0.0
    %4184 = vmatpush1.msra.mxu0 %v4126
    %4185 = vmatprep.subr.mxu0 0.0
    %4186 = vmatpush1.msra.mxu0 0.0
    %4187 = vmatprep.subr.mxu0 0.0
    %4188 = vmatpush1.msra.mxu0 0.0
    %4189 = vmatprep.subr.mxu0 0.0
    %4190 = vmatpush1.msra.mxu0 0.0
    %4191 = vmatprep.subr.mxu0 0.0
    %4192 = vmatpush1.msra.mxu0 0.0
    %4193 = vmatprep.subr.mxu0 0.0
    %4194 = vmatpush1.msra.mxu0 0.0
    %4195 = vmatprep.subr.mxu0 0.0
    %4196 = vmatpush1.msra.mxu0 0.0
    %4197 = vmatprep.subr.mxu0 0.0
    %4198 = vmatpush1.msra.mxu0 0.0
    %4199 = vmatprep.subr.mxu0 0.0
    %4200 = vmatpush1.msra.mxu0 0.0
    %4201 = vmatprep.mubr.f32.mxu0 %v4135
    %4202 = vmatmul.mubr.f32.gmra.mrb[0].mxu0 %v4099
    %v4203 = vpop.f32.mrb[0].mxu0
    %v4204 = vadd.f32 %v4132, %v4203
    %v4205 = vpop.f32.mrb[0].mxu0
    %4206 = vdwg.mxu0
    %v4207 = vmax.f32 %v4204, 0.0
    %v4208 = vld [vmem:[%s18] sm:$0xff]
    %v4209 = vld [vmem:[%s18 + $0x8] sm:$0xff]
    %v4210 = vld [vmem:[%s18 + $0x10] sm:$0xff]
    %v4211 = vld [vmem:[%s18 + $0x18] sm:$0xff]
    %v4212 = vld [vmem:[%s18 + $0x20] sm:$0xff]
    %v4213 = vld [vmem:[%s18 + $0x28] sm:$0xff]
    %v4214 = vld [vmem:[%s18 + $0x30] sm:$0xff]
    %v4215 = vld [vmem:[%s18 + $0x38] sm:$0xff]
    %v4216 = vld [vmem:[%s18 + $0x40] sm:$0xff]
    %v4217 = vld [vmem:[%s18 + $0x48] sm:$0xff]
    %v4218 = vld [vmem:[%s18 + $0x50] sm:$0xff]
    %v4219 = vld [vmem:[%s18 + $0x58] sm:$0xff]
    %v4220 = vld [vmem:[%s18 + $0x60] sm:$0xff]
    %v4221 = vld [vmem:[%s18 + $0x68] sm:$0xff]
    %v4222 = vld [vmem:[%s18 + $0x70] sm:$0xff]
    %v4223 = vld [vmem:[%s18 + $0x78] sm:$0xff]
    %v4224 = vld [vmem:[%s19] sm:$0x1]
    %v4226 = vlaneseq
    %v4227 = vshrl.u32 %v4226, 7
    %v4228 = vsub.s32 0, %v4227
    %v4229 = vrot.slane %v4224, %v4228
    %4231 = vmatprep.subr.mxu0 0.0
    %4232 = vmatpush1.msra.mxu0 %v4208
    %4233 = vmatprep.subr.mxu0 0.0
    %4234 = vmatpush1.msra.mxu0 %v4209
    %4235 = vmatprep.subr.mxu0 0.0
    %4236 = vmatpush1.msra.mxu0 %v4210
    %4237 = vmatprep.subr.mxu0 0.0
    %4238 = vmatpush1.msra.mxu0 %v4211
    %4239 = vmatprep.subr.mxu0 0.0
    %4240 = vmatpush1.msra.mxu0 %v4212
    %4241 = vmatprep.subr.mxu0 0.0
    %4242 = vmatpush1.msra.mxu0 %v4213
    %4243 = vmatprep.subr.mxu0 0.0
    %4244 = vmatpush1.msra.mxu0 %v4214
    %4245 = vmatprep.subr.mxu0 0.0
    %4246 = vmatpush1.msra.mxu0 %v4215
    %4247 = vmatprep.subr.mxu0 0.0
    %4248 = vmatpush1.msra.mxu0 %v4216
    %4249 = vmatprep.subr.mxu0 0.0
    %4250 = vmatpush1.msra.mxu0 %v4217
    %4251 = vmatprep.subr.mxu0 0.0
    %4252 = vmatpush1.msra.mxu0 %v4218
    %4253 = vmatprep.subr.mxu0 0.0
    %4254 = vmatpush1.msra.mxu0 %v4219
    %4255 = vmatprep.subr.mxu0 0.0
    %4256 = vmatpush1.msra.mxu0 %v4220
    %4257 = vmatprep.subr.mxu0 0.0
    %4258 = vmatpush1.msra.mxu0 %v4221
    %4259 = vmatprep.subr.mxu0 0.0
    %4260 = vmatpush1.msra.mxu0 %v4222
    %4261 = vmatprep.subr.mxu0 0.0
    %4262 = vmatpush1.msra.mxu0 %v4223
    %4263 = vmatprep.subr.mxu0 0.0
    %4264 = vmatpush1.msra.mxu0 0.0
    %4265 = vmatprep.subr.mxu0 0.0
    %4266 = vmatpush1.msra.mxu0 0.0
    %4267 = vmatprep.subr.mxu0 0.0
    %4268 = vmatpush1.msra.mxu0 0.0
    %4269 = vmatprep.subr.mxu0 0.0
    %4270 = vmatpush1.msra.mxu0 0.0
    %4271 = vmatprep.subr.mxu0 0.0
    %4272 = vmatpush1.msra.mxu0 0.0
    %4273 = vmatprep.subr.mxu0 0.0
    %4274 = vmatpush1.msra.mxu0 0.0
    %4275 = vmatprep.subr.mxu0 0.0
    %4276 = vmatpush1.msra.mxu0 0.0
    %4277 = vmatprep.subr.mxu0 0.0
    %4278 = vmatpush1.msra.mxu0 0.0
    %4279 = vmatprep.subr.mxu0 0.0
    %4280 = vmatpush1.msra.mxu0 0.0
    %4281 = vmatprep.subr.mxu0 0.0
    %4282 = vmatpush1.msra.mxu0 0.0
    %4283 = vmatprep.subr.mxu0 0.0
    %4284 = vmatpush1.msra.mxu0 0.0
    %4285 = vmatprep.subr.mxu0 0.0
    %4286 = vmatpush1.msra.mxu0 0.0
    %4287 = vmatprep.subr.mxu0 0.0
    %4288 = vmatpush1.msra.mxu0 0.0
    %4289 = vmatprep.subr.mxu0 0.0
    %4290 = vmatpush1.msra.mxu0 0.0
    %4291 = vmatprep.subr.mxu0 0.0
    %4292 = vmatpush1.msra.mxu0 0.0
    %4293 = vmatprep.subr.mxu0 0.0
    %4294 = vmatpush1.msra.mxu0 0.0
    %4295 = vmatprep.mubr.f32.mxu0 0.0
    %4296 = vmatmul.mubr.f32.gmra.mrb[0].mxu0 %v4207
    %v4297 = vpop.f32.mrb[0].mxu0
    %v4298 = vadd.f32 %v4229, %v4297
    %v4299 = vpop.f32.mrb[0].mxu0
    %4300 = vdwg.mxu0
    %v4301 = vsel %vm2653, %v4298, 0.0
    %4302 = vadd.xlane.f32.xlu0 %v4301
    %v4303 = vpop.xlane.xlu0 %4302
    %v4304 = vrcp.pop 8.0
    %v4305 = vmul.f32 %v4303, %v4304
    %v4306 = vsub.f32 %v4298, %v4305
    %4308 = vset.pattern.permute.xlu0 8
    %4309 = vperm.xlu0 %4308, %v4298
    %v4310 = vpop.permute.xlu0 %4309
    %v4312 = vadd.f32 %v4310, %v4306
    %v4313 = vsel %vm833, %v4312, 0.0
    %4314 = vst [vmem:[#allocation2] sm:$0x3] %v4313
    // Predicated region
    $region82: #{duel_qnet_forward.1} parent=1 // pred_check
      _
    $region83: #{duel_qnet_forward.1} parent=1 // pred_check_branch
      %4316 = sbr.rel (0) target = $region85
    $region84: #{duel_qnet_forward.1} parent=1 // pred_region
      %s4318 = ssub.s32 32, 32
      %4319 = vsyncadd [#allocation3], %s4318
      %s4321 = sshll.u32 [#allocation2], 4
      %s4322 = int_to_ptr.vmem [resolvable:$true] %s4321
      %4324 = dma.vmem_to_hbm [thread:$0]  %s4322, 32, %s20, [#allocation3]
    $region85: #{duel_qnet_forward.1} parent=1 // pred_fallthru
      _
    // Predicated region
    $region86: #{duel_qnet_forward.1} parent=1 // pred_check
      _
    $region87: #{duel_qnet_forward.1} parent=1 // pred_check_branch
      %4326 = sbr.rel (0) target = $region89
    $region88: #{duel_qnet_forward.1} parent=1 // pred_region
      %4327 = dma.done [#allocation3], 32
    $region89: #{duel_qnet_forward.1} parent=1 // pred_fallthru
      _
    %4328 = vsyncpa [#allocation3], 1

</llo_original>
